<compile_context>
chip_gen: v6e
topology: v6e:2x2x1
jax: 0.10.0
libtpu: 0.0.40
codegen_flags: <defaults>
</compile_context>

<pallas_src>
import jax
import jax.numpy as jnp
from jax.experimental import pallas as pl
from jax.experimental.pallas import tpu as pltpu

BN_EPS = 1e-5  # PyTorch BatchNorm2d default (folded at parameter prep)


def _round_up(x, m):
    return (x + m - 1) // m * m


# ----------------------------- Pallas kernel ------------------------------- #

def _bottleneck_kernel(x_ref, top_ref, bot_ref, w1_ref, b1_ref, w2_ref, b2_ref,
                       w3_ref, b3_ref, o_ref, hp_ref):
    """Fused Bottleneck forward for one (image, row-tile) grid point.

    x_ref   : (1, tile_h, W, Cin)  bf16 main rows (also the residual)
    top_ref : (1, d, W, Cin)       bf16 rows just above the tile (clamped)
    bot_ref : (1, d, W, Cin)       bf16 rows just below the tile (clamped)
    w1_ref  : (Cin, Pp)    bf16 (BN1 scale folded)   b1_ref: (1, Pp)   f32
    w2_ref  : (3, 3Pp, Pp) bf16 (BN2 scale folded)   b2_ref: (1, Pp)   f32
    w3_ref  : (Pp, Cout)   bf16 (BN3 scale folded)   b3_ref: (1, Cout) f32
    o_ref   : (1, tile_h, W, Cout)
    hp_ref  : (tile_h+2d, W+2d, Pp) bf16 VMEM scratch (haloed, W-padded h1)
    """
    i = pl.program_id(1)
    last = pl.num_programs(1) - 1

    _, tile_h, W, cin = x_ref.shape
    d = top_ref.shape[1]                     # halo depth == dilation
    Pp = w1_ref.shape[1]                     # lane-aligned bottleneck width
    cout = w3_ref.shape[1]
    hh = tile_h + 2 * d                      # haloed row count
    Wp = W + 2 * d                           # W-padded column count

    w1 = w1_ref[...]
    b1 = b1_ref[...]

    def conv1_rows(rows_bf16, nrows):
        h = jnp.dot(rows_bf16.reshape(nrows * W, cin), w1,
                    preferred_element_type=jnp.float32)
        h = jnp.maximum(h + b1, 0.0)
        return h.reshape(nrows, W, Pp).astype(jnp.bfloat16)

    # conv2's zero padding in W: zero the two d-wide edge column bands of the
    # persistent scratch.  Re-done every step (tiny) so the kernel stays
    # correct no matter how the grid is split across TensorCores.
    edge = jnp.zeros((hh, d, Pp), jnp.bfloat16)
    hp_ref[:, 0:d, :] = edge
    hp_ref[:, W + d:Wp, :] = edge

    # ---- conv1 (1x1) + bn1 shift + relu, written straight into the scratch --
    xm = x_ref[0]                                           # (tile_h, W, Cin)
    hp_ref[d:d + tile_h, d:d + W, :] = conv1_rows(xm, tile_h)

    zrows = jnp.zeros((d, W, Pp), jnp.bfloat16)

    @pl.when(i > 0)                 # interior tiles: real halo rows, no mask
    def _():
        hp_ref[0:d, d:d + W, :] = conv1_rows(top_ref[0], d)

    @pl.when(i == 0)                # image top: conv2 zero padding in H
    def _():
        hp_ref[0:d, d:d + W, :] = zrows

    @pl.when(i < last)
    def _():
        hp_ref[d + tile_h:hh, d:d + W, :] = conv1_rows(bot_ref[0], d)

    @pl.when(i == last)             # image bottom: conv2 zero padding in H
    def _():
        hp_ref[d + tile_h:hh, d:d + W, :] = zrows

    # ---- conv2 (3x3, dilation d) + bn2 shift + relu --------------------------
    # One K = 3*Pp matmul per kh; the kw taps are concatenated on the lane axis
    # (Pp is a multiple of 128, so this is lane-tile aligned).  Accumulator is
    # initialized from the first dot.
    acc = None
    for kh in range(3):                                     # static unroll
        slab = hp_ref[kh * d:kh * d + tile_h]               # (tile_h, Wp, Pp) bf16
        xk = jnp.concatenate(
            [slab[:, kw * d:kw * d + W, :] for kw in range(3)], axis=-1)
        xk = xk.reshape(tile_h * W, 3 * Pp)
        part = jnp.dot(xk, w2_ref[kh], preferred_element_type=jnp.float32)
        acc = part if acc is None else acc + part
    h2 = jnp.maximum(acc + b2_ref[...], 0.0).astype(jnp.bfloat16)

    # ---- conv3 (1x1) + bn3 shift + residual add + relu -----------------------
    y = jnp.dot(h2, w3_ref[...], preferred_element_type=jnp.float32) + b3_ref[...]
    y = y + xm.reshape(tile_h * W, cout).astype(jnp.float32)   # Cin == Cout
    o_ref[0] = jnp.maximum(y, 0.0).reshape(tile_h, W, cout).astype(o_ref.dtype)


# ------------------------------ JAX wrapper -------------------------------- #

def _pick_tile_h(H, W, cin, Pp, cout, d, out_itemsize, weight_bytes,
                 budget_bytes=20 << 20):
    """Largest row tile dividing H (and a multiple of d) whose modelled
    per-step VMEM — double-buffered I/O tiles + resident weights + persistent
    scratch + in-kernel temporaries — fits the budget (kept under the 32 MiB
    vmem_limit passed to the compiler; tune per generation if desired)."""
    fallback = d
    for t in range(H, 0, -1):
        if H % t or t % d:
            continue
        fallback = t
        hh, Wp = t + 2 * d, W + 2 * d
        x_b = 2 * t * W * cin * 2 + 4 * d * W * cin * 2      # in tile + 2 halos (x2 buf)
        o_b = 2 * t * W * cout * out_itemsize                # out tile (x2 buf)
        hp_b = hh * Wp * Pp * 2                              # persistent scratch (bf16)
        tmp_b = (t * W * (3 * Pp * 2 + Pp * 4 + Pp * 2 + 2 * cout * 4)
                 + hh * W * Pp * 4)                          # im2col/acc/h2/y/conv1-f32
        if x_b + o_b + hp_b + tmp_b + weight_bytes <= budget_bytes:
            return t
    return fallback


def bottleneck_forward(x_nchw, params, *, stride=1, dilation=1, tile_h=None,
                       out_dtype=jnp.bfloat16, vmem_limit_bytes=32 << 20):
    """Pallas TPU implementation of Bottleneck.forward (stride=1, downsample=None)."""
    assert stride == 1, "stride > 1 requires the downsample branch"
    # TODO(synk): downsample branch (arbitrary nn.Module, default None) not
    # instantiated; downsample=None requires inplanes == 4 * planes.
    x = jnp.transpose(x_nchw, (0, 2, 3, 1)).astype(jnp.bfloat16)   # NCHW -> NHWC
    N, H, W, cin = x.shape
    P = params["w1"].shape[1]
    cout = params["w3"].shape[1]
    assert cin == cout, "downsample=None requires inplanes == planes * 4"
    d = dilation
    assert 1 <= d < W and H % d == 0

    # Lane-align the bottleneck width: zero-pad P -> Pp (multiple of 128) in the
    # weights / BN shifts.  Mathematically exact: padded channels stay zero
    # through relu and contribute nothing to conv2/conv3.  Cin/Cout are left
    # unpadded — every real downsample=None stage has them in {256..2048}
    # (already 128-aligned), so the output store stays lane-dense.
    Pp = _round_up(P, 128)
    w1 = jnp.zeros((cin, Pp), jnp.bfloat16).at[:, :P].set(params["w1"])
    b1 = jnp.zeros((1, Pp), jnp.float32).at[:, :P].set(params["b1"])
    w2 = (jnp.zeros((3, 3, Pp, Pp), jnp.bfloat16)
             .at[:, :, :P, :P].set(params["w2"])
             .reshape(3, 3 * Pp, Pp))                  # per-kh, kw-major K blocks
    b2 = jnp.zeros((1, Pp), jnp.float32).at[:, :P].set(params["b2"])
    w3 = jnp.zeros((Pp, cout), jnp.bfloat16).at[:P, :].set(params["w3"])
    b3 = params["b3"]

    out_itemsize = jnp.dtype(out_dtype).itemsize
    weight_bytes = int((w1.size + w2.size + w3.size) * 2
                       + (b1.size + b2.size + b3.size) * 4)

    if tile_h is None:
        tile_h = _pick_tile_h(H, W, cin, Pp, cout, d, out_itemsize, weight_bytes)
    assert H % tile_h == 0 and tile_h % d == 0
    r = tile_h // d                   # row tile size in units of d-row halo blocks
    n_halo_blocks = H // d
    grid = (N, H // tile_h)

    in_specs = [
        # main row tile (also the residual)
        pl.BlockSpec((1, tile_h, W, cin), lambda n, i: (n, i, 0, 0)),
        # d rows just above / below the tile; clamped at the image edges and
        # replaced by zeros inside the kernel there (pl.when-gated).
        pl.BlockSpec((1, d, W, cin),
                     lambda n, i: (n, jnp.maximum(i * r - 1, 0), 0, 0)),
        pl.BlockSpec((1, d, W, cin),
                     lambda n, i: (n, jnp.minimum((i + 1) * r, n_halo_blocks - 1), 0, 0)),
        # weights / BN shifts: whole array, resident across the grid
        pl.BlockSpec(w1.shape, lambda n, i: (0, 0)),
        pl.BlockSpec(b1.shape, lambda n, i: (0, 0)),
        pl.BlockSpec(w2.shape, lambda n, i: (0, 0, 0)),
        pl.BlockSpec(b2.shape, lambda n, i: (0, 0)),
        pl.BlockSpec(w3.shape, lambda n, i: (0, 0)),
        pl.BlockSpec(b3.shape, lambda n, i: (0, 0)),
    ]
    out_specs = pl.BlockSpec((1, tile_h, W, cout), lambda n, i: (n, i, 0, 0))

    flops = 2 * N * H * W * (cin * Pp + 9 * Pp * Pp + Pp * cout)
    bytes_accessed = int(N * H * W * cin * 2 * (1.0 + 2.0 * d / tile_h)  # x + halo re-reads
                         + N * H * W * cout * out_itemsize
                         + weight_bytes)

    out = pl.pallas_call(
        _bottleneck_kernel,
        out_shape=jax.ShapeDtypeStruct((N, H, W, cout), out_dtype),
        grid_spec=pltpu.PrefetchScalarGridSpec(
            num_scalar_prefetch=0, grid=grid,
            in_specs=in_specs, out_specs=out_specs,
            scratch_shapes=[pltpu.VMEM((tile_h + 2 * d, W + 2 * d, Pp),
                                       jnp.bfloat16)]),
        compiler_params=pltpu.CompilerParams(
            # batch axis leading + both axes parallel => megacore / 2-TC (v7x)
            # sharding of the N x (H/tile_h) grid steps.
            dimension_semantics=("parallel", "parallel"),
            vmem_limit_bytes=vmem_limit_bytes),
        cost_estimate=pl.CostEstimate(flops=flops, transcendentals=0,
                                      bytes_accessed=bytes_accessed),
    )(x, x, x, w1, b1, w2, b2, w3, b3)
    return jnp.transpose(out, (0, 3, 1, 2))                        # NHWC -> NCHW


# --------------------------- parameter creation ----------------------------- #

def init_bottleneck_params(key, inplanes, planes):
    """Synthetic parameters with the module's shapes.  The frozen-BN scale is
    folded into the conv weights (per output channel) and weights are stored in
    bf16 for the MXU; only the per-channel f32 shift remains for the kernel."""
    expansion = 4
    keys = jax.random.split(key, 6)
    w1_oihw = 0.1 * jax.random.normal(keys[0], (planes, inplanes, 1, 1), jnp.float32)
    w2_oihw = 0.1 * jax.random.normal(keys[1], (planes, planes, 3, 3), jnp.float32)
    w3_oihw = 0.1 * jax.random.normal(keys[2], (planes * expansion, planes, 1, 1), jnp.float32)

    def bn_fold(k, c):
        k1, k2, k3, k4 = jax.random.split(k, 4)
        gamma = jax.random.uniform(k1, (c,), jnp.float32, minval=0.5, maxval=1.5)
        beta = 0.1 * jax.random.normal(k2, (c,), jnp.float32)
        mean = 0.1 * jax.random.normal(k3, (c,), jnp.float32)
        var = jax.random.uniform(k4, (c,), jnp.float32, minval=0.5, maxval=1.5)
        scale = gamma / jnp.sqrt(var + BN_EPS)
        shift = beta - mean * scale
        return scale, shift

    s1, b1 = bn_fold(keys[3], planes)
    s2, b2 = bn_fold(keys[4], planes)
    s3, b3 = bn_fold(keys[5], planes * expansion)

    w1 = jnp.transpose(w1_oihw[:, :, 0, 0], (1, 0)) * s1[None, :]            # (Cin, P)
    w2 = jnp.transpose(w2_oihw, (2, 3, 1, 0)) * s2[None, None, None, :]      # (3,3,P,P) HWIO
    w3 = jnp.transpose(w3_oihw[:, :, 0, 0], (1, 0)) * s3[None, :]            # (P, 4P)

    return {
        "w1": w1.astype(jnp.bfloat16),
        "w2": w2.astype(jnp.bfloat16),
        "w3": w3.astype(jnp.bfloat16),
        "b1": b1.reshape(1, -1),
        "b2": b2.reshape(1, -1),
        "b3": b3.reshape(1, -1),
    }


# ------------------------------ pure-JAX ref -------------------------------- #

def bottleneck_reference(x_nchw, params, *, dilation=1):
    """XLA reference using the same (bf16-rounded) parameters and input."""
    dn = ("NHWC", "HWIO", "NHWC")
    x = jnp.transpose(x_nchw, (0, 2, 3, 1)).astype(jnp.bfloat16).astype(jnp.float32)
    d = dilation

    def shift(h, b):
        return h + b.reshape(1, 1, 1, -1)

    w1 = params["w1"].astype(jnp.float32)[None, None]          # (1,1,Cin,P)
    w2 = params["w2"].astype(jnp.float32)                      # (3,3,P,P)
    w3 = params["w3"].astype(jnp.float32)[None, None]          # (1,1,P,Cout)

    h = jax.lax.conv_general_dilated(x, w1, (1, 1), "VALID", dimension_numbers=dn)
    h = jnp.maximum(shift(h, params["b1"]), 0.0)
    h = jax.lax.conv_general_dilated(h, w2, (1, 1), [(d, d), (d, d)],
                                     rhs_dilation=(d, d), dimension_numbers=dn)
    h = jnp.maximum(shift(h, params["b2"]), 0.0)
    h = jax.lax.conv_general_dilated(h, w3, (1, 1), "VALID", dimension_numbers=dn)
    h = shift(h, params["b3"])
    out = jnp.maximum(h + x, 0.0)
    return jnp.transpose(out, (0, 3, 1, 2))


# ----------------------------------- main ----------------------------------- #

if __name__ == "__main__":
    key = jax.random.PRNGKey(0)
    kx, kp = jax.random.split(key)

    batch, planes, spatial = 2, 8, 16
    inplanes = planes * 4          # residual add with downsample=None requires this

    x = jax.random.normal(kx, (batch, inplanes, spatial, spatial), jnp.float32)
    params = init_bottleneck_params(kp, inplanes, planes)

    # tile_h=8 -> grid (2 images, 2 row tiles): exercises the halo fetch, the
    # pl.when boundary handling and the pipelined grid even at this small shape.
    out = bottleneck_forward(x, params, stride=1, dilation=1, tile_h=8)
    out = jax.block_until_ready(out)

    ref = bottleneck_reference(x, params, dilation=1)
    assert out.shape == (batch, planes * 4, spatial, spatial), out.shape
    max_err = float(jnp.max(jnp.abs(out.astype(jnp.float32) - ref)))
    # bf16 matmul inputs + bf16 output vs. the f32 XLA reference.
    assert max_err < 6e-2, f"max_err={max_err}"
    print("KERNEL_OK")
</pallas_src>

<mosaic_0001>
module attributes {stable_mosaic.version = 11 : i64} {
  func.func @_bottleneck_kernel(%arg0: i32, %arg1: i32, %arg2: memref<1x8x16x32xbf16, #tpu.memory_space<vmem>>, %arg3: memref<1x1x16x32xbf16, #tpu.memory_space<vmem>>, %arg4: memref<1x1x16x32xbf16, #tpu.memory_space<vmem>>, %arg5: memref<32x128xbf16, #tpu.memory_space<vmem>>, %arg6: memref<1x128xf32, #tpu.memory_space<vmem>>, %arg7: memref<3x384x128xbf16, #tpu.memory_space<vmem>>, %arg8: memref<1x128xf32, #tpu.memory_space<vmem>>, %arg9: memref<128x32xbf16, #tpu.memory_space<vmem>>, %arg10: memref<1x32xf32, #tpu.memory_space<vmem>>, %arg11: memref<1x8x16x32xbf16, #tpu.memory_space<vmem>>, %arg12: memref<10x18x128xbf16, #tpu.memory_space<vmem>>) attributes {dimension_semantics = [#tpu.dimension_semantics<parallel>, #tpu.dimension_semantics<parallel>], iteration_bounds = array<i64: 2, 2>, scalar_prefetch = 0 : i64, scratch_operands = 1 : i64, tpu.core_type = #tpu.core_type<tc>, window_params = [{transform_indices = @transform_0, window_bounds = array<i64: 1, 8, 16, 32>}, {transform_indices = @transform_1, window_bounds = array<i64: 1, 1, 16, 32>}, {transform_indices = @transform_2, window_bounds = array<i64: 1, 1, 16, 32>}, {pipeline_mode = #tpu.pipeline_mode<synchronous>, transform_indices = @transform_3, window_bounds = array<i64: 32, 128>}, {pipeline_mode = #tpu.pipeline_mode<synchronous>, transform_indices = @transform_4, window_bounds = array<i64: 1, 128>}, {pipeline_mode = #tpu.pipeline_mode<synchronous>, transform_indices = @transform_5, window_bounds = array<i64: 3, 384, 128>}, {pipeline_mode = #tpu.pipeline_mode<synchronous>, transform_indices = @transform_6, window_bounds = array<i64: 1, 128>}, {pipeline_mode = #tpu.pipeline_mode<synchronous>, transform_indices = @transform_7, window_bounds = array<i64: 128, 32>}, {pipeline_mode = #tpu.pipeline_mode<synchronous>, transform_indices = @transform_8, window_bounds = array<i64: 1, 32>}, {transform_indices = @transform_9, window_bounds = array<i64: 1, 8, 16, 32>}]} {
    %c0 = arith.constant 0 : index
    %c0_0 = arith.constant 0 : index
    %0 = vector.load %arg5[%c0, %c0_0] : memref<32x128xbf16, #tpu.memory_space<vmem>>, vector<32x128xbf16>
    %c0_1 = arith.constant 0 : index
    %c0_2 = arith.constant 0 : index
    %1 = vector.load %arg6[%c0_1, %c0_2] : memref<1x128xf32, #tpu.memory_space<vmem>>, vector<1x128xf32>
    %cst = arith.constant 0.000000e+00 : bf16
    %2 = vector.broadcast %cst : bf16 to vector<10x1x128xbf16>
    %c0_3 = arith.constant 0 : index
    %c0_4 = arith.constant 0 : index
    %c0_5 = arith.constant 0 : index
    %3 = vector.load %arg12[%c0_3, %c0_4, %c0_5] : memref<10x18x128xbf16, #tpu.memory_space<vmem>>, vector<10x1x128xbf16>
    tpu.vector_store %arg12[%c0_3, %c0_4, %c0_5], %2 {strides = array<i32>} : memref<10x18x128xbf16, #tpu.memory_space<vmem>>, vector<10x1x128xbf16>,
    %c0_6 = arith.constant 0 : index
    %c17 = arith.constant 17 : index
    %c0_7 = arith.constant 0 : index
    %4 = vector.load %arg12[%c0_6, %c17, %c0_7] : memref<10x18x128xbf16, #tpu.memory_space<vmem>>, vector<10x1x128xbf16>
    tpu.vector_store %arg12[%c0_6, %c17, %c0_7], %2 {strides = array<i32>} : memref<10x18x128xbf16, #tpu.memory_space<vmem>>, vector<10x1x128xbf16>,
    %c0_8 = arith.constant 0 : index
    %c0_9 = arith.constant 0 : index
    %c0_10 = arith.constant 0 : index
    %c0_11 = arith.constant 0 : index
    %5 = vector.load %arg2[%c0_8, %c0_9, %c0_10, %c0_11] : memref<1x8x16x32xbf16, #tpu.memory_space<vmem>>, vector<1x8x16x32xbf16>
    %6 = vector.shape_cast %5 : vector<1x8x16x32xbf16> to vector<8x16x32xbf16>
    %7 = vector.shape_cast %6 : vector<8x16x32xbf16> to vector<128x32xbf16>
    %cst_12 = arith.constant dense<0.000000e+00> : vector<128x128xf32>
    %8 = tpu.matmul %7, %0, %cst_12 {dimension_numbers = #tpu.dot_dimension_numbers<[1], [0], [0], [1], [0, 0, 1, 1], [], []>} : vector<128x32xbf16>, vector<32x128xbf16>, vector<128x128xf32> -> vector<128x128xf32>
    %9 = vector.broadcast %1 : vector<1x128xf32> to vector<128x128xf32>
    %10 = arith.addf %8, %9 : vector<128x128xf32>
    %cst_13 = arith.constant 0.000000e+00 : f32
    %11 = vector.broadcast %cst_13 : f32 to vector<128x128xf32>
    %12 = arith.maximumf %10, %11 : vector<128x128xf32>
    %13 = vector.shape_cast %12 : vector<128x128xf32> to vector<8x16x128xf32>
    %14 = arith.truncf %13 : vector<8x16x128xf32> to vector<8x16x128xbf16>
    %c1 = arith.constant 1 : index
    %c1_14 = arith.constant 1 : index
    %c0_15 = arith.constant 0 : index
    %15 = vector.load %arg12[%c1, %c1_14, %c0_15] : memref<10x18x128xbf16, #tpu.memory_space<vmem>>, vector<8x16x128xbf16>
    tpu.vector_store %arg12[%c1, %c1_14, %c0_15], %14 {strides = array<i32>} : memref<10x18x128xbf16, #tpu.memory_space<vmem>>, vector<8x16x128xbf16>,
    %cst_16 = arith.constant 0.000000e+00 : bf16
    %16 = vector.broadcast %cst_16 : bf16 to vector<1x16x128xbf16>
    %c0_i32 = arith.constant 0 : i32
    %17 = arith.cmpi sgt, %arg1, %c0_i32 : i32
    %18 = arith.extui %17 : i1 to i32
    %c0_i32_17 = arith.constant 0 : i32
    %19 = arith.cmpi ne, %18, %c0_i32_17 : i32
    scf.if %19 {
      %c0_56 = arith.constant 0 : index
      %c0_57 = arith.constant 0 : index
      %c0_58 = arith.constant 0 : index
      %c0_59 = arith.constant 0 : index
      %79 = vector.load %arg3[%c0_56, %c0_57, %c0_58, %c0_59] : memref<1x1x16x32xbf16, #tpu.memory_space<vmem>>, vector<1x1x16x32xbf16>
      %80 = vector.shape_cast %79 : vector<1x1x16x32xbf16> to vector<1x16x32xbf16>
      %81 = vector.shape_cast %80 : vector<1x16x32xbf16> to vector<16x32xbf16>
      %cst_60 = arith.constant dense<0.000000e+00> : vector<16x128xf32>
      %82 = tpu.matmul %81, %0, %cst_60 {dimension_numbers = #tpu.dot_dimension_numbers<[1], [0], [0], [1], [0, 0, 1, 1], [], []>} : vector<16x32xbf16>, vector<32x128xbf16>, vector<16x128xf32> -> vector<16x128xf32>
      %83 = vector.broadcast %1 : vector<1x128xf32> to vector<16x128xf32>
      %84 = arith.addf %82, %83 : vector<16x128xf32>
      %cst_61 = arith.constant 0.000000e+00 : f32
      %85 = vector.broadcast %cst_61 : f32 to vector<16x128xf32>
      %86 = arith.maximumf %84, %85 : vector<16x128xf32>
      %87 = vector.shape_cast %86 : vector<16x128xf32> to vector<1x16x128xf32>
      %88 = arith.truncf %87 : vector<1x16x128xf32> to vector<1x16x128xbf16>
      %c0_62 = arith.constant 0 : index
      %c1_63 = arith.constant 1 : index
      %c0_64 = arith.constant 0 : index
      %89 = vector.load %arg12[%c0_62, %c1_63, %c0_64] : memref<10x18x128xbf16, #tpu.memory_space<vmem>>, vector<1x16x128xbf16>
      tpu.vector_store %arg12[%c0_62, %c1_63, %c0_64], %88 {strides = array<i32>} : memref<10x18x128xbf16, #tpu.memory_space<vmem>>, vector<1x16x128xbf16>,
    } else {
    }
    %c0_i32_18 = arith.constant 0 : i32
    %20 = arith.cmpi eq, %arg1, %c0_i32_18 : i32
    %21 = arith.extui %20 : i1 to i32
    %c0_i32_19 = arith.constant 0 : i32
    %22 = arith.cmpi ne, %21, %c0_i32_19 : i32
    scf.if %22 {
      %c0_56 = arith.constant 0 : index
      %c1_57 = arith.constant 1 : index
      %c0_58 = arith.constant 0 : index
      %79 = vector.load %arg12[%c0_56, %c1_57, %c0_58] : memref<10x18x128xbf16, #tpu.memory_space<vmem>>, vector<1x16x128xbf16>
      tpu.vector_store %arg12[%c0_56, %c1_57, %c0_58], %16 {strides = array<i32>} : memref<10x18x128xbf16, #tpu.memory_space<vmem>>, vector<1x16x128xbf16>,
    } else {
    }
    %c1_i32 = arith.constant 1 : i32
    %23 = arith.cmpi slt, %arg1, %c1_i32 : i32
    %24 = arith.extui %23 : i1 to i32
    %c0_i32_20 = arith.constant 0 : i32
    %25 = arith.cmpi ne, %24, %c0_i32_20 : i32
    scf.if %25 {
      %c0_56 = arith.constant 0 : index
      %c0_57 = arith.constant 0 : index
      %c0_58 = arith.constant 0 : index
      %c0_59 = arith.constant 0 : index
      %79 = vector.load %arg4[%c0_56, %c0_57, %c0_58, %c0_59] : memref<1x1x16x32xbf16, #tpu.memory_space<vmem>>, vector<1x1x16x32xbf16>
      %80 = vector.shape_cast %79 : vector<1x1x16x32xbf16> to vector<1x16x32xbf16>
      %81 = vector.shape_cast %80 : vector<1x16x32xbf16> to vector<16x32xbf16>
      %cst_60 = arith.constant dense<0.000000e+00> : vector<16x128xf32>
      %82 = tpu.matmul %81, %0, %cst_60 {dimension_numbers = #tpu.dot_dimension_numbers<[1], [0], [0], [1], [0, 0, 1, 1], [], []>} : vector<16x32xbf16>, vector<32x128xbf16>, vector<16x128xf32> -> vector<16x128xf32>
      %83 = vector.broadcast %1 : vector<1x128xf32> to vector<16x128xf32>
      %84 = arith.addf %82, %83 : vector<16x128xf32>
      %cst_61 = arith.constant 0.000000e+00 : f32
      %85 = vector.broadcast %cst_61 : f32 to vector<16x128xf32>
      %86 = arith.maximumf %84, %85 : vector<16x128xf32>
      %87 = vector.shape_cast %86 : vector<16x128xf32> to vector<1x16x128xf32>
      %88 = arith.truncf %87 : vector<1x16x128xf32> to vector<1x16x128xbf16>
      %c9 = arith.constant 9 : index
      %c1_62 = arith.constant 1 : index
      %c0_63 = arith.constant 0 : index
      %89 = vector.load %arg12[%c9, %c1_62, %c0_63] : memref<10x18x128xbf16, #tpu.memory_space<vmem>>, vector<1x16x128xbf16>
      tpu.vector_store %arg12[%c9, %c1_62, %c0_63], %88 {strides = array<i32>} : memref<10x18x128xbf16, #tpu.memory_space<vmem>>, vector<1x16x128xbf16>,
    } else {
    }
    %c1_i32_21 = arith.constant 1 : i32
    %26 = arith.cmpi eq, %arg1, %c1_i32_21 : i32
    %27 = arith.extui %26 : i1 to i32
    %c0_i32_22 = arith.constant 0 : i32
    %28 = arith.cmpi ne, %27, %c0_i32_22 : i32
    scf.if %28 {
      %c9 = arith.constant 9 : index
      %c1_56 = arith.constant 1 : index
      %c0_57 = arith.constant 0 : index
      %79 = vector.load %arg12[%c9, %c1_56, %c0_57] : memref<10x18x128xbf16, #tpu.memory_space<vmem>>, vector<1x16x128xbf16>
      tpu.vector_store %arg12[%c9, %c1_56, %c0_57], %16 {strides = array<i32>} : memref<10x18x128xbf16, #tpu.memory_space<vmem>>, vector<1x16x128xbf16>,
    } else {
    }
    %c0_23 = arith.constant 0 : index
    %c0_24 = arith.constant 0 : index
    %c0_25 = arith.constant 0 : index
    %29 = vector.load %arg12[%c0_23, %c0_24, %c0_25] : memref<10x18x128xbf16, #tpu.memory_space<vmem>>, vector<8x18x128xbf16>
    %30 = vector.extract_strided_slice %29 {offsets = [0, 0, 0], sizes = [8, 16, 128], strides = [1, 1, 1]} : vector<8x18x128xbf16> to vector<8x16x128xbf16>
    %31 = vector.extract_strided_slice %29 {offsets = [0, 1, 0], sizes = [8, 16, 128], strides = [1, 1, 1]} : vector<8x18x128xbf16> to vector<8x16x128xbf16>
    %32 = vector.extract_strided_slice %29 {offsets = [0, 2, 0], sizes = [8, 16, 128], strides = [1, 1, 1]} : vector<8x18x128xbf16> to vector<8x16x128xbf16>
    %33 = tpu.concatenate %30, %31, %32 in 2 : vector<8x16x128xbf16>, vector<8x16x128xbf16>, vector<8x16x128xbf16> -> vector<8x16x384xbf16>
    %34 = vector.shape_cast %33 : vector<8x16x384xbf16> to vector<128x384xbf16>
    %c0_26 = arith.constant 0 : index
    %c0_27 = arith.constant 0 : index
    %c0_28 = arith.constant 0 : index
    %35 = vector.load %arg7[%c0_26, %c0_27, %c0_28] : memref<3x384x128xbf16, #tpu.memory_space<vmem>>, vector<1x384x128xbf16>
    %36 = vector.shape_cast %35 : vector<1x384x128xbf16> to vector<384x128xbf16>
    %cst_29 = arith.constant dense<0.000000e+00> : vector<128x128xf32>
    %37 = tpu.matmul %34, %36, %cst_29 {dimension_numbers = #tpu.dot_dimension_numbers<[1], [0], [0], [1], [0, 0, 1, 1], [], []>} : vector<128x384xbf16>, vector<384x128xbf16>, vector<128x128xf32> -> vector<128x128xf32>
    %c1_30 = arith.constant 1 : index
    %c0_31 = arith.constant 0 : index
    %c0_32 = arith.constant 0 : index
    %38 = vector.load %arg12[%c1_30, %c0_31, %c0_32] : memref<10x18x128xbf16, #tpu.memory_space<vmem>>, vector<8x18x128xbf16>
    %39 = vector.extract_strided_slice %38 {offsets = [0, 0, 0], sizes = [8, 16, 128], strides = [1, 1, 1]} : vector<8x18x128xbf16> to vector<8x16x128xbf16>
    %40 = vector.extract_strided_slice %38 {offsets = [0, 1, 0], sizes = [8, 16, 128], strides = [1, 1, 1]} : vector<8x18x128xbf16> to vector<8x16x128xbf16>
    %41 = vector.extract_strided_slice %38 {offsets = [0, 2, 0], sizes = [8, 16, 128], strides = [1, 1, 1]} : vector<8x18x128xbf16> to vector<8x16x128xbf16>
    %42 = tpu.concatenate %39, %40, %41 in 2 : vector<8x16x128xbf16>, vector<8x16x128xbf16>, vector<8x16x128xbf16> -> vector<8x16x384xbf16>
    %43 = vector.shape_cast %42 : vector<8x16x384xbf16> to vector<128x384xbf16>
    %c1_33 = arith.constant 1 : index
    %c0_34 = arith.constant 0 : index
    %c0_35 = arith.constant 0 : index
    %44 = vector.load %arg7[%c1_33, %c0_34, %c0_35] : memref<3x384x128xbf16, #tpu.memory_space<vmem>>, vector<1x384x128xbf16>
    %45 = vector.shape_cast %44 : vector<1x384x128xbf16> to vector<384x128xbf16>
    %cst_36 = arith.constant dense<0.000000e+00> : vector<128x128xf32>
    %46 = tpu.matmul %43, %45, %cst_36 {dimension_numbers = #tpu.dot_dimension_numbers<[1], [0], [0], [1], [0, 0, 1, 1], [], []>} : vector<128x384xbf16>, vector<384x128xbf16>, vector<128x128xf32> -> vector<128x128xf32>
    %47 = arith.addf %37, %46 : vector<128x128xf32>
    %c2 = arith.constant 2 : index
    %c0_37 = arith.constant 0 : index
    %c0_38 = arith.constant 0 : index
    %48 = vector.load %arg12[%c2, %c0_37, %c0_38] : memref<10x18x128xbf16, #tpu.memory_space<vmem>>, vector<8x18x128xbf16>
    %49 = vector.extract_strided_slice %48 {offsets = [0, 0, 0], sizes = [8, 16, 128], strides = [1, 1, 1]} : vector<8x18x128xbf16> to vector<8x16x128xbf16>
    %50 = vector.extract_strided_slice %48 {offsets = [0, 1, 0], sizes = [8, 16, 128], strides = [1, 1, 1]} : vector<8x18x128xbf16> to vector<8x16x128xbf16>
    %51 = vector.extract_strided_slice %48 {offsets = [0, 2, 0], sizes = [8, 16, 128], strides = [1, 1, 1]} : vector<8x18x128xbf16> to vector<8x16x128xbf16>
    %52 = tpu.concatenate %49, %50, %51 in 2 : vector<8x16x128xbf16>, vector<8x16x128xbf16>, vector<8x16x128xbf16> -> vector<8x16x384xbf16>
    %53 = vector.shape_cast %52 : vector<8x16x384xbf16> to vector<128x384xbf16>
    %c2_39 = arith.constant 2 : index
    %c0_40 = arith.constant 0 : index
    %c0_41 = arith.constant 0 : index
    %54 = vector.load %arg7[%c2_39, %c0_40, %c0_41] : memref<3x384x128xbf16, #tpu.memory_space<vmem>>, vector<1x384x128xbf16>
    %55 = vector.shape_cast %54 : vector<1x384x128xbf16> to vector<384x128xbf16>
    %cst_42 = arith.constant dense<0.000000e+00> : vector<128x128xf32>
    %56 = tpu.matmul %53, %55, %cst_42 {dimension_numbers = #tpu.dot_dimension_numbers<[1], [0], [0], [1], [0, 0, 1, 1], [], []>} : vector<128x384xbf16>, vector<384x128xbf16>, vector<128x128xf32> -> vector<128x128xf32>
    %57 = arith.addf %47, %56 : vector<128x128xf32>
    %c0_43 = arith.constant 0 : index
    %c0_44 = arith.constant 0 : index
    %58 = vector.load %arg8[%c0_43, %c0_44] : memref<1x128xf32, #tpu.memory_space<vmem>>, vector<1x128xf32>
    %59 = vector.broadcast %58 : vector<1x128xf32> to vector<128x128xf32>
    %60 = arith.addf %57, %59 : vector<128x128xf32>
    %cst_45 = arith.constant 0.000000e+00 : f32
    %61 = vector.broadcast %cst_45 : f32 to vector<128x128xf32>
    %62 = arith.maximumf %60, %61 : vector<128x128xf32>
    %63 = arith.truncf %62 : vector<128x128xf32> to vector<128x128xbf16>
    %c0_46 = arith.constant 0 : index
    %c0_47 = arith.constant 0 : index
    %64 = vector.load %arg9[%c0_46, %c0_47] : memref<128x32xbf16, #tpu.memory_space<vmem>>, vector<128x32xbf16>
    %cst_48 = arith.constant dense<0.000000e+00> : vector<128x32xf32>
    %65 = tpu.matmul %63, %64, %cst_48 {dimension_numbers = #tpu.dot_dimension_numbers<[1], [0], [0], [1], [0, 0, 1, 1], [], []>} : vector<128x128xbf16>, vector<128x32xbf16>, vector<128x32xf32> -> vector<128x32xf32>
    %c0_49 = arith.constant 0 : index
    %c0_50 = arith.constant 0 : index
    %66 = vector.load %arg10[%c0_49, %c0_50] : memref<1x32xf32, #tpu.memory_space<vmem>>, vector<1x32xf32>
    %67 = vector.broadcast %66 : vector<1x32xf32> to vector<128x32xf32>
    %68 = arith.addf %65, %67 : vector<128x32xf32>
    %69 = vector.shape_cast %6 : vector<8x16x32xbf16> to vector<128x32xbf16>
    %70 = arith.extf %69 : vector<128x32xbf16> to vector<128x32xf32>
    %71 = arith.addf %68, %70 : vector<128x32xf32>
    %cst_51 = arith.constant 0.000000e+00 : f32
    %72 = vector.broadcast %cst_51 : f32 to vector<128x32xf32>
    %73 = arith.maximumf %71, %72 : vector<128x32xf32>
    %74 = vector.shape_cast %73 : vector<128x32xf32> to vector<8x16x32xf32>
    %75 = arith.truncf %74 : vector<8x16x32xf32> to vector<8x16x32xbf16>
    %c0_52 = arith.constant 0 : index
    %c0_53 = arith.constant 0 : index
    %c0_54 = arith.constant 0 : index
    %c0_55 = arith.constant 0 : index
    %76 = vector.load %arg11[%c0_52, %c0_53, %c0_54, %c0_55] : memref<1x8x16x32xbf16, #tpu.memory_space<vmem>>, vector<1x8x16x32xbf16>
    %77 = vector.shape_cast %76 : vector<1x8x16x32xbf16> to vector<8x16x32xbf16>
    %78 = vector.shape_cast %75 : vector<8x16x32xbf16> to vector<1x8x16x32xbf16>
    tpu.vector_store %arg11[%c0_52, %c0_53, %c0_54, %c0_55], %78 {strides = array<i32>} : memref<1x8x16x32xbf16, #tpu.memory_space<vmem>>, vector<1x8x16x32xbf16>,
    return
  }
  func.func @transform_0(%arg0: i32, %arg1: i32) -> (i32, i32, i32, i32) {
    %c0_i32 = arith.constant 0 : i32
    %c0_i32_0 = arith.constant 0 : i32
    %c0_i32_1 = arith.constant 0 : i32
    return %arg0, %arg1, %c0_i32, %c0_i32_0 : i32, i32, i32, i32
  }
  func.func @transform_1(%arg0: i32, %arg1: i32) -> (i32, i32, i32, i32) {
    %c8_i32 = arith.constant 8 : i32
    %0 = arith.muli %arg1, %c8_i32 : i32
    %c1_i32 = arith.constant 1 : i32
    %1 = arith.subi %0, %c1_i32 : i32
    %c0_i32 = arith.constant 0 : i32
    %2 = arith.maxsi %1, %c0_i32 : i32
    %c0_i32_0 = arith.constant 0 : i32
    %c0_i32_1 = arith.constant 0 : i32
    %c0_i32_2 = arith.constant 0 : i32
    return %arg0, %2, %c0_i32_0, %c0_i32_1 : i32, i32, i32, i32
  }
  func.func @transform_2(%arg0: i32, %arg1: i32) -> (i32, i32, i32, i32) {
    %c1_i32 = arith.constant 1 : i32
    %0 = arith.addi %arg1, %c1_i32 : i32
    %c8_i32 = arith.constant 8 : i32
    %1 = arith.muli %0, %c8_i32 : i32
    %c15_i32 = arith.constant 15 : i32
    %2 = arith.minsi %1, %c15_i32 : i32
    %c0_i32 = arith.constant 0 : i32
    %c0_i32_0 = arith.constant 0 : i32
    %c0_i32_1 = arith.constant 0 : i32
    return %arg0, %2, %c0_i32, %c0_i32_0 : i32, i32, i32, i32
  }
  func.func @transform_3(%arg0: i32, %arg1: i32) -> (i32, i32) {
    %c0_i32 = arith.constant 0 : i32
    %c0_i32_0 = arith.constant 0 : i32
    %c0_i32_1 = arith.constant 0 : i32
    return %c0_i32, %c0_i32_0 : i32, i32
  }
  func.func @transform_4(%arg0: i32, %arg1: i32) -> (i32, i32) {
    %c0_i32 = arith.constant 0 : i32
    %c0_i32_0 = arith.constant 0 : i32
    %c0_i32_1 = arith.constant 0 : i32
    return %c0_i32, %c0_i32_0 : i32, i32
  }
  func.func @transform_5(%arg0: i32, %arg1: i32) -> (i32, i32, i32) {
    %c0_i32 = arith.constant 0 : i32
    %c0_i32_0 = arith.constant 0 : i32
    %c0_i32_1 = arith.constant 0 : i32
    %c0_i32_2 = arith.constant 0 : i32
    return %c0_i32, %c0_i32_0, %c0_i32_1 : i32, i32, i32
  }
  func.func @transform_6(%arg0: i32, %arg1: i32) -> (i32, i32) {
    %c0_i32 = arith.constant 0 : i32
    %c0_i32_0 = arith.constant 0 : i32
    %c0_i32_1 = arith.constant 0 : i32
    return %c0_i32, %c0_i32_0 : i32, i32
  }
  func.func @transform_7(%arg0: i32, %arg1: i32) -> (i32, i32) {
    %c0_i32 = arith.constant 0 : i32
    %c0_i32_0 = arith.constant 0 : i32
    %c0_i32_1 = arith.constant 0 : i32
    return %c0_i32, %c0_i32_0 : i32, i32
  }
  func.func @transform_8(%arg0: i32, %arg1: i32) -> (i32, i32) {
    %c0_i32 = arith.constant 0 : i32
    %c0_i32_0 = arith.constant 0 : i32
    %c0_i32_1 = arith.constant 0 : i32
    return %c0_i32, %c0_i32_0 : i32, i32
  }
  func.func @transform_9(%arg0: i32, %arg1: i32) -> (i32, i32, i32, i32) {
    %c0_i32 = arith.constant 0 : i32
    %c0_i32_0 = arith.constant 0 : i32
    %c0_i32_1 = arith.constant 0 : i32
    return %arg0, %arg1, %c0_i32, %c0_i32_0 : i32, i32, i32, i32
  }
}

</mosaic_0001>

<llo_original>
// kernel: tpu_custom_call.1
$region0: #{tpu_custom_call.1}
  #allocation0 [shape = 'u32[]', space=smem, size = 0x4, offset = 0x4, fixed_abs, tag = 'smem constant byte address 0x4 - core index']
  #allocation1 [shape = 'u32[144,128]{1,0:T(1,128)}', space=vmem, size = 0x12000, scoped, tag = 'internal scratch']
  #allocation2 [shape = 'bf16[10,18,128]{2,1,0:T(8,128)(2,1)}', space=vmem, size = 0xf000, scoped, tag = 'scratch operand']
  %s0 = inlined_call_operand.hbm [shape: bf16[2,16,16,32], index: 0, kind: input, shape index: {}]
  %s1 = inlined_call_operand.hbm [shape: bf16[2,16,16,32], index: 1, kind: input, shape index: {}]
  %s2 = inlined_call_operand.hbm [shape: bf16[2,16,16,32], index: 2, kind: input, shape index: {}]
  %s3 = inlined_call_operand.vmem [shape: bf16[32,128], index: 3, kind: input, shape index: {}]
  %s4 = inlined_call_operand.vmem [shape: f32[1,128], index: 4, kind: input, shape index: {}]
  %s5 = inlined_call_operand.hbm [shape: bf16[3,384,128], index: 5, kind: input, shape index: {}]
  %s6 = inlined_call_operand.vmem [shape: f32[1,128], index: 6, kind: input, shape index: {}]
  %s7 = inlined_call_operand.vmem [shape: bf16[128,32], index: 7, kind: input, shape index: {}]
  %s8 = inlined_call_operand.vmem [shape: f32[1,32], index: 8, kind: input, shape index: {}]
  %s9 = inlined_call_operand.hbm [shape: bf16[2,16,16,32], index: 9, kind: output, shape index: {}]
  %s10 = sld [smem:[#allocation0]]
  $region101: #{tpu_custom_call.1} parent=0
    _
  %s12 = ssub.s32 1, %s10
  %s13 = scalar_select 0, %s12, %s10
  $region1: #{tpu_custom_call.1} parent=0
    #allocation3 [shape = 'u8[65536]{0}', space=vmem, size = 0x10000, scoped, tag = 'input window, operand 0']
    #allocation4 [shape = 's32[2]{0}', space=sflag, size = 0x8, scoped, tag = 'scoped memory for tpu_custom_call.1']
    #allocation5 [shape = 's32[2]{0}', space=sflag, size = 0x8, scoped, tag = 'scoped memory for tpu_custom_call.1']
    #allocation6 [shape = 'u8[8192]{0}', space=vmem, size = 0x2000, scoped, tag = 'input window, operand 1']
    #allocation7 [shape = 's32[2]{0}', space=sflag, size = 0x8, scoped, tag = 'scoped memory for tpu_custom_call.1']
    #allocation8 [shape = 'u8[8192]{0}', space=vmem, size = 0x2000, scoped, tag = 'input window, operand 2']
    #allocation9 [shape = 'u8[294912]{0}', space=vmem, size = 0x48000, scoped, tag = 'input window, operand 5, single buffered']
    #allocation10 [shape = 's32[1]{0}', space=sflag, size = 0x4, scoped, tag = 'scoped memory for tpu_custom_call.1']
    #allocation11 [shape = 'u8[65536]{0}', space=vmem, size = 0x10000, scoped, tag = 'output window, operand 0']
    %14 = vsyncpa [#allocation4], 0
    %s15 = scalar_lea.sflag [#allocation4], 1
    %16 = vsyncpa %s15, 0
    %17 = vsyncpa [#allocation7], 0
    %s18 = scalar_lea.sflag [#allocation7], 1
    %19 = vsyncpa %s18, 0
    %20 = vsyncpa [#allocation10], 0
    %21 = vsyncpa [#allocation5], 0
    %s22 = scalar_lea.sflag [#allocation5], 1
    %23 = vsyncpa %s22, 0
    loop: start=0, step=1, limit=6
    $region2: #{tpu_custom_call.1} parent=1 // loop_pre_header
      _
    $region3: #{tpu_custom_call.1} parent=1 // loop_header
      %s25 = sphi 0, %s29
      %p26 = scmp.ge.s32.totalorder %s25, 6
      %s32 = sphi 0, %s44
      %s33 = sphi 0, %s40
      %s34 = sphi 0, %s32
      %s35 = sphi 0, %s33
      %s36 = sphi 0, %s34
      %s37 = sphi 0, %s35
      %s49 = sphi 0, %s51
      %s52 = sphi 0, %s49
      %s53 = sphi 0, %s52
      %s69 = sphi 0, %s53
      %s85 = sphi 0, %s87
      %s88 = sphi 0, %s85
      %s89 = sphi 0, %s88
      %s105 = sphi 0, %s89
      %s121 = sphi 0, %s123
      %s124 = sphi 0, %s121
      %s125 = sphi 0, %s124
      %s141 = sphi 0, %s125
      %s145 = sphi 0, %s145
      %s147 = sphi 0, %s145
      %s148 = sphi 0, %s147
      %s162 = sphi 0, %s148
      %s166 = sphi 0, %s166
      %s168 = sphi 0, %s166
      %s169 = sphi 0, %s168
      %s183 = sphi 0, %s169
      %s187 = sphi 0, %s187
      %s189 = sphi 0, %s187
      %s190 = sphi 0, %s189
      %s204 = sphi 0, %s190
      %s208 = sphi 0, %s208
      %s210 = sphi 0, %s208
      %s211 = sphi 0, %s210
      %s225 = sphi 0, %s211
      %s229 = sphi 0, %s229
      %s231 = sphi 0, %s229
      %s232 = sphi 0, %s231
      %s246 = sphi 0, %s232
      %s250 = sphi 0, %s250
      %s252 = sphi 0, %s250
      %s253 = sphi 0, %s252
      %s267 = sphi 0, %s253
      %s275 = sphi 0, %s277
      %s278 = sphi 0, %s275
      %s279 = sphi 0, %s278
      %s295 = sphi 0, %s279
    $region4: #{tpu_custom_call.1} parent=1 // loop_header_branch
      %28 = sbr.rel (%p26) target = $region8
    $region5: #{tpu_custom_call.1} parent=1 // loop_body
      %s30 = ssub.s32 %s25, 1
      %s31 = ssub.s32 %s25, 2
      %s38 = sadd.s32 1, %s33
      %p39 = scmp.ge.s32.totalorder %s38, 2
      %s40 = scalar_select %p39, 0, %s38
      %s41 = sadd.s32 1, %s32
      %s42 = scalar_select %p39, %s41, %s32
      %p43 = scmp.ge.s32.totalorder %s42, 2
      %s44 = scalar_select %p43, 0, %s42
      %s45 = ssub.s32 %s32, %s44
      %s46 = ssub.s32 %s33, %s40
      %s47 = sor.u32 %s45, %s46
      %p48 = scmp.eq.s32.totalorder %s47, 0
      %s50 = sadd.s32 %s49, 1
      %s51 = scalar_select %p48, %s49, %s50
      %p54 = pneg %p48
      %p55 = scmp.eq.s32.totalorder %s25, 3
      %p56 = por %p54, %p55
      %p57 = scmp.ne.s32.totalorder %s49, %s52
      %p58 = scmp.eq.s32.totalorder %s25, 0
      %p59 = por %p57, %p58
      %p60 = scmp.ne.s32.totalorder %s49, %s52
      %p61 = scmp.eq.s32.totalorder %s30, 3
      %p62 = por %p60, %p61
      %p63 = scmp.ne.s32.totalorder %s52, %s53
      %p64 = scmp.eq.s32.totalorder %s30, 0
      %p65 = por %p63, %p64
      %p66 = scmp.ne.s32.totalorder %s52, %s53
      %p67 = scmp.eq.s32.totalorder %s31, 3
      %p68 = por %p66, %p67
      %p70 = scmp.ne.s32.totalorder %s53, %s69
      %p71 = scmp.eq.s32.totalorder %s31, 0
      %p72 = por %p70, %p71
      %s73 = smul.u32 %s33, 8
      %s74 = ssub.s32 %s73, 1
      %p75 = scmp.gt.s32.totalorder %s74, 0
      %s76 = scalar_select %p75, %s74, 0
      %s77 = smul.u32 %s40, 8
      %s78 = ssub.s32 %s77, 1
      %p79 = scmp.gt.s32.totalorder %s78, 0
      %s80 = scalar_select %p79, %s78, 0
      %s81 = ssub.s32 %s32, %s44
      %s82 = ssub.s32 %s76, %s80
      %s83 = sor.u32 %s81, %s82
      %p84 = scmp.eq.s32.totalorder %s83, 0
      %s86 = sadd.s32 %s85, 1
      %s87 = scalar_select %p84, %s85, %s86
      %p90 = pneg %p84
      %p91 = scmp.eq.s32.totalorder %s25, 3
      %p92 = por %p90, %p91
      %p93 = scmp.ne.s32.totalorder %s85, %s88
      %p94 = scmp.eq.s32.totalorder %s25, 0
      %p95 = por %p93, %p94
      %p96 = scmp.ne.s32.totalorder %s85, %s88
      %p97 = scmp.eq.s32.totalorder %s30, 3
      %p98 = por %p96, %p97
      %p99 = scmp.ne.s32.totalorder %s88, %s89
      %p100 = scmp.eq.s32.totalorder %s30, 0
      %p101 = por %p99, %p100
      %p102 = scmp.ne.s32.totalorder %s88, %s89
      %p103 = scmp.eq.s32.totalorder %s31, 3
      %p104 = por %p102, %p103
      %p106 = scmp.ne.s32.totalorder %s89, %s105
      %p107 = scmp.eq.s32.totalorder %s31, 0
      %p108 = por %p106, %p107
      %s109 = sadd.s32 %s33, 1
      %s110 = smul.u32 %s109, 8
      %p111 = scmp.lt.s32.totalorder %s110, 15
      %s112 = scalar_select %p111, %s110, 15
      %s113 = sadd.s32 %s40, 1
      %s114 = smul.u32 %s113, 8
      %p115 = scmp.lt.s32.totalorder %s114, 15
      %s116 = scalar_select %p115, %s114, 15
      %s117 = ssub.s32 %s32, %s44
      %s118 = ssub.s32 %s112, %s116
      %s119 = sor.u32 %s117, %s118
      %p120 = scmp.eq.s32.totalorder %s119, 0
      %s122 = sadd.s32 %s121, 1
      %s123 = scalar_select %p120, %s121, %s122
      %p126 = pneg %p120
      %p127 = scmp.eq.s32.totalorder %s25, 3
      %p128 = por %p126, %p127
      %p129 = scmp.ne.s32.totalorder %s121, %s124
      %p130 = scmp.eq.s32.totalorder %s25, 0
      %p131 = por %p129, %p130
      %p132 = scmp.ne.s32.totalorder %s121, %s124
      %p133 = scmp.eq.s32.totalorder %s30, 3
      %p134 = por %p132, %p133
      %p135 = scmp.ne.s32.totalorder %s124, %s125
      %p136 = scmp.eq.s32.totalorder %s30, 0
      %p137 = por %p135, %p136
      %p138 = scmp.ne.s32.totalorder %s124, %s125
      %p139 = scmp.eq.s32.totalorder %s31, 3
      %p140 = por %p138, %p139
      %p142 = scmp.ne.s32.totalorder %s125, %s141
      %p143 = scmp.eq.s32.totalorder %s31, 0
      %p144 = por %p142, %p143
      %s146 = sadd.s32 %s145, 1
      %p149 = scmp.eq.s32.totalorder %s25, 3
      %p150 = scmp.ne.s32.totalorder %s145, %s147
      %p151 = scmp.eq.s32.totalorder %s25, 0
      %p152 = por %p150, %p151
      %p153 = scmp.ne.s32.totalorder %s145, %s147
      %p154 = scmp.eq.s32.totalorder %s30, 3
      %p155 = por %p153, %p154
      %p156 = scmp.ne.s32.totalorder %s147, %s148
      %p157 = scmp.eq.s32.totalorder %s30, 0
      %p158 = por %p156, %p157
      %p159 = scmp.ne.s32.totalorder %s147, %s148
      %p160 = scmp.eq.s32.totalorder %s31, 3
      %p161 = por %p159, %p160
      %p163 = scmp.ne.s32.totalorder %s148, %s162
      %p164 = scmp.eq.s32.totalorder %s31, 0
      %p165 = por %p163, %p164
      %s167 = sadd.s32 %s166, 1
      %p170 = scmp.eq.s32.totalorder %s25, 3
      %p171 = scmp.ne.s32.totalorder %s166, %s168
      %p172 = scmp.eq.s32.totalorder %s25, 0
      %p173 = por %p171, %p172
      %p174 = scmp.ne.s32.totalorder %s166, %s168
      %p175 = scmp.eq.s32.totalorder %s30, 3
      %p176 = por %p174, %p175
      %p177 = scmp.ne.s32.totalorder %s168, %s169
      %p178 = scmp.eq.s32.totalorder %s30, 0
      %p179 = por %p177, %p178
      %p180 = scmp.ne.s32.totalorder %s168, %s169
      %p181 = scmp.eq.s32.totalorder %s31, 3
      %p182 = por %p180, %p181
      %p184 = scmp.ne.s32.totalorder %s169, %s183
      %p185 = scmp.eq.s32.totalorder %s31, 0
      %p186 = por %p184, %p185
      %s188 = sadd.s32 %s187, 1
      %p191 = scmp.eq.s32.totalorder %s25, 3
      %p192 = scmp.ne.s32.totalorder %s187, %s189
      %p193 = scmp.eq.s32.totalorder %s25, 0
      %p194 = por %p192, %p193
      %p195 = scmp.ne.s32.totalorder %s187, %s189
      %p196 = scmp.eq.s32.totalorder %s30, 3
      %p197 = por %p195, %p196
      %p198 = scmp.ne.s32.totalorder %s189, %s190
      %p199 = scmp.eq.s32.totalorder %s30, 0
      %p200 = por %p198, %p199
      %p201 = scmp.ne.s32.totalorder %s189, %s190
      %p202 = scmp.eq.s32.totalorder %s31, 3
      %p203 = por %p201, %p202
      %p205 = scmp.ne.s32.totalorder %s190, %s204
      %p206 = scmp.eq.s32.totalorder %s31, 0
      %p207 = por %p205, %p206
      %s209 = sadd.s32 %s208, 1
      %p212 = scmp.eq.s32.totalorder %s25, 3
      %p213 = scmp.ne.s32.totalorder %s208, %s210
      %p214 = scmp.eq.s32.totalorder %s25, 0
      %p215 = por %p213, %p214
      %p216 = scmp.ne.s32.totalorder %s208, %s210
      %p217 = scmp.eq.s32.totalorder %s30, 3
      %p218 = por %p216, %p217
      %p219 = scmp.ne.s32.totalorder %s210, %s211
      %p220 = scmp.eq.s32.totalorder %s30, 0
      %p221 = por %p219, %p220
      %p222 = scmp.ne.s32.totalorder %s210, %s211
      %p223 = scmp.eq.s32.totalorder %s31, 3
      %p224 = por %p222, %p223
      %p226 = scmp.ne.s32.totalorder %s211, %s225
      %p227 = scmp.eq.s32.totalorder %s31, 0
      %p228 = por %p226, %p227
      %s230 = sadd.s32 %s229, 1
      %p233 = scmp.eq.s32.totalorder %s25, 3
      %p234 = scmp.ne.s32.totalorder %s229, %s231
      %p235 = scmp.eq.s32.totalorder %s25, 0
      %p236 = por %p234, %p235
      %p237 = scmp.ne.s32.totalorder %s229, %s231
      %p238 = scmp.eq.s32.totalorder %s30, 3
      %p239 = por %p237, %p238
      %p240 = scmp.ne.s32.totalorder %s231, %s232
      %p241 = scmp.eq.s32.totalorder %s30, 0
      %p242 = por %p240, %p241
      %p243 = scmp.ne.s32.totalorder %s231, %s232
      %p244 = scmp.eq.s32.totalorder %s31, 3
      %p245 = por %p243, %p244
      %p247 = scmp.ne.s32.totalorder %s232, %s246
      %p248 = scmp.eq.s32.totalorder %s31, 0
      %p249 = por %p247, %p248
      %s251 = sadd.s32 %s250, 1
      %p254 = scmp.eq.s32.totalorder %s25, 3
      %p255 = scmp.ne.s32.totalorder %s250, %s252
      %p256 = scmp.eq.s32.totalorder %s25, 0
      %p257 = por %p255, %p256
      %p258 = scmp.ne.s32.totalorder %s250, %s252
      %p259 = scmp.eq.s32.totalorder %s30, 3
      %p260 = por %p258, %p259
      %p261 = scmp.ne.s32.totalorder %s252, %s253
      %p262 = scmp.eq.s32.totalorder %s30, 0
      %p263 = por %p261, %p262
      %p264 = scmp.ne.s32.totalorder %s252, %s253
      %p265 = scmp.eq.s32.totalorder %s31, 3
      %p266 = por %p264, %p265
      %p268 = scmp.ne.s32.totalorder %s253, %s267
      %p269 = scmp.eq.s32.totalorder %s31, 0
      %p270 = por %p268, %p269
      %s271 = ssub.s32 %s32, %s44
      %s272 = ssub.s32 %s33, %s40
      %s273 = sor.u32 %s271, %s272
      %p274 = scmp.eq.s32.totalorder %s273, 0
      %s276 = sadd.s32 %s275, 1
      %s277 = scalar_select %p274, %s275, %s276
      %p280 = pneg %p274
      %p281 = scmp.eq.s32.totalorder %s25, 3
      %p282 = por %p280, %p281
      %p283 = scmp.ne.s32.totalorder %s275, %s278
      %p284 = scmp.eq.s32.totalorder %s25, 0
      %p285 = por %p283, %p284
      %p286 = scmp.ne.s32.totalorder %s275, %s278
      %p287 = scmp.eq.s32.totalorder %s30, 3
      %p288 = por %p286, %p287
      %p289 = scmp.ne.s32.totalorder %s278, %s279
      %p290 = scmp.eq.s32.totalorder %s30, 0
      %p291 = por %p289, %p290
      %p292 = scmp.ne.s32.totalorder %s278, %s279
      %p293 = scmp.eq.s32.totalorder %s31, 3
      %p294 = por %p292, %p293
      %p296 = scmp.ne.s32.totalorder %s279, %s295
      %p297 = scmp.eq.s32.totalorder %s31, 0
      %p298 = por %p296, %p297
      %p299 = scmp.le.s32.totalorder 1, %s25
      %p300 = scmp.lt.s32.totalorder %s25, 5
      %p301 = pnand %p299, %p300
      %p302 = pneg %p301
      // Predicated region
      $region9: #{tpu_custom_call.1} parent=5 // pred_check
        _
      $region10: #{tpu_custom_call.1} parent=5 // pred_check_branch
        %304 = sbr.rel (%p301) target = $region12
      $region11: #{tpu_custom_call.1} parent=5 // pred_region
        %s305 = ssub.s32 %s25, 1
        // Predicated region
        $region13: #{tpu_custom_call.1} parent=11 // pred_check
          %p306 = pneg %p158
        $region14: #{tpu_custom_call.1} parent=11 // pred_check_branch
          %308 = sbr.rel (%p306) target = $region16
        $region15: #{tpu_custom_call.1} parent=11 // pred_region
          _
        $region16: #{tpu_custom_call.1} parent=11 // pred_fallthru
          _
        // Predicated region
        $region17: #{tpu_custom_call.1} parent=11 // pred_check
          %p309 = pneg %p179
        $region18: #{tpu_custom_call.1} parent=11 // pred_check_branch
          %311 = sbr.rel (%p309) target = $region20
        $region19: #{tpu_custom_call.1} parent=11 // pred_region
          _
        $region20: #{tpu_custom_call.1} parent=11 // pred_fallthru
          _
        // Predicated region
        $region21: #{tpu_custom_call.1} parent=11 // pred_check
          %p312 = pneg %p200
        $region22: #{tpu_custom_call.1} parent=11 // pred_check_branch
          %314 = sbr.rel (%p312) target = $region24
        $region23: #{tpu_custom_call.1} parent=11 // pred_region
          %s316 = ssub.s32 9216, 9216
          %317 = vsyncadd [#allocation10], %s316
          %s318 = sshll.u32 [#allocation9], 4
          %s319 = int_to_ptr.vmem [resolvable:$true] %s318
          %324 = dma.hbm_to_vmem [thread:$0]  %s5, 9216, %s319, [#allocation10], 64, 64, 4
        $region24: #{tpu_custom_call.1} parent=11 // pred_fallthru
          _
        // Predicated region
        $region25: #{tpu_custom_call.1} parent=11 // pred_check
          %p325 = pneg %p221
        $region26: #{tpu_custom_call.1} parent=11 // pred_check_branch
          %327 = sbr.rel (%p325) target = $region28
        $region27: #{tpu_custom_call.1} parent=11 // pred_region
          _
        $region28: #{tpu_custom_call.1} parent=11 // pred_fallthru
          _
        // Predicated region
        $region29: #{tpu_custom_call.1} parent=11 // pred_check
          %p328 = pneg %p242
        $region30: #{tpu_custom_call.1} parent=11 // pred_check_branch
          %330 = sbr.rel (%p328) target = $region32
        $region31: #{tpu_custom_call.1} parent=11 // pred_region
          _
        $region32: #{tpu_custom_call.1} parent=11 // pred_fallthru
          _
        // Predicated region
        $region33: #{tpu_custom_call.1} parent=11 // pred_check
          %p331 = pneg %p263
        $region34: #{tpu_custom_call.1} parent=11 // pred_check_branch
          %333 = sbr.rel (%p331) target = $region36
        $region35: #{tpu_custom_call.1} parent=11 // pred_region
          _
        $region36: #{tpu_custom_call.1} parent=11 // pred_fallthru
          _
      $region12: #{tpu_custom_call.1} parent=5 // pred_fallthru
        _
      %p334 = scmp.lt.s32.totalorder %s25, 4
      // Predicated region
      $region37: #{tpu_custom_call.1} parent=5 // pred_check
        %p335 = pneg %p334
      $region38: #{tpu_custom_call.1} parent=5 // pred_check_branch
        %337 = sbr.rel (%p335) target = $region40
      $region39: #{tpu_custom_call.1} parent=5 // pred_region
        // Predicated region
        $region41: #{tpu_custom_call.1} parent=39 // pred_check
          %p338 = pneg %p59
        $region42: #{tpu_custom_call.1} parent=39 // pred_check_branch
          %340 = sbr.rel (%p338) target = $region44
        $region43: #{tpu_custom_call.1} parent=39 // pred_region
          %s341 = sand.u32 %s49, 1
          %s342 = scalar_lea.sflag [#allocation4], %s341
          %s343 = sand.u32 %s49, 1
          %s344 = smul.addr %s343, 64
          %s345 = scalar_lea.vmem [#allocation3], %s344
          %s346 = smul.u32 8, %s33
          %s348 = ssub.s32 1024, 1024
          %349 = vsyncadd %s342, %s348
          %s350 = smul.addr %s346, 2
          %s351 = smul.addr %s32, 32
          %s352 = sadd.s32 %s350, %s351
          %s353 = smul.addr %s352, 64
          %s354 = scalar_lea.hbm %s0, %s353
          %s355 = sshll.u32 %s345, 4
          %s356 = int_to_ptr.vmem [resolvable:$true] %s355
          %361 = dma.hbm_to_vmem [thread:$0]  %s354, 1024, %s356, %s342, 64, 64, 4
        $region44: #{tpu_custom_call.1} parent=39 // pred_fallthru
          _
        // Predicated region
        $region45: #{tpu_custom_call.1} parent=39 // pred_check
          %p362 = pneg %p95
        $region46: #{tpu_custom_call.1} parent=39 // pred_check_branch
          %364 = sbr.rel (%p362) target = $region48
        $region47: #{tpu_custom_call.1} parent=39 // pred_region
          %s365 = sand.u32 %s25, 1
          %s366 = scalar_lea.sflag [#allocation7], %s365
          %s367 = sand.u32 %s85, 1
          %s368 = smul.addr %s367, 8
          %s369 = scalar_lea.vmem [#allocation6], %s368
          %s370 = smul.u32 %s33, 8
          %s371 = ssub.s32 %s370, 1
          %p372 = scmp.gt.s32.totalorder %s371, 0
          %s373 = scalar_select %p372, %s371, 0
          %s375 = ssub.s32 128, 128
          %376 = vsyncadd %s366, %s375
          %s377 = smul.addr %s373, 2
          %s378 = smul.addr %s32, 32
          %s379 = sadd.s32 %s377, %s378
          %s380 = smul.addr %s379, 64
          %s381 = scalar_lea.hbm %s1, %s380
          %s382 = sshll.u32 %s369, 4
          %s383 = int_to_ptr.vmem [resolvable:$true] %s382
          %388 = dma.hbm_to_vmem [thread:$0]  %s381, 128, %s383, %s366, 64, 64, 4
        $region48: #{tpu_custom_call.1} parent=39 // pred_fallthru
          _
        // Predicated region
        $region49: #{tpu_custom_call.1} parent=39 // pred_check
          %p389 = pneg %p131
        $region50: #{tpu_custom_call.1} parent=39 // pred_check_branch
          %391 = sbr.rel (%p389) target = $region52
        $region51: #{tpu_custom_call.1} parent=39 // pred_region
          %s392 = sand.u32 %s25, 1
          %s393 = scalar_lea.sflag [#allocation7], %s392
          %s394 = sand.u32 %s121, 1
          %s395 = smul.addr %s394, 8
          %s396 = scalar_lea.vmem [#allocation8], %s395
          %s397 = sadd.s32 %s33, 1
          %s398 = smul.u32 %s397, 8
          %p399 = scmp.lt.s32.totalorder %s398, 15
          %s400 = scalar_select %p399, %s398, 15
          %s402 = ssub.s32 128, 128
          %403 = vsyncadd %s393, %s402
          %s404 = smul.addr %s400, 2
          %s405 = smul.addr %s32, 32
          %s406 = sadd.s32 %s404, %s405
          %s407 = smul.addr %s406, 64
          %s408 = scalar_lea.hbm %s2, %s407
          %s409 = sshll.u32 %s396, 4
          %s410 = int_to_ptr.vmem [resolvable:$true] %s409
          %415 = dma.hbm_to_vmem [thread:$0]  %s408, 128, %s410, %s393, 64, 64, 4
        $region52: #{tpu_custom_call.1} parent=39 // pred_fallthru
          _
      $region40: #{tpu_custom_call.1} parent=5 // pred_fallthru
        _
      %p416 = scmp.le.s32.totalorder 1, %s25
      %p417 = scmp.lt.s32.totalorder %s25, 5
      %p418 = pnand %p416, %p417
      %p419 = pneg %p418
      // Predicated region
      $region53: #{tpu_custom_call.1} parent=5 // pred_check
        _
      $region54: #{tpu_custom_call.1} parent=5 // pred_check_branch
        %421 = sbr.rel (%p418) target = $region56
      $region55: #{tpu_custom_call.1} parent=5 // pred_region
        %s422 = ssub.s32 %s25, 1
        %s423 = sand.u32 %s52, 1
        %s424 = scalar_lea.sflag [#allocation4], %s423
        %s425 = sand.u32 %s52, 1
        %s426 = smul.addr %s425, 64
        %s427 = scalar_lea.vmem [#allocation3], %s426
        // Predicated region
        $region57: #{tpu_custom_call.1} parent=55 // pred_check
          %p428 = pneg %p65
        $region58: #{tpu_custom_call.1} parent=55 // pred_check_branch
          %430 = sbr.rel (%p428) target = $region60
        $region59: #{tpu_custom_call.1} parent=55 // pred_region
          %431 = dma.done %s424, 1024
        $region60: #{tpu_custom_call.1} parent=55 // pred_fallthru
          _
        %s432 = sand.u32 %s30, 1
        %s433 = scalar_lea.sflag [#allocation7], %s432
        %s434 = sand.u32 %s88, 1
        %s435 = smul.addr %s434, 8
        %s436 = scalar_lea.vmem [#allocation6], %s435
        // Predicated region
        $region61: #{tpu_custom_call.1} parent=55 // pred_check
          %p437 = pneg %p101
        $region62: #{tpu_custom_call.1} parent=55 // pred_check_branch
          %439 = sbr.rel (%p437) target = $region64
        $region63: #{tpu_custom_call.1} parent=55 // pred_region
          %440 = dma.done %s433, 128
        $region64: #{tpu_custom_call.1} parent=55 // pred_fallthru
          _
        %s441 = sand.u32 %s30, 1
        %s442 = scalar_lea.sflag [#allocation7], %s441
        %s443 = sand.u32 %s124, 1
        %s444 = smul.addr %s443, 8
        %s445 = scalar_lea.vmem [#allocation8], %s444
        // Predicated region
        $region65: #{tpu_custom_call.1} parent=55 // pred_check
          %p446 = pneg %p137
        $region66: #{tpu_custom_call.1} parent=55 // pred_check_branch
          %448 = sbr.rel (%p446) target = $region68
        $region67: #{tpu_custom_call.1} parent=55 // pred_region
          %449 = dma.done %s442, 128
        $region68: #{tpu_custom_call.1} parent=55 // pred_fallthru
          _
        // Predicated region
        $region69: #{tpu_custom_call.1} parent=55 // pred_check
          %p450 = pneg %p200
        $region70: #{tpu_custom_call.1} parent=55 // pred_check_branch
          %452 = sbr.rel (%p450) target = $region72
        $region71: #{tpu_custom_call.1} parent=55 // pred_region
          %453 = dma.done [#allocation10], 9216
        $region72: #{tpu_custom_call.1} parent=55 // pred_fallthru
          _
        %s454 = sand.u32 %s52, 1
        %s455 = scalar_lea.sflag [#allocation4], %s454
        %s456 = sand.u32 %s52, 1
        %s457 = smul.addr %s456, 64
        %s458 = scalar_lea.vmem [#allocation3], %s457
        %p459 = pneg %p65
        %p460 = pneg %p62
        %s461 = sand.u32 %s30, 1
        %s462 = scalar_lea.sflag [#allocation7], %s461
        %s463 = sand.u32 %s88, 1
        %s464 = smul.addr %s463, 8
        %s465 = scalar_lea.vmem [#allocation6], %s464
        %p466 = pneg %p101
        %p467 = pneg %p98
        %s468 = sand.u32 %s30, 1
        %s469 = scalar_lea.sflag [#allocation7], %s468
        %s470 = sand.u32 %s124, 1
        %s471 = smul.addr %s470, 8
        %s472 = scalar_lea.vmem [#allocation8], %s471
        %p473 = pneg %p137
        %p474 = pneg %p134
        %p475 = pneg %p158
        %p476 = pneg %p155
        %p477 = pneg %p179
        %p478 = pneg %p176
        %p479 = pneg %p200
        %p480 = pneg %p197
        %p481 = pneg %p221
        %p482 = pneg %p218
        %p483 = pneg %p242
        %p484 = pneg %p239
        %p485 = pneg %p263
        %p486 = pneg %p260
        %p487 = pneg %p291
        %p488 = pneg %p288
        %s489 = sand.u32 %s278, 1
        %s490 = scalar_lea.sflag [#allocation5], %s489
        %s491 = sand.u32 %s278, 1
        %s492 = smul.addr %s491, 64
        %s493 = scalar_lea.vmem [#allocation11], %s492
        %s494 = smul.u32 8, %s35
        %s495 = smul.u32 %s35, 8
        %s496 = ssub.s32 %s495, 1
        %p497 = scmp.gt.s32.totalorder %s496, 0
        %s498 = scalar_select %p497, %s496, 0
        %s499 = sadd.s32 %s35, 1
        %s500 = smul.u32 %s499, 8
        %p501 = scmp.lt.s32.totalorder %s500, 15
        %s502 = scalar_select %p501, %s500, 15
        %s503 = smul.u32 8, %s35
        %v505 = vld [vmem:[%s3] sm:$0xf]
        %v506 = vld [vmem:[%s3 + $0x4] sm:$0xf]
        %v507 = vld [vmem:[%s3 + $0x8] sm:$0xf]
        %v508 = vld [vmem:[%s3 + $0xc] sm:$0xf]
        %v509 = vld [vmem:[%s4] sm:$0x1]
        %vm510 = vcmask 1040384
        %vm511 = vsmask.f32 256
        %vm512 = vmand %vm510, %vm511
        %v513 = vld [vmem:[#allocation2] sm:$0x1]
        %v514 = vsel %vm512, 0, %v513
        %515 = vst [vmem:[#allocation2] sm:$0x1] %v514
        %v516 = vld [vmem:[#allocation2 + $0xc] sm:$0x1]
        %v517 = vsel %vm512, 0, %v516
        %518 = vst [vmem:[#allocation2 + $0xc] sm:$0x1] %v517
        %v519 = vld [vmem:[#allocation2 + $0x18] sm:$0x1]
        %v520 = vsel %vm512, 0, %v519
        %521 = vst [vmem:[#allocation2 + $0x18] sm:$0x1] %v520
        %v522 = vld [vmem:[#allocation2 + $0x24] sm:$0x1]
        %v523 = vsel %vm512, 0, %v522
        %524 = vst [vmem:[#allocation2 + $0x24] sm:$0x1] %v523
        %v525 = vld [vmem:[#allocation2 + $0x30] sm:$0x1]
        %v526 = vsel %vm512, 0, %v525
        %527 = vst [vmem:[#allocation2 + $0x30] sm:$0x1] %v526
        %v528 = vld [vmem:[#allocation2 + $0x3c] sm:$0x1]
        %v529 = vsel %vm512, 0, %v528
        %530 = vst [vmem:[#allocation2 + $0x3c] sm:$0x1] %v529
        %v531 = vld [vmem:[#allocation2 + $0x48] sm:$0x1]
        %v532 = vsel %vm512, 0, %v531
        %533 = vst [vmem:[#allocation2 + $0x48] sm:$0x1] %v532
        %v534 = vld [vmem:[#allocation2 + $0x54] sm:$0x1]
        %v535 = vsel %vm512, 0, %v534
        %536 = vst [vmem:[#allocation2 + $0x54] sm:$0x1] %v535
        %v537 = vld [vmem:[#allocation2 + $0x60] sm:$0x1]
        %v538 = vsel %vm512, 0, %v537
        %539 = vst [vmem:[#allocation2 + $0x60] sm:$0x1] %v538
        %v540 = vld [vmem:[#allocation2 + $0x6c] sm:$0x1]
        %v541 = vsel %vm512, 0, %v540
        %542 = vst [vmem:[#allocation2 + $0x6c] sm:$0x1] %v541
        %vm543 = vsmask.f32 7938
        %vm544 = vmand %vm510, %vm543
        %v545 = vld [vmem:[#allocation2 + $0x8] sm:$0x1]
        %v546 = vsel %vm544, 0, %v545
        %547 = vst [vmem:[#allocation2 + $0x8] sm:$0x1] %v546
        %v548 = vld [vmem:[#allocation2 + $0x14] sm:$0x1]
        %v549 = vsel %vm544, 0, %v548
        %550 = vst [vmem:[#allocation2 + $0x14] sm:$0x1] %v549
        %v551 = vld [vmem:[#allocation2 + $0x20] sm:$0x1]
        %v552 = vsel %vm544, 0, %v551
        %553 = vst [vmem:[#allocation2 + $0x20] sm:$0x1] %v552
        %v554 = vld [vmem:[#allocation2 + $0x2c] sm:$0x1]
        %v555 = vsel %vm544, 0, %v554
        %556 = vst [vmem:[#allocation2 + $0x2c] sm:$0x1] %v555
        %v557 = vld [vmem:[#allocation2 + $0x38] sm:$0x1]
        %v558 = vsel %vm544, 0, %v557
        %559 = vst [vmem:[#allocation2 + $0x38] sm:$0x1] %v558
        %v560 = vld [vmem:[#allocation2 + $0x44] sm:$0x1]
        %v561 = vsel %vm544, 0, %v560
        %562 = vst [vmem:[#allocation2 + $0x44] sm:$0x1] %v561
        %v563 = vld [vmem:[#allocation2 + $0x50] sm:$0x1]
        %v564 = vsel %vm544, 0, %v563
        %565 = vst [vmem:[#allocation2 + $0x50] sm:$0x1] %v564
        %v566 = vld [vmem:[#allocation2 + $0x5c] sm:$0x1]
        %v567 = vsel %vm544, 0, %v566
        %568 = vst [vmem:[#allocation2 + $0x5c] sm:$0x1] %v567
        %v569 = vld [vmem:[#allocation2 + $0x68] sm:$0x1]
        %v570 = vsel %vm544, 0, %v569
        %571 = vst [vmem:[#allocation2 + $0x68] sm:$0x1] %v570
        %v572 = vld [vmem:[#allocation2 + $0x74] sm:$0x1]
        %v573 = vsel %vm544, 0, %v572
        %574 = vst [vmem:[#allocation2 + $0x74] sm:$0x1] %v573
        %v575 = vld [vmem:[%s427] sm:$0xf]
        %v576 = vld [vmem:[%s427 + $0x4] sm:$0xf]
        %v577 = vld [vmem:[%s427 + $0x8] sm:$0xf]
        %v578 = vld [vmem:[%s427 + $0xc] sm:$0xf]
        %v579 = vld [vmem:[%s427 + $0x10] sm:$0xf]
        %v580 = vld [vmem:[%s427 + $0x14] sm:$0xf]
        %v581 = vld [vmem:[%s427 + $0x18] sm:$0xf]
        %v582 = vld [vmem:[%s427 + $0x1c] sm:$0xf]
        %v583 = vld [vmem:[%s427 + $0x20] sm:$0xf]
        %v584 = vld [vmem:[%s427 + $0x24] sm:$0xf]
        %v585 = vld [vmem:[%s427 + $0x28] sm:$0xf]
        %v586 = vld [vmem:[%s427 + $0x2c] sm:$0xf]
        %v587 = vld [vmem:[%s427 + $0x30] sm:$0xf]
        %v588 = vld [vmem:[%s427 + $0x34] sm:$0xf]
        %v589 = vld [vmem:[%s427 + $0x38] sm:$0xf]
        %v590 = vld [vmem:[%s427 + $0x3c] sm:$0xf]
        %v592 = vlaneseq
        %v593 = vshrl.u32 %v592, 7
        %v594 = vsub.s32 0, %v593
        %v595 = vrot.slane %v509, %v594
        %v613 = vunpack.c.l.b16 %v575
        %v614 = vunpack.c.l.b16 %v576
        %v615 = vunpack.c.l.b16 %v577
        %v616 = vunpack.c.l.b16 %v578
        %v617 = vunpack.c.l.b16 %v579
        %v618 = vunpack.c.l.b16 %v580
        %v619 = vunpack.c.l.b16 %v581
        %v620 = vunpack.c.l.b16 %v582
        %v621 = vunpack.c.l.b16 %v583
        %v622 = vunpack.c.l.b16 %v584
        %v623 = vunpack.c.l.b16 %v585
        %v624 = vunpack.c.l.b16 %v586
        %v625 = vunpack.c.l.b16 %v587
        %v626 = vunpack.c.l.b16 %v588
        %v627 = vunpack.c.l.b16 %v589
        %v628 = vunpack.c.l.b16 %v590
        %v629 = vpack.c.b16 %v614, %v613
        %v630 = vpack.c.b16 %v616, %v615
        %v631 = vpack.c.b16 %v618, %v617
        %v632 = vpack.c.b16 %v620, %v619
        %v633 = vpack.c.b16 %v622, %v621
        %v634 = vpack.c.b16 %v624, %v623
        %v635 = vpack.c.b16 %v626, %v625
        %v636 = vpack.c.b16 %v628, %v627
        %v641 = vunpack.c.l.b16 %v505
        %v642 = vunpack.c.l.b16 %v506
        %v643 = vunpack.c.l.b16 %v507
        %v644 = vunpack.c.l.b16 %v508
        %v645 = vpack.c.b16 %v642, %v641
        %v646 = vpack.c.b16 %v644, %v643
        %vm649 = vcmask 261120
        %v651 = vsel %vm649, %v629, 0
        %v654 = vsel %vm649, %v630, 0
        %v657 = vsel %vm649, %v631, 0
        %v660 = vsel %vm649, %v632, 0
        %v663 = vsel %vm649, %v633, 0
        %v666 = vsel %vm649, %v634, 0
        %v669 = vsel %vm649, %v635, 0
        %v672 = vsel %vm649, %v636, 0
        %674 = vmatprep.subr.bf16.mxu0 0
        %675 = vmatpush1.bf16.msra.mxu0 0
        %676 = vmatprep.subr.bf16.mxu0 0
        %677 = vmatpush1.bf16.msra.mxu0 0
        %678 = vmatprep.subr.bf16.mxu0 0
        %679 = vmatpush1.bf16.msra.mxu0 0
        %680 = vmatprep.subr.bf16.mxu0 0
        %681 = vmatpush1.bf16.msra.mxu0 0
        %682 = vmatprep.subr.bf16.mxu0 0
        %683 = vmatpush1.bf16.msra.mxu0 0
        %684 = vmatprep.subr.bf16.mxu0 0
        %685 = vmatpush1.bf16.msra.mxu0 0
        %686 = vmatprep.subr.bf16.mxu0 0
        %687 = vmatpush1.bf16.msra.mxu0 %v646
        %688 = vmatprep.subr.bf16.mxu0 0
        %689 = vmatpush1.bf16.msra.mxu0 %v645
        %690 = vmatprep.subr.bf16.mxu0 0
        %691 = vmatpush2.bf16.msra.mxu0 0
        %692 = vmatprep.subr.bf16.mxu0 0
        %693 = vmatpush2.bf16.msra.mxu0 0
        %694 = vmatprep.subr.bf16.mxu0 0
        %695 = vmatpush2.bf16.msra.mxu0 0
        %696 = vmatprep.subr.bf16.mxu0 0
        %697 = vmatpush2.bf16.msra.mxu0 0
        %698 = vmatprep.subr.bf16.mxu0 0
        %699 = vmatpush2.bf16.msra.mxu0 0
        %700 = vmatprep.subr.bf16.mxu0 0
        %701 = vmatpush2.bf16.msra.mxu0 0
        %702 = vmatprep.subr.bf16.mxu0 0
        %703 = vmatpush2.bf16.msra.mxu0 0
        %704 = vmatprep.subr.bf16.mxu0 0
        %705 = vmatpush2.bf16.msra.mxu0 0
        %706 = vmatprep.mubr.bf16.mxu0 0
        %707 = vmatmul.mubr.bf16.gmra.mxu0 %v651
        %v708 = vpop.f32.mrf.mxu0
        %v709 = vadd.f32 %v595, %v708
        %v710 = vpop.f32.mrf.mxu0
        %v711 = vpop.f32.mrf.mxu0
        %v712 = vadd.f32 %v595, %v711
        %v713 = vpop.f32.mrf.mxu0
        %714 = vmatprep.mubr.bf16.mxu0 0
        %715 = vmatmul.mubr.bf16.gmra.mxu0 %v654
        %v716 = vpop.f32.mrf.mxu0
        %v717 = vadd.f32 %v595, %v716
        %v718 = vpop.f32.mrf.mxu0
        %v719 = vpop.f32.mrf.mxu0
        %v720 = vadd.f32 %v595, %v719
        %v721 = vpop.f32.mrf.mxu0
        %722 = vmatprep.mubr.bf16.mxu0 0
        %723 = vmatmul.mubr.bf16.gmra.mxu0 %v657
        %v724 = vpop.f32.mrf.mxu0
        %v725 = vadd.f32 %v595, %v724
        %v726 = vpop.f32.mrf.mxu0
        %v727 = vpop.f32.mrf.mxu0
        %v728 = vadd.f32 %v595, %v727
        %v729 = vpop.f32.mrf.mxu0
        %730 = vmatprep.mubr.bf16.mxu0 0
        %731 = vmatmul.mubr.bf16.gmra.mxu0 %v660
        %v732 = vpop.f32.mrf.mxu0
        %v733 = vadd.f32 %v595, %v732
        %v734 = vpop.f32.mrf.mxu0
        %v735 = vpop.f32.mrf.mxu0
        %v736 = vadd.f32 %v595, %v735
        %v737 = vpop.f32.mrf.mxu0
        %738 = vmatprep.mubr.bf16.mxu0 0
        %739 = vmatmul.mubr.bf16.gmra.mxu0 %v663
        %v740 = vpop.f32.mrf.mxu0
        %v741 = vadd.f32 %v595, %v740
        %v742 = vpop.f32.mrf.mxu0
        %v743 = vpop.f32.mrf.mxu0
        %v744 = vadd.f32 %v595, %v743
        %v745 = vpop.f32.mrf.mxu0
        %746 = vmatprep.mubr.bf16.mxu0 0
        %747 = vmatmul.mubr.bf16.gmra.mxu0 %v666
        %v748 = vpop.f32.mrf.mxu0
        %v749 = vadd.f32 %v595, %v748
        %v750 = vpop.f32.mrf.mxu0
        %v751 = vpop.f32.mrf.mxu0
        %v752 = vadd.f32 %v595, %v751
        %v753 = vpop.f32.mrf.mxu0
        %754 = vmatprep.mubr.bf16.mxu0 0
        %755 = vmatmul.mubr.bf16.gmra.mxu0 %v669
        %v756 = vpop.f32.mrf.mxu0
        %v757 = vadd.f32 %v595, %v756
        %v758 = vpop.f32.mrf.mxu0
        %v759 = vpop.f32.mrf.mxu0
        %v760 = vadd.f32 %v595, %v759
        %v761 = vpop.f32.mrf.mxu0
        %762 = vmatprep.mubr.bf16.mxu0 0
        %763 = vmatmul.mubr.bf16.gmra.mxu0 %v672
        %v764 = vpop.f32.mrf.mxu0
        %v765 = vadd.f32 %v595, %v764
        %v766 = vpop.f32.mrf.mxu0
        %v767 = vpop.f32.mrf.mxu0
        %v768 = vadd.f32 %v595, %v767
        %v769 = vpop.f32.mrf.mxu0
        %770 = vdwg.mxu0
        %v771 = vmax.f32 %v709, 0.0
        %v772 = vmax.f32 %v712, 0.0
        %v773 = vmax.f32 %v717, 0.0
        %v774 = vmax.f32 %v720, 0.0
        %v775 = vmax.f32 %v725, 0.0
        %v776 = vmax.f32 %v728, 0.0
        %v777 = vmax.f32 %v733, 0.0
        %v778 = vmax.f32 %v736, 0.0
        %v779 = vmax.f32 %v741, 0.0
        %v780 = vmax.f32 %v744, 0.0
        %v781 = vmax.f32 %v749, 0.0
        %v782 = vmax.f32 %v752, 0.0
        %v783 = vmax.f32 %v757, 0.0
        %v784 = vmax.f32 %v760, 0.0
        %v785 = vmax.f32 %v765, 0.0
        %v786 = vmax.f32 %v768, 0.0
        %v787 = vpack.c.bf16 %v772, %v771
        %v788 = vpack.c.bf16 %v774, %v773
        %v789 = vpack.c.bf16 %v776, %v775
        %v790 = vpack.c.bf16 %v778, %v777
        %v791 = vpack.c.bf16 %v780, %v779
        %v792 = vpack.c.bf16 %v782, %v781
        %v793 = vpack.c.bf16 %v784, %v783
        %v794 = vpack.c.bf16 %v786, %v785
        %v803 = vunpack.c.l.b16 %v787
        %v804 = vunpack.c.h.b16 %v787
        %v805 = vunpack.c.l.b16 %v788
        %v806 = vunpack.c.h.b16 %v788
        %v807 = vunpack.c.l.b16 %v789
        %v808 = vunpack.c.h.b16 %v789
        %v809 = vunpack.c.l.b16 %v790
        %v810 = vunpack.c.h.b16 %v790
        %v811 = vunpack.c.l.b16 %v791
        %v812 = vunpack.c.h.b16 %v791
        %v813 = vunpack.c.l.b16 %v792
        %v814 = vunpack.c.h.b16 %v792
        %v815 = vunpack.c.l.b16 %v793
        %v816 = vunpack.c.h.b16 %v793
        %v817 = vunpack.c.l.b16 %v794
        %v818 = vunpack.c.h.b16 %v794
        %v819 = vpack.c.b16 %v803, %v803
        %v820 = vpack.c.b16 %v804, %v804
        %v821 = vpack.c.b16 %v805, %v805
        %v822 = vpack.c.b16 %v806, %v806
        %v823 = vpack.c.b16 %v807, %v807
        %v824 = vpack.c.b16 %v808, %v808
        %v825 = vpack.c.b16 %v809, %v809
        %v826 = vpack.c.b16 %v810, %v810
        %v827 = vpack.c.b16 %v811, %v811
        %v828 = vpack.c.b16 %v812, %v812
        %v829 = vpack.c.b16 %v813, %v813
        %v830 = vpack.c.b16 %v814, %v814
        %v831 = vpack.c.b16 %v815, %v815
        %v832 = vpack.c.b16 %v816, %v816
        %v833 = vpack.c.b16 %v817, %v817
        %v834 = vpack.c.b16 %v818, %v818
        %vm835 = vsmask.f32 4368
        %vm836 = vmor %vm511, %vm835
        %v838 = vshrl.u32 %v819, 16
        %v840 = vrot.slane %v838, 7
        %v841 = vshll.u32 %v819, 16
        %v843 = vor.u32 %v840, %v841
        %v844 = vrot.slane %v840, 4
        %v846 = vshrl.u32 %v820, 16
        %v848 = vrot.slane %v846, 7
        %v849 = vshll.u32 %v820, 16
        %v851 = vor.u32 %v848, %v849
        %v852 = vsel %vm836, %v844, %v851
        %v853 = vrot.slane %v848, 4
        %v855 = vshrl.u32 %v821, 16
        %v857 = vrot.slane %v855, 7
        %v858 = vshll.u32 %v821, 16
        %v860 = vor.u32 %v857, %v858
        %v861 = vrot.slane %v857, 4
        %v863 = vshrl.u32 %v822, 16
        %v865 = vrot.slane %v863, 7
        %v866 = vshll.u32 %v822, 16
        %v868 = vor.u32 %v865, %v866
        %v869 = vsel %vm836, %v861, %v868
        %v870 = vrot.slane %v865, 4
        %v872 = vshrl.u32 %v823, 16
        %v874 = vrot.slane %v872, 7
        %v875 = vshll.u32 %v823, 16
        %v877 = vor.u32 %v874, %v875
        %v878 = vrot.slane %v874, 4
        %v880 = vshrl.u32 %v824, 16
        %v882 = vrot.slane %v880, 7
        %v883 = vshll.u32 %v824, 16
        %v885 = vor.u32 %v882, %v883
        %v886 = vsel %vm836, %v878, %v885
        %v887 = vrot.slane %v882, 4
        %v889 = vshrl.u32 %v825, 16
        %v891 = vrot.slane %v889, 7
        %v892 = vshll.u32 %v825, 16
        %v894 = vor.u32 %v891, %v892
        %v895 = vrot.slane %v891, 4
        %v897 = vshrl.u32 %v826, 16
        %v899 = vrot.slane %v897, 7
        %v900 = vshll.u32 %v826, 16
        %v902 = vor.u32 %v899, %v900
        %v903 = vsel %vm836, %v895, %v902
        %v904 = vrot.slane %v899, 4
        %v906 = vshrl.u32 %v827, 16
        %v908 = vrot.slane %v906, 7
        %v909 = vshll.u32 %v827, 16
        %v911 = vor.u32 %v908, %v909
        %v912 = vrot.slane %v908, 4
        %v914 = vshrl.u32 %v828, 16
        %v916 = vrot.slane %v914, 7
        %v917 = vshll.u32 %v828, 16
        %v919 = vor.u32 %v916, %v917
        %v920 = vsel %vm836, %v912, %v919
        %v921 = vrot.slane %v916, 4
        %v923 = vshrl.u32 %v829, 16
        %v925 = vrot.slane %v923, 7
        %v926 = vshll.u32 %v829, 16
        %v928 = vor.u32 %v925, %v926
        %v929 = vrot.slane %v925, 4
        %v931 = vshrl.u32 %v830, 16
        %v933 = vrot.slane %v931, 7
        %v934 = vshll.u32 %v830, 16
        %v936 = vor.u32 %v933, %v934
        %v937 = vsel %vm836, %v929, %v936
        %v938 = vrot.slane %v933, 4
        %v940 = vshrl.u32 %v831, 16
        %v942 = vrot.slane %v940, 7
        %v943 = vshll.u32 %v831, 16
        %v945 = vor.u32 %v942, %v943
        %v946 = vrot.slane %v942, 4
        %v948 = vshrl.u32 %v832, 16
        %v950 = vrot.slane %v948, 7
        %v951 = vshll.u32 %v832, 16
        %v953 = vor.u32 %v950, %v951
        %v954 = vsel %vm836, %v946, %v953
        %v955 = vrot.slane %v950, 4
        %v957 = vshrl.u32 %v833, 16
        %v959 = vrot.slane %v957, 7
        %v960 = vshll.u32 %v833, 16
        %v962 = vor.u32 %v959, %v960
        %v963 = vrot.slane %v959, 4
        %v965 = vshrl.u32 %v834, 16
        %v967 = vrot.slane %v965, 7
        %v968 = vshll.u32 %v834, 16
        %v970 = vor.u32 %v967, %v968
        %v971 = vsel %vm836, %v963, %v970
        %v972 = vrot.slane %v967, 4
        %s997 = scalar_lea.vmem [#allocation2], 12
        %vm998 = vcmask 1043456
        %vm999 = vmand %vm998, %vm543
        %v1000 = vld [vmem:[%s997] sm:$0xf]
        %v1001 = vsel %vm999, %v843, %v1000
        %1002 = vst [vmem:[%s997] sm:$0xf] %v1001
        %1003 = vst [vmem:[%s997 + $0x4] sm:$0xf] %v852
        %v1004 = vld [vmem:[%s997 + $0x8] sm:$0x1]
        %v1005 = vsel %vm512, %v853, %v1004
        %1006 = vst [vmem:[%s997 + $0x8] sm:$0x1] %v1005
        %v1007 = vld [vmem:[%s997 + $0xc] sm:$0xf]
        %v1008 = vsel %vm999, %v860, %v1007
        %1009 = vst [vmem:[%s997 + $0xc] sm:$0xf] %v1008
        %1010 = vst [vmem:[%s997 + $0x10] sm:$0xf] %v869
        %v1011 = vld [vmem:[%s997 + $0x14] sm:$0x1]
        %v1012 = vsel %vm512, %v870, %v1011
        %1013 = vst [vmem:[%s997 + $0x14] sm:$0x1] %v1012
        %v1014 = vld [vmem:[%s997 + $0x18] sm:$0xf]
        %v1015 = vsel %vm999, %v877, %v1014
        %1016 = vst [vmem:[%s997 + $0x18] sm:$0xf] %v1015
        %1017 = vst [vmem:[%s997 + $0x1c] sm:$0xf] %v886
        %v1018 = vld [vmem:[%s997 + $0x20] sm:$0x1]
        %v1019 = vsel %vm512, %v887, %v1018
        %1020 = vst [vmem:[%s997 + $0x20] sm:$0x1] %v1019
        %v1021 = vld [vmem:[%s997 + $0x24] sm:$0xf]
        %v1022 = vsel %vm999, %v894, %v1021
        %1023 = vst [vmem:[%s997 + $0x24] sm:$0xf] %v1022
        %1024 = vst [vmem:[%s997 + $0x28] sm:$0xf] %v903
        %v1025 = vld [vmem:[%s997 + $0x2c] sm:$0x1]
        %v1026 = vsel %vm512, %v904, %v1025
        %1027 = vst [vmem:[%s997 + $0x2c] sm:$0x1] %v1026
        %v1028 = vld [vmem:[%s997 + $0x30] sm:$0xf]
        %v1029 = vsel %vm999, %v911, %v1028
        %1030 = vst [vmem:[%s997 + $0x30] sm:$0xf] %v1029
        %1031 = vst [vmem:[%s997 + $0x34] sm:$0xf] %v920
        %v1032 = vld [vmem:[%s997 + $0x38] sm:$0x1]
        %v1033 = vsel %vm512, %v921, %v1032
        %1034 = vst [vmem:[%s997 + $0x38] sm:$0x1] %v1033
        %v1035 = vld [vmem:[%s997 + $0x3c] sm:$0xf]
        %v1036 = vsel %vm999, %v928, %v1035
        %1037 = vst [vmem:[%s997 + $0x3c] sm:$0xf] %v1036
        %1038 = vst [vmem:[%s997 + $0x40] sm:$0xf] %v937
        %v1039 = vld [vmem:[%s997 + $0x44] sm:$0x1]
        %v1040 = vsel %vm512, %v938, %v1039
        %1041 = vst [vmem:[%s997 + $0x44] sm:$0x1] %v1040
        %v1042 = vld [vmem:[%s997 + $0x48] sm:$0xf]
        %v1043 = vsel %vm999, %v945, %v1042
        %1044 = vst [vmem:[%s997 + $0x48] sm:$0xf] %v1043
        %1045 = vst [vmem:[%s997 + $0x4c] sm:$0xf] %v954
        %v1046 = vld [vmem:[%s997 + $0x50] sm:$0x1]
        %v1047 = vsel %vm512, %v955, %v1046
        %1048 = vst [vmem:[%s997 + $0x50] sm:$0x1] %v1047
        %v1049 = vld [vmem:[%s997 + $0x54] sm:$0xf]
        %v1050 = vsel %vm999, %v962, %v1049
        %1051 = vst [vmem:[%s997 + $0x54] sm:$0xf] %v1050
        %1052 = vst [vmem:[%s997 + $0x58] sm:$0xf] %v971
        %v1053 = vld [vmem:[%s997 + $0x5c] sm:$0x1]
        %v1054 = vsel %vm512, %v972, %v1053
        %1055 = vst [vmem:[%s997 + $0x5c] sm:$0x1] %v1054
        %p1056 = scmp.gt.s32.totalorder %s35, 0
        // Predicated region
        $region73: #{tpu_custom_call.1} parent=55 // pred_check
          %p1057 = pneg %p1056
        $region74: #{tpu_custom_call.1} parent=55 // pred_check_branch
          %1059 = sbr.rel (%p1057) target = $region76
        $region75: #{tpu_custom_call.1} parent=55 // pred_region
          %v1060 = vld [vmem:[%s436] sm:$0xf]
          %v1061 = vld [vmem:[%s436 + $0x4] sm:$0xf]
          %v1064 = vunpack.c.l.b16 %v1060
          %v1065 = vunpack.c.l.b16 %v1061
          %v1066 = vpack.c.b16 %v1065, %v1064
          %v1068 = vsel %vm649, %v1066, 0
          %1070 = vmatprep.subr.bf16.mxu0 0
          %1071 = vmatpush1.bf16.msra.mxu0 0
          %1072 = vmatprep.subr.bf16.mxu0 0
          %1073 = vmatpush1.bf16.msra.mxu0 0
          %1074 = vmatprep.subr.bf16.mxu0 0
          %1075 = vmatpush1.bf16.msra.mxu0 0
          %1076 = vmatprep.subr.bf16.mxu0 0
          %1077 = vmatpush1.bf16.msra.mxu0 0
          %1078 = vmatprep.subr.bf16.mxu0 0
          %1079 = vmatpush1.bf16.msra.mxu0 0
          %1080 = vmatprep.subr.bf16.mxu0 0
          %1081 = vmatpush1.bf16.msra.mxu0 0
          %1082 = vmatprep.subr.bf16.mxu0 0
          %1083 = vmatpush1.bf16.msra.mxu0 %v646
          %1084 = vmatprep.subr.bf16.mxu0 0
          %1085 = vmatpush1.bf16.msra.mxu0 %v645
          %1086 = vmatprep.subr.bf16.mxu0 0
          %1087 = vmatpush2.bf16.msra.mxu0 0
          %1088 = vmatprep.subr.bf16.mxu0 0
          %1089 = vmatpush2.bf16.msra.mxu0 0
          %1090 = vmatprep.subr.bf16.mxu0 0
          %1091 = vmatpush2.bf16.msra.mxu0 0
          %1092 = vmatprep.subr.bf16.mxu0 0
          %1093 = vmatpush2.bf16.msra.mxu0 0
          %1094 = vmatprep.subr.bf16.mxu0 0
          %1095 = vmatpush2.bf16.msra.mxu0 0
          %1096 = vmatprep.subr.bf16.mxu0 0
          %1097 = vmatpush2.bf16.msra.mxu0 0
          %1098 = vmatprep.subr.bf16.mxu0 0
          %1099 = vmatpush2.bf16.msra.mxu0 0
          %1100 = vmatprep.subr.bf16.mxu0 0
          %1101 = vmatpush2.bf16.msra.mxu0 0
          %1102 = vmatprep.mubr.bf16.mxu0 0
          %1103 = vmatmul.mubr.bf16.gmra.mxu0 %v1068
          %v1104 = vpop.f32.mrf.mxu0
          %v1105 = vadd.f32 %v595, %v1104
          %v1106 = vpop.f32.mrf.mxu0
          %v1107 = vpop.f32.mrf.mxu0
          %v1108 = vadd.f32 %v595, %v1107
          %v1109 = vpop.f32.mrf.mxu0
          %1110 = vdwg.mxu0
          %v1111 = vmax.f32 %v1105, 0.0
          %v1112 = vmax.f32 %v1108, 0.0
          %v1113 = vpack.c.bf16 %v1112, %v1111
          %v1115 = vunpack.c.l.b16 %v1113
          %v1116 = vunpack.c.h.b16 %v1113
          %v1117 = vpack.c.b16 %v1115, %v1115
          %v1118 = vpack.c.b16 %v1116, %v1116
          %v1120 = vshrl.u32 %v1117, 16
          %v1122 = vrot.slane %v1120, 7
          %v1123 = vshll.u32 %v1117, 16
          %v1125 = vor.u32 %v1122, %v1123
          %v1126 = vrot.slane %v1122, 4
          %v1128 = vshrl.u32 %v1118, 16
          %v1130 = vrot.slane %v1128, 7
          %v1131 = vshll.u32 %v1118, 16
          %v1133 = vor.u32 %v1130, %v1131
          %v1134 = vsel %vm836, %v1126, %v1133
          %v1135 = vrot.slane %v1130, 4
          %v1139 = vld [vmem:[#allocation2] sm:$0xf]
          %v1140 = vsel %vm999, %v1125, %v1139
          %1141 = vst [vmem:[#allocation2] sm:$0xf] %v1140
          %1142 = vst [vmem:[#allocation2 + $0x4] sm:$0xf] %v1134
          %v1143 = vld [vmem:[#allocation2 + $0x8] sm:$0x1]
          %v1144 = vsel %vm512, %v1135, %v1143
          %1145 = vst [vmem:[#allocation2 + $0x8] sm:$0x1] %v1144
        $region76: #{tpu_custom_call.1} parent=55 // pred_fallthru
          _
        %p1146 = scmp.eq.s32.totalorder %s35, 0
        // Predicated region
        $region77: #{tpu_custom_call.1} parent=55 // pred_check
          %p1147 = pneg %p1146
        $region78: #{tpu_custom_call.1} parent=55 // pred_check_branch
          %1149 = sbr.rel (%p1147) target = $region80
        $region79: #{tpu_custom_call.1} parent=55 // pred_region
          %v1150 = vld [vmem:[#allocation2] sm:$0xf]
          %v1151 = vsel %vm999, 0, %v1150
          %1152 = vst [vmem:[#allocation2] sm:$0xf] %v1151
          %1153 = vst [vmem:[#allocation2 + $0x4] sm:$0xf] 0
          %v1154 = vld [vmem:[#allocation2 + $0x8] sm:$0x1]
          %v1155 = vsel %vm512, 0, %v1154
          %1156 = vst [vmem:[#allocation2 + $0x8] sm:$0x1] %v1155
        $region80: #{tpu_custom_call.1} parent=55 // pred_fallthru
          _
        %p1157 = scmp.lt.s32.totalorder %s35, 1
        // Predicated region
        $region81: #{tpu_custom_call.1} parent=55 // pred_check
          %p1158 = pneg %p1157
        $region82: #{tpu_custom_call.1} parent=55 // pred_check_branch
          %1160 = sbr.rel (%p1158) target = $region84
        $region83: #{tpu_custom_call.1} parent=55 // pred_region
          %v1161 = vld [vmem:[%s445] sm:$0xf]
          %v1162 = vld [vmem:[%s445 + $0x4] sm:$0xf]
          %v1165 = vunpack.c.l.b16 %v1161
          %v1166 = vunpack.c.l.b16 %v1162
          %v1167 = vpack.c.b16 %v1166, %v1165
          %v1169 = vsel %vm649, %v1167, 0
          %1171 = vmatprep.subr.bf16.mxu0 0
          %1172 = vmatpush1.bf16.msra.mxu0 0
          %1173 = vmatprep.subr.bf16.mxu0 0
          %1174 = vmatpush1.bf16.msra.mxu0 0
          %1175 = vmatprep.subr.bf16.mxu0 0
          %1176 = vmatpush1.bf16.msra.mxu0 0
          %1177 = vmatprep.subr.bf16.mxu0 0
          %1178 = vmatpush1.bf16.msra.mxu0 0
          %1179 = vmatprep.subr.bf16.mxu0 0
          %1180 = vmatpush1.bf16.msra.mxu0 0
          %1181 = vmatprep.subr.bf16.mxu0 0
          %1182 = vmatpush1.bf16.msra.mxu0 0
          %1183 = vmatprep.subr.bf16.mxu0 0
          %1184 = vmatpush1.bf16.msra.mxu0 %v646
          %1185 = vmatprep.subr.bf16.mxu0 0
          %1186 = vmatpush1.bf16.msra.mxu0 %v645
          %1187 = vmatprep.subr.bf16.mxu0 0
          %1188 = vmatpush2.bf16.msra.mxu0 0
          %1189 = vmatprep.subr.bf16.mxu0 0
          %1190 = vmatpush2.bf16.msra.mxu0 0
          %1191 = vmatprep.subr.bf16.mxu0 0
          %1192 = vmatpush2.bf16.msra.mxu0 0
          %1193 = vmatprep.subr.bf16.mxu0 0
          %1194 = vmatpush2.bf16.msra.mxu0 0
          %1195 = vmatprep.subr.bf16.mxu0 0
          %1196 = vmatpush2.bf16.msra.mxu0 0
          %1197 = vmatprep.subr.bf16.mxu0 0
          %1198 = vmatpush2.bf16.msra.mxu0 0
          %1199 = vmatprep.subr.bf16.mxu0 0
          %1200 = vmatpush2.bf16.msra.mxu0 0
          %1201 = vmatprep.subr.bf16.mxu0 0
          %1202 = vmatpush2.bf16.msra.mxu0 0
          %1203 = vmatprep.mubr.bf16.mxu0 0
          %1204 = vmatmul.mubr.bf16.gmra.mxu0 %v1169
          %v1205 = vpop.f32.mrf.mxu0
          %v1206 = vadd.f32 %v595, %v1205
          %v1207 = vpop.f32.mrf.mxu0
          %v1208 = vpop.f32.mrf.mxu0
          %v1209 = vadd.f32 %v595, %v1208
          %v1210 = vpop.f32.mrf.mxu0
          %1211 = vdwg.mxu0
          %v1212 = vmax.f32 %v1206, 0.0
          %v1213 = vmax.f32 %v1209, 0.0
          %v1214 = vpack.c.bf16 %v1213, %v1212
          %v1216 = vunpack.c.l.b16 %v1214
          %v1217 = vunpack.c.h.b16 %v1214
          %v1218 = vpack.c.b16 %v1216, %v1216
          %v1219 = vpack.c.b16 %v1217, %v1217
          %v1221 = vshrl.u32 %v1218, 16
          %v1223 = vrot.slane %v1221, 7
          %v1224 = vshll.u32 %v1218, 16
          %v1226 = vor.u32 %v1223, %v1224
          %v1227 = vrot.slane %v1223, 4
          %v1229 = vshrl.u32 %v1219, 16
          %v1231 = vrot.slane %v1229, 7
          %v1232 = vshll.u32 %v1219, 16
          %v1234 = vor.u32 %v1231, %v1232
          %v1235 = vsel %vm836, %v1227, %v1234
          %v1236 = vrot.slane %v1231, 4
          %s1240 = scalar_lea.vmem [#allocation2], 108
          %v1241 = vld [vmem:[%s1240] sm:$0xf]
          %v1242 = vsel %vm999, %v1226, %v1241
          %1243 = vst [vmem:[%s1240] sm:$0xf] %v1242
          %1244 = vst [vmem:[%s1240 + $0x4] sm:$0xf] %v1235
          %v1245 = vld [vmem:[%s1240 + $0x8] sm:$0x1]
          %v1246 = vsel %vm512, %v1236, %v1245
          %1247 = vst [vmem:[%s1240 + $0x8] sm:$0x1] %v1246
        $region84: #{tpu_custom_call.1} parent=55 // pred_fallthru
          _
        %p1248 = scmp.eq.s32.totalorder %s35, 1
        // Predicated region
        $region85: #{tpu_custom_call.1} parent=55 // pred_check
          %p1249 = pneg %p1248
        $region86: #{tpu_custom_call.1} parent=55 // pred_check_branch
          %1251 = sbr.rel (%p1249) target = $region88
        $region87: #{tpu_custom_call.1} parent=55 // pred_region
          %s1252 = scalar_lea.vmem [#allocation2], 108
          %v1253 = vld [vmem:[%s1252] sm:$0xf]
          %v1254 = vsel %vm999, 0, %v1253
          %1255 = vst [vmem:[%s1252] sm:$0xf] %v1254
          %1256 = vst [vmem:[%s1252 + $0x4] sm:$0xf] 0
          %v1257 = vld [vmem:[%s1252 + $0x8] sm:$0x1]
          %v1258 = vsel %vm512, 0, %v1257
          %1259 = vst [vmem:[%s1252 + $0x8] sm:$0x1] %v1258
        $region88: #{tpu_custom_call.1} parent=55 // pred_fallthru
          _
        %v1260 = vld [vmem:[#allocation2] sm:$0xf]
        %v1261 = vld [vmem:[#allocation2 + $0x4] sm:$0xf]
        %v1262 = vld [vmem:[#allocation2 + $0x8] sm:$0x1]
        %v1263 = vld [vmem:[#allocation2 + $0xc] sm:$0xf]
        %v1264 = vld [vmem:[#allocation2 + $0x10] sm:$0xf]
        %v1265 = vld [vmem:[#allocation2 + $0x14] sm:$0x1]
        %v1266 = vld [vmem:[#allocation2 + $0x18] sm:$0xf]
        %v1267 = vld [vmem:[#allocation2 + $0x1c] sm:$0xf]
        %v1268 = vld [vmem:[#allocation2 + $0x20] sm:$0x1]
        %v1269 = vld [vmem:[#allocation2 + $0x24] sm:$0xf]
        %v1270 = vld [vmem:[#allocation2 + $0x28] sm:$0xf]
        %v1271 = vld [vmem:[#allocation2 + $0x2c] sm:$0x1]
        %v1272 = vld [vmem:[#allocation2 + $0x30] sm:$0xf]
        %v1273 = vld [vmem:[#allocation2 + $0x34] sm:$0xf]
        %v1274 = vld [vmem:[#allocation2 + $0x38] sm:$0x1]
        %v1275 = vld [vmem:[#allocation2 + $0x3c] sm:$0xf]
        %v1276 = vld [vmem:[#allocation2 + $0x40] sm:$0xf]
        %v1277 = vld [vmem:[#allocation2 + $0x44] sm:$0x1]
        %v1278 = vld [vmem:[#allocation2 + $0x48] sm:$0xf]
        %v1279 = vld [vmem:[#allocation2 + $0x4c] sm:$0xf]
        %v1280 = vld [vmem:[#allocation2 + $0x50] sm:$0x1]
        %v1281 = vld [vmem:[#allocation2 + $0x54] sm:$0xf]
        %v1282 = vld [vmem:[#allocation2 + $0x58] sm:$0xf]
        %v1283 = vld [vmem:[#allocation2 + $0x5c] sm:$0x1]
        %v1300 = vunpack.c.l.b16 %v1260
        %v1301 = vunpack.c.l.b16 %v1261
        %v1302 = vunpack.c.l.b16 %v1263
        %v1303 = vunpack.c.l.b16 %v1264
        %v1304 = vunpack.c.l.b16 %v1266
        %v1305 = vunpack.c.l.b16 %v1267
        %v1306 = vunpack.c.l.b16 %v1269
        %v1307 = vunpack.c.l.b16 %v1270
        %v1308 = vunpack.c.l.b16 %v1272
        %v1309 = vunpack.c.l.b16 %v1273
        %v1310 = vunpack.c.l.b16 %v1275
        %v1311 = vunpack.c.l.b16 %v1276
        %v1312 = vunpack.c.l.b16 %v1278
        %v1313 = vunpack.c.l.b16 %v1279
        %v1314 = vunpack.c.l.b16 %v1281
        %v1315 = vunpack.c.l.b16 %v1282
        %v1316 = vpack.c.b16 %v1301, %v1300
        %v1317 = vpack.c.b16 %v1303, %v1302
        %v1318 = vpack.c.b16 %v1305, %v1304
        %v1319 = vpack.c.b16 %v1307, %v1306
        %v1320 = vpack.c.b16 %v1309, %v1308
        %v1321 = vpack.c.b16 %v1311, %v1310
        %v1322 = vpack.c.b16 %v1313, %v1312
        %v1323 = vpack.c.b16 %v1315, %v1314
        %v1340 = vunpack.c.l.b16 %v1262
        %v1341 = vunpack.c.l.b16 %v1265
        %v1342 = vunpack.c.l.b16 %v1268
        %v1343 = vunpack.c.l.b16 %v1271
        %v1344 = vunpack.c.l.b16 %v1274
        %v1345 = vunpack.c.l.b16 %v1277
        %v1346 = vunpack.c.l.b16 %v1280
        %v1347 = vunpack.c.l.b16 %v1283
        %v1348 = vpack.c.b16 %v1340, %v1340
        %v1349 = vpack.c.b16 %v1341, %v1341
        %v1350 = vpack.c.b16 %v1342, %v1342
        %v1351 = vpack.c.b16 %v1343, %v1343
        %v1352 = vpack.c.b16 %v1344, %v1344
        %v1353 = vpack.c.b16 %v1345, %v1345
        %v1354 = vpack.c.b16 %v1346, %v1346
        %v1355 = vpack.c.b16 %v1347, %v1347
        %vm1356 = vsmask.f32 7424
        %v1358 = vshrl.u32 %v1316, 16
        %v1360 = vshll.u32 %v1316, 16
        %v1362 = vrot.slane %v1360, 1
        %v1363 = vor.u32 %v1358, %v1362
        %v1365 = vshll.u32 %v1348, 16
        %v1367 = vrot.slane %v1365, 1
        %v1368 = vsel %vm1356, %v1363, %v1367
        %v1370 = vshrl.u32 %v1317, 16
        %v1372 = vshll.u32 %v1317, 16
        %v1374 = vrot.slane %v1372, 1
        %v1375 = vor.u32 %v1370, %v1374
        %v1377 = vshll.u32 %v1349, 16
        %v1379 = vrot.slane %v1377, 1
        %v1380 = vsel %vm1356, %v1375, %v1379
        %v1382 = vshrl.u32 %v1318, 16
        %v1384 = vshll.u32 %v1318, 16
        %v1386 = vrot.slane %v1384, 1
        %v1387 = vor.u32 %v1382, %v1386
        %v1389 = vshll.u32 %v1350, 16
        %v1391 = vrot.slane %v1389, 1
        %v1392 = vsel %vm1356, %v1387, %v1391
        %v1394 = vshrl.u32 %v1319, 16
        %v1396 = vshll.u32 %v1319, 16
        %v1398 = vrot.slane %v1396, 1
        %v1399 = vor.u32 %v1394, %v1398
        %v1401 = vshll.u32 %v1351, 16
        %v1403 = vrot.slane %v1401, 1
        %v1404 = vsel %vm1356, %v1399, %v1403
        %v1406 = vshrl.u32 %v1320, 16
        %v1408 = vshll.u32 %v1320, 16
        %v1410 = vrot.slane %v1408, 1
        %v1411 = vor.u32 %v1406, %v1410
        %v1413 = vshll.u32 %v1352, 16
        %v1415 = vrot.slane %v1413, 1
        %v1416 = vsel %vm1356, %v1411, %v1415
        %v1418 = vshrl.u32 %v1321, 16
        %v1420 = vshll.u32 %v1321, 16
        %v1422 = vrot.slane %v1420, 1
        %v1423 = vor.u32 %v1418, %v1422
        %v1425 = vshll.u32 %v1353, 16
        %v1427 = vrot.slane %v1425, 1
        %v1428 = vsel %vm1356, %v1423, %v1427
        %v1430 = vshrl.u32 %v1322, 16
        %v1432 = vshll.u32 %v1322, 16
        %v1434 = vrot.slane %v1432, 1
        %v1435 = vor.u32 %v1430, %v1434
        %v1437 = vshll.u32 %v1354, 16
        %v1439 = vrot.slane %v1437, 1
        %v1440 = vsel %vm1356, %v1435, %v1439
        %v1442 = vshrl.u32 %v1323, 16
        %v1444 = vshll.u32 %v1323, 16
        %v1446 = vrot.slane %v1444, 1
        %v1447 = vor.u32 %v1442, %v1446
        %v1449 = vshll.u32 %v1355, 16
        %v1451 = vrot.slane %v1449, 1
        %v1452 = vsel %vm1356, %v1447, %v1451
        %vm1461 = vcmask 1046528
        %v1462 = vrot.slane %v1316, 1
        %v1463 = vrot.slane %v1348, 1
        %v1464 = vsel %vm1461, %v1462, %v1463
        %v1465 = vrot.slane %v1317, 1
        %v1466 = vrot.slane %v1349, 1
        %v1467 = vsel %vm1461, %v1465, %v1466
        %v1468 = vrot.slane %v1318, 1
        %v1469 = vrot.slane %v1350, 1
        %v1470 = vsel %vm1461, %v1468, %v1469
        %v1471 = vrot.slane %v1319, 1
        %v1472 = vrot.slane %v1351, 1
        %v1473 = vsel %vm1461, %v1471, %v1472
        %v1474 = vrot.slane %v1320, 1
        %v1475 = vrot.slane %v1352, 1
        %v1476 = vsel %vm1461, %v1474, %v1475
        %v1477 = vrot.slane %v1321, 1
        %v1478 = vrot.slane %v1353, 1
        %v1479 = vsel %vm1461, %v1477, %v1478
        %v1480 = vrot.slane %v1322, 1
        %v1481 = vrot.slane %v1354, 1
        %v1482 = vsel %vm1461, %v1480, %v1481
        %v1483 = vrot.slane %v1323, 1
        %v1484 = vrot.slane %v1355, 1
        %v1485 = vsel %vm1461, %v1483, %v1484
        %v1494 = vld [vmem:[#allocation9] sm:$0xf]
        %v1495 = vld [vmem:[#allocation9 + $0x4] sm:$0xf]
        %v1496 = vld [vmem:[#allocation9 + $0x8] sm:$0xf]
        %v1497 = vld [vmem:[#allocation9 + $0xc] sm:$0xf]
        %v1498 = vld [vmem:[#allocation9 + $0x10] sm:$0xf]
        %v1499 = vld [vmem:[#allocation9 + $0x14] sm:$0xf]
        %v1500 = vld [vmem:[#allocation9 + $0x18] sm:$0xf]
        %v1501 = vld [vmem:[#allocation9 + $0x1c] sm:$0xf]
        %v1502 = vld [vmem:[#allocation9 + $0x20] sm:$0xf]
        %v1503 = vld [vmem:[#allocation9 + $0x24] sm:$0xf]
        %v1504 = vld [vmem:[#allocation9 + $0x28] sm:$0xf]
        %v1505 = vld [vmem:[#allocation9 + $0x2c] sm:$0xf]
        %v1506 = vld [vmem:[#allocation9 + $0x30] sm:$0xf]
        %v1507 = vld [vmem:[#allocation9 + $0x34] sm:$0xf]
        %v1508 = vld [vmem:[#allocation9 + $0x38] sm:$0xf]
        %v1509 = vld [vmem:[#allocation9 + $0x3c] sm:$0xf]
        %v1510 = vld [vmem:[#allocation9 + $0x40] sm:$0xf]
        %v1511 = vld [vmem:[#allocation9 + $0x44] sm:$0xf]
        %v1512 = vld [vmem:[#allocation9 + $0x48] sm:$0xf]
        %v1513 = vld [vmem:[#allocation9 + $0x4c] sm:$0xf]
        %v1514 = vld [vmem:[#allocation9 + $0x50] sm:$0xf]
        %v1515 = vld [vmem:[#allocation9 + $0x54] sm:$0xf]
        %v1516 = vld [vmem:[#allocation9 + $0x58] sm:$0xf]
        %v1517 = vld [vmem:[#allocation9 + $0x5c] sm:$0xf]
        %v1518 = vld [vmem:[#allocation9 + $0x60] sm:$0xf]
        %v1519 = vld [vmem:[#allocation9 + $0x64] sm:$0xf]
        %v1520 = vld [vmem:[#allocation9 + $0x68] sm:$0xf]
        %v1521 = vld [vmem:[#allocation9 + $0x6c] sm:$0xf]
        %v1522 = vld [vmem:[#allocation9 + $0x70] sm:$0xf]
        %v1523 = vld [vmem:[#allocation9 + $0x74] sm:$0xf]
        %v1524 = vld [vmem:[#allocation9 + $0x78] sm:$0xf]
        %v1525 = vld [vmem:[#allocation9 + $0x7c] sm:$0xf]
        %v1526 = vld [vmem:[#allocation9 + $0x80] sm:$0xf]
        %v1527 = vld [vmem:[#allocation9 + $0x84] sm:$0xf]
        %v1528 = vld [vmem:[#allocation9 + $0x88] sm:$0xf]
        %v1529 = vld [vmem:[#allocation9 + $0x8c] sm:$0xf]
        %v1530 = vld [vmem:[#allocation9 + $0x90] sm:$0xf]
        %v1531 = vld [vmem:[#allocation9 + $0x94] sm:$0xf]
        %v1532 = vld [vmem:[#allocation9 + $0x98] sm:$0xf]
        %v1533 = vld [vmem:[#allocation9 + $0x9c] sm:$0xf]
        %v1534 = vld [vmem:[#allocation9 + $0xa0] sm:$0xf]
        %v1535 = vld [vmem:[#allocation9 + $0xa4] sm:$0xf]
        %v1536 = vld [vmem:[#allocation9 + $0xa8] sm:$0xf]
        %v1537 = vld [vmem:[#allocation9 + $0xac] sm:$0xf]
        %v1538 = vld [vmem:[#allocation9 + $0xb0] sm:$0xf]
        %v1539 = vld [vmem:[#allocation9 + $0xb4] sm:$0xf]
        %v1540 = vld [vmem:[#allocation9 + $0xb8] sm:$0xf]
        %v1541 = vld [vmem:[#allocation9 + $0xbc] sm:$0xf]
        %v1542 = vld [vmem:[%s997] sm:$0xf]
        %v1543 = vld [vmem:[%s997 + $0x4] sm:$0xf]
        %v1544 = vld [vmem:[%s997 + $0x8] sm:$0x1]
        %v1545 = vld [vmem:[%s997 + $0xc] sm:$0xf]
        %v1546 = vld [vmem:[%s997 + $0x10] sm:$0xf]
        %v1547 = vld [vmem:[%s997 + $0x14] sm:$0x1]
        %v1548 = vld [vmem:[%s997 + $0x18] sm:$0xf]
        %v1549 = vld [vmem:[%s997 + $0x1c] sm:$0xf]
        %v1550 = vld [vmem:[%s997 + $0x20] sm:$0x1]
        %v1551 = vld [vmem:[%s997 + $0x24] sm:$0xf]
        %v1552 = vld [vmem:[%s997 + $0x28] sm:$0xf]
        %v1553 = vld [vmem:[%s997 + $0x2c] sm:$0x1]
        %v1554 = vld [vmem:[%s997 + $0x30] sm:$0xf]
        %v1555 = vld [vmem:[%s997 + $0x34] sm:$0xf]
        %v1556 = vld [vmem:[%s997 + $0x38] sm:$0x1]
        %v1557 = vld [vmem:[%s997 + $0x3c] sm:$0xf]
        %v1558 = vld [vmem:[%s997 + $0x40] sm:$0xf]
        %v1559 = vld [vmem:[%s997 + $0x44] sm:$0x1]
        %v1560 = vld [vmem:[%s997 + $0x48] sm:$0xf]
        %v1561 = vld [vmem:[%s997 + $0x4c] sm:$0xf]
        %v1562 = vld [vmem:[%s997 + $0x50] sm:$0x1]
        %v1563 = vld [vmem:[%s997 + $0x54] sm:$0xf]
        %v1564 = vld [vmem:[%s997 + $0x58] sm:$0xf]
        %v1565 = vld [vmem:[%s997 + $0x5c] sm:$0x1]
        %v1582 = vunpack.c.l.b16 %v1542
        %v1583 = vunpack.c.l.b16 %v1543
        %v1584 = vunpack.c.l.b16 %v1545
        %v1585 = vunpack.c.l.b16 %v1546
        %v1586 = vunpack.c.l.b16 %v1548
        %v1587 = vunpack.c.l.b16 %v1549
        %v1588 = vunpack.c.l.b16 %v1551
        %v1589 = vunpack.c.l.b16 %v1552
        %v1590 = vunpack.c.l.b16 %v1554
        %v1591 = vunpack.c.l.b16 %v1555
        %v1592 = vunpack.c.l.b16 %v1557
        %v1593 = vunpack.c.l.b16 %v1558
        %v1594 = vunpack.c.l.b16 %v1560
        %v1595 = vunpack.c.l.b16 %v1561
        %v1596 = vunpack.c.l.b16 %v1563
        %v1597 = vunpack.c.l.b16 %v1564
        %v1598 = vpack.c.b16 %v1583, %v1582
        %v1599 = vpack.c.b16 %v1585, %v1584
        %v1600 = vpack.c.b16 %v1587, %v1586
        %v1601 = vpack.c.b16 %v1589, %v1588
        %v1602 = vpack.c.b16 %v1591, %v1590
        %v1603 = vpack.c.b16 %v1593, %v1592
        %v1604 = vpack.c.b16 %v1595, %v1594
        %v1605 = vpack.c.b16 %v1597, %v1596
        %v1622 = vunpack.c.l.b16 %v1544
        %v1623 = vunpack.c.l.b16 %v1547
        %v1624 = vunpack.c.l.b16 %v1550
        %v1625 = vunpack.c.l.b16 %v1553
        %v1626 = vunpack.c.l.b16 %v1556
        %v1627 = vunpack.c.l.b16 %v1559
        %v1628 = vunpack.c.l.b16 %v1562
        %v1629 = vunpack.c.l.b16 %v1565
        %v1630 = vpack.c.b16 %v1622, %v1622
        %v1631 = vpack.c.b16 %v1623, %v1623
        %v1632 = vpack.c.b16 %v1624, %v1624
        %v1633 = vpack.c.b16 %v1625, %v1625
        %v1634 = vpack.c.b16 %v1626, %v1626
        %v1635 = vpack.c.b16 %v1627, %v1627
        %v1636 = vpack.c.b16 %v1628, %v1628
        %v1637 = vpack.c.b16 %v1629, %v1629
        %v1639 = vshrl.u32 %v1598, 16
        %v1641 = vshll.u32 %v1598, 16
        %v1643 = vrot.slane %v1641, 1
        %v1644 = vor.u32 %v1639, %v1643
        %v1646 = vshll.u32 %v1630, 16
        %v1648 = vrot.slane %v1646, 1
        %v1649 = vsel %vm1356, %v1644, %v1648
        %v1651 = vshrl.u32 %v1599, 16
        %v1653 = vshll.u32 %v1599, 16
        %v1655 = vrot.slane %v1653, 1
        %v1656 = vor.u32 %v1651, %v1655
        %v1658 = vshll.u32 %v1631, 16
        %v1660 = vrot.slane %v1658, 1
        %v1661 = vsel %vm1356, %v1656, %v1660
        %v1663 = vshrl.u32 %v1600, 16
        %v1665 = vshll.u32 %v1600, 16
        %v1667 = vrot.slane %v1665, 1
        %v1668 = vor.u32 %v1663, %v1667
        %v1670 = vshll.u32 %v1632, 16
        %v1672 = vrot.slane %v1670, 1
        %v1673 = vsel %vm1356, %v1668, %v1672
        %v1675 = vshrl.u32 %v1601, 16
        %v1677 = vshll.u32 %v1601, 16
        %v1679 = vrot.slane %v1677, 1
        %v1680 = vor.u32 %v1675, %v1679
        %v1682 = vshll.u32 %v1633, 16
        %v1684 = vrot.slane %v1682, 1
        %v1685 = vsel %vm1356, %v1680, %v1684
        %v1687 = vshrl.u32 %v1602, 16
        %v1689 = vshll.u32 %v1602, 16
        %v1691 = vrot.slane %v1689, 1
        %v1692 = vor.u32 %v1687, %v1691
        %v1694 = vshll.u32 %v1634, 16
        %v1696 = vrot.slane %v1694, 1
        %v1697 = vsel %vm1356, %v1692, %v1696
        %v1699 = vshrl.u32 %v1603, 16
        %v1701 = vshll.u32 %v1603, 16
        %v1703 = vrot.slane %v1701, 1
        %v1704 = vor.u32 %v1699, %v1703
        %v1706 = vshll.u32 %v1635, 16
        %v1708 = vrot.slane %v1706, 1
        %v1709 = vsel %vm1356, %v1704, %v1708
        %v1711 = vshrl.u32 %v1604, 16
        %v1713 = vshll.u32 %v1604, 16
        %v1715 = vrot.slane %v1713, 1
        %v1716 = vor.u32 %v1711, %v1715
        %v1718 = vshll.u32 %v1636, 16
        %v1720 = vrot.slane %v1718, 1
        %v1721 = vsel %vm1356, %v1716, %v1720
        %v1723 = vshrl.u32 %v1605, 16
        %v1725 = vshll.u32 %v1605, 16
        %v1727 = vrot.slane %v1725, 1
        %v1728 = vor.u32 %v1723, %v1727
        %v1730 = vshll.u32 %v1637, 16
        %v1732 = vrot.slane %v1730, 1
        %v1733 = vsel %vm1356, %v1728, %v1732
        %v1742 = vrot.slane %v1598, 1
        %v1743 = vrot.slane %v1630, 1
        %v1744 = vsel %vm1461, %v1742, %v1743
        %v1745 = vrot.slane %v1599, 1
        %v1746 = vrot.slane %v1631, 1
        %v1747 = vsel %vm1461, %v1745, %v1746
        %v1748 = vrot.slane %v1600, 1
        %v1749 = vrot.slane %v1632, 1
        %v1750 = vsel %vm1461, %v1748, %v1749
        %v1751 = vrot.slane %v1601, 1
        %v1752 = vrot.slane %v1633, 1
        %v1753 = vsel %vm1461, %v1751, %v1752
        %v1754 = vrot.slane %v1602, 1
        %v1755 = vrot.slane %v1634, 1
        %v1756 = vsel %vm1461, %v1754, %v1755
        %v1757 = vrot.slane %v1603, 1
        %v1758 = vrot.slane %v1635, 1
        %v1759 = vsel %vm1461, %v1757, %v1758
        %v1760 = vrot.slane %v1604, 1
        %v1761 = vrot.slane %v1636, 1
        %v1762 = vsel %vm1461, %v1760, %v1761
        %v1763 = vrot.slane %v1605, 1
        %v1764 = vrot.slane %v1637, 1
        %v1765 = vsel %vm1461, %v1763, %v1764
        %s1774 = scalar_lea.vmem [#allocation9], 192
        %v1775 = vld [vmem:[%s1774] sm:$0xf]
        %v1776 = vld [vmem:[%s1774 + $0x4] sm:$0xf]
        %v1777 = vld [vmem:[%s1774 + $0x8] sm:$0xf]
        %v1778 = vld [vmem:[%s1774 + $0xc] sm:$0xf]
        %v1779 = vld [vmem:[%s1774 + $0x10] sm:$0xf]
        %v1780 = vld [vmem:[%s1774 + $0x14] sm:$0xf]
        %v1781 = vld [vmem:[%s1774 + $0x18] sm:$0xf]
        %v1782 = vld [vmem:[%s1774 + $0x1c] sm:$0xf]
        %v1783 = vld [vmem:[%s1774 + $0x20] sm:$0xf]
        %v1784 = vld [vmem:[%s1774 + $0x24] sm:$0xf]
        %v1785 = vld [vmem:[%s1774 + $0x28] sm:$0xf]
        %v1786 = vld [vmem:[%s1774 + $0x2c] sm:$0xf]
        %v1787 = vld [vmem:[%s1774 + $0x30] sm:$0xf]
        %v1788 = vld [vmem:[%s1774 + $0x34] sm:$0xf]
        %v1789 = vld [vmem:[%s1774 + $0x38] sm:$0xf]
        %v1790 = vld [vmem:[%s1774 + $0x3c] sm:$0xf]
        %v1791 = vld [vmem:[%s1774 + $0x40] sm:$0xf]
        %v1792 = vld [vmem:[%s1774 + $0x44] sm:$0xf]
        %v1793 = vld [vmem:[%s1774 + $0x48] sm:$0xf]
        %v1794 = vld [vmem:[%s1774 + $0x4c] sm:$0xf]
        %v1795 = vld [vmem:[%s1774 + $0x50] sm:$0xf]
        %v1796 = vld [vmem:[%s1774 + $0x54] sm:$0xf]
        %v1797 = vld [vmem:[%s1774 + $0x58] sm:$0xf]
        %v1798 = vld [vmem:[%s1774 + $0x5c] sm:$0xf]
        %v1799 = vld [vmem:[%s1774 + $0x60] sm:$0xf]
        %v1800 = vld [vmem:[%s1774 + $0x64] sm:$0xf]
        %v1801 = vld [vmem:[%s1774 + $0x68] sm:$0xf]
        %v1802 = vld [vmem:[%s1774 + $0x6c] sm:$0xf]
        %v1803 = vld [vmem:[%s1774 + $0x70] sm:$0xf]
        %v1804 = vld [vmem:[%s1774 + $0x74] sm:$0xf]
        %v1805 = vld [vmem:[%s1774 + $0x78] sm:$0xf]
        %v1806 = vld [vmem:[%s1774 + $0x7c] sm:$0xf]
        %v1807 = vld [vmem:[%s1774 + $0x80] sm:$0xf]
        %v1808 = vld [vmem:[%s1774 + $0x84] sm:$0xf]
        %v1809 = vld [vmem:[%s1774 + $0x88] sm:$0xf]
        %v1810 = vld [vmem:[%s1774 + $0x8c] sm:$0xf]
        %v1811 = vld [vmem:[%s1774 + $0x90] sm:$0xf]
        %v1812 = vld [vmem:[%s1774 + $0x94] sm:$0xf]
        %v1813 = vld [vmem:[%s1774 + $0x98] sm:$0xf]
        %v1814 = vld [vmem:[%s1774 + $0x9c] sm:$0xf]
        %v1815 = vld [vmem:[%s1774 + $0xa0] sm:$0xf]
        %v1816 = vld [vmem:[%s1774 + $0xa4] sm:$0xf]
        %v1817 = vld [vmem:[%s1774 + $0xa8] sm:$0xf]
        %v1818 = vld [vmem:[%s1774 + $0xac] sm:$0xf]
        %v1819 = vld [vmem:[%s1774 + $0xb0] sm:$0xf]
        %v1820 = vld [vmem:[%s1774 + $0xb4] sm:$0xf]
        %v1821 = vld [vmem:[%s1774 + $0xb8] sm:$0xf]
        %v1822 = vld [vmem:[%s1774 + $0xbc] sm:$0xf]
        %v1871 = vunpack.c.l.b16 %v1775
        %v1872 = vunpack.c.l.b16 %v1776
        %v1873 = vunpack.c.l.b16 %v1777
        %v1874 = vunpack.c.l.b16 %v1778
        %v1875 = vunpack.c.l.b16 %v1779
        %v1876 = vunpack.c.l.b16 %v1780
        %v1877 = vunpack.c.l.b16 %v1781
        %v1878 = vunpack.c.l.b16 %v1782
        %v1879 = vunpack.c.l.b16 %v1783
        %v1880 = vunpack.c.l.b16 %v1784
        %v1881 = vunpack.c.l.b16 %v1785
        %v1882 = vunpack.c.l.b16 %v1786
        %v1883 = vunpack.c.l.b16 %v1787
        %v1884 = vunpack.c.l.b16 %v1788
        %v1885 = vunpack.c.l.b16 %v1789
        %v1886 = vunpack.c.l.b16 %v1790
        %v1887 = vunpack.c.l.b16 %v1791
        %v1888 = vunpack.c.l.b16 %v1792
        %v1889 = vunpack.c.l.b16 %v1793
        %v1890 = vunpack.c.l.b16 %v1794
        %v1891 = vunpack.c.l.b16 %v1795
        %v1892 = vunpack.c.l.b16 %v1796
        %v1893 = vunpack.c.l.b16 %v1797
        %v1894 = vunpack.c.l.b16 %v1798
        %v1895 = vunpack.c.l.b16 %v1799
        %v1896 = vunpack.c.l.b16 %v1800
        %v1897 = vunpack.c.l.b16 %v1801
        %v1898 = vunpack.c.l.b16 %v1802
        %v1899 = vunpack.c.l.b16 %v1803
        %v1900 = vunpack.c.l.b16 %v1804
        %v1901 = vunpack.c.l.b16 %v1805
        %v1902 = vunpack.c.l.b16 %v1806
        %v1903 = vunpack.c.l.b16 %v1807
        %v1904 = vunpack.c.l.b16 %v1808
        %v1905 = vunpack.c.l.b16 %v1809
        %v1906 = vunpack.c.l.b16 %v1810
        %v1907 = vunpack.c.l.b16 %v1811
        %v1908 = vunpack.c.l.b16 %v1812
        %v1909 = vunpack.c.l.b16 %v1813
        %v1910 = vunpack.c.l.b16 %v1814
        %v1911 = vunpack.c.l.b16 %v1815
        %v1912 = vunpack.c.l.b16 %v1816
        %v1913 = vunpack.c.l.b16 %v1817
        %v1914 = vunpack.c.l.b16 %v1818
        %v1915 = vunpack.c.l.b16 %v1819
        %v1916 = vunpack.c.l.b16 %v1820
        %v1917 = vunpack.c.l.b16 %v1821
        %v1918 = vunpack.c.l.b16 %v1822
        %v1919 = vpack.c.b16 %v1872, %v1871
        %v1920 = vpack.c.b16 %v1874, %v1873
        %v1921 = vpack.c.b16 %v1876, %v1875
        %v1922 = vpack.c.b16 %v1878, %v1877
        %v1923 = vpack.c.b16 %v1880, %v1879
        %v1924 = vpack.c.b16 %v1882, %v1881
        %v1925 = vpack.c.b16 %v1884, %v1883
        %v1926 = vpack.c.b16 %v1886, %v1885
        %v1927 = vpack.c.b16 %v1888, %v1887
        %v1928 = vpack.c.b16 %v1890, %v1889
        %v1929 = vpack.c.b16 %v1892, %v1891
        %v1930 = vpack.c.b16 %v1894, %v1893
        %v1931 = vpack.c.b16 %v1896, %v1895
        %v1932 = vpack.c.b16 %v1898, %v1897
        %v1933 = vpack.c.b16 %v1900, %v1899
        %v1934 = vpack.c.b16 %v1902, %v1901
        %v1935 = vpack.c.b16 %v1904, %v1903
        %v1936 = vpack.c.b16 %v1906, %v1905
        %v1937 = vpack.c.b16 %v1908, %v1907
        %v1938 = vpack.c.b16 %v1910, %v1909
        %v1939 = vpack.c.b16 %v1912, %v1911
        %v1940 = vpack.c.b16 %v1914, %v1913
        %v1941 = vpack.c.b16 %v1916, %v1915
        %v1942 = vpack.c.b16 %v1918, %v1917
        %1967 = vmatprep.subr.bf16.mxu0 0
        %1968 = vmatpush1.bf16.msra.mxu0 %v1926
        %1969 = vmatprep.subr.bf16.mxu0 0
        %1970 = vmatpush1.bf16.msra.mxu0 %v1925
        %1971 = vmatprep.subr.bf16.mxu0 0
        %1972 = vmatpush1.bf16.msra.mxu0 %v1924
        %1973 = vmatprep.subr.bf16.mxu0 0
        %1974 = vmatpush1.bf16.msra.mxu0 %v1923
        %1975 = vmatprep.subr.bf16.mxu0 0
        %1976 = vmatpush1.bf16.msra.mxu0 %v1922
        %1977 = vmatprep.subr.bf16.mxu0 0
        %1978 = vmatpush1.bf16.msra.mxu0 %v1921
        %1979 = vmatprep.subr.bf16.mxu0 0
        %1980 = vmatpush1.bf16.msra.mxu0 %v1920
        %1981 = vmatprep.subr.bf16.mxu0 0
        %1982 = vmatpush1.bf16.msra.mxu0 %v1919
        %1983 = vmatprep.subr.bf16.mxu0 0
        %1984 = vmatpush2.bf16.msra.mxu0 %v1934
        %1985 = vmatprep.subr.bf16.mxu0 0
        %1986 = vmatpush2.bf16.msra.mxu0 %v1933
        %1987 = vmatprep.subr.bf16.mxu0 0
        %1988 = vmatpush2.bf16.msra.mxu0 %v1932
        %1989 = vmatprep.subr.bf16.mxu0 0
        %1990 = vmatpush2.bf16.msra.mxu0 %v1931
        %1991 = vmatprep.subr.bf16.mxu0 0
        %1992 = vmatpush2.bf16.msra.mxu0 %v1930
        %1993 = vmatprep.subr.bf16.mxu0 0
        %1994 = vmatpush2.bf16.msra.mxu0 %v1929
        %1995 = vmatprep.subr.bf16.mxu0 0
        %1996 = vmatpush2.bf16.msra.mxu0 %v1928
        %1997 = vmatprep.subr.bf16.mxu0 0
        %1998 = vmatpush2.bf16.msra.mxu0 %v1927
        %1999 = vmatprep.mubr.bf16.mxu0 %v1649
        %2000 = vmatmul.mubr.bf16.gmra.mxu0 %v1598
        %v2001 = vpop.f32.mrf.mxu0
        %v2002 = vadd.f32 0.0, %v2001
        %v2003 = vpop.f32.mrf.mxu0
        %v2004 = vpop.f32.mrf.mxu0
        %v2005 = vadd.f32 0.0, %v2004
        %v2006 = vpop.f32.mrf.mxu0
        %2007 = vmatprep.mubr.bf16.mxu0 %v1661
        %2008 = vmatmul.mubr.bf16.gmra.mxu0 %v1599
        %v2009 = vpop.f32.mrf.mxu0
        %v2010 = vadd.f32 0.0, %v2009
        %v2011 = vpop.f32.mrf.mxu0
        %v2012 = vpop.f32.mrf.mxu0
        %v2013 = vadd.f32 0.0, %v2012
        %v2014 = vpop.f32.mrf.mxu0
        %2015 = vmatprep.mubr.bf16.mxu0 %v1673
        %2016 = vmatmul.mubr.bf16.gmra.mxu0 %v1600
        %v2017 = vpop.f32.mrf.mxu0
        %v2018 = vadd.f32 0.0, %v2017
        %v2019 = vpop.f32.mrf.mxu0
        %v2020 = vpop.f32.mrf.mxu0
        %v2021 = vadd.f32 0.0, %v2020
        %v2022 = vpop.f32.mrf.mxu0
        %2023 = vmatprep.mubr.bf16.mxu0 %v1685
        %2024 = vmatmul.mubr.bf16.gmra.mxu0 %v1601
        %v2025 = vpop.f32.mrf.mxu0
        %v2026 = vadd.f32 0.0, %v2025
        %v2027 = vpop.f32.mrf.mxu0
        %v2028 = vpop.f32.mrf.mxu0
        %v2029 = vadd.f32 0.0, %v2028
        %v2030 = vpop.f32.mrf.mxu0
        %2031 = vmatprep.mubr.bf16.mxu0 %v1697
        %2032 = vmatmul.mubr.bf16.gmra.mxu0 %v1602
        %v2033 = vpop.f32.mrf.mxu0
        %v2034 = vadd.f32 0.0, %v2033
        %v2035 = vpop.f32.mrf.mxu0
        %v2036 = vpop.f32.mrf.mxu0
        %v2037 = vadd.f32 0.0, %v2036
        %v2038 = vpop.f32.mrf.mxu0
        %2039 = vmatprep.mubr.bf16.mxu0 %v1709
        %2040 = vmatmul.mubr.bf16.gmra.mxu0 %v1603
        %v2041 = vpop.f32.mrf.mxu0
        %v2042 = vadd.f32 0.0, %v2041
        %v2043 = vpop.f32.mrf.mxu0
        %v2044 = vpop.f32.mrf.mxu0
        %v2045 = vadd.f32 0.0, %v2044
        %v2046 = vpop.f32.mrf.mxu0
        %2047 = vmatprep.mubr.bf16.mxu0 %v1721
        %2048 = vmatmul.mubr.bf16.gmra.mxu0 %v1604
        %v2049 = vpop.f32.mrf.mxu0
        %v2050 = vadd.f32 0.0, %v2049
        %v2051 = vpop.f32.mrf.mxu0
        %v2052 = vpop.f32.mrf.mxu0
        %v2053 = vadd.f32 0.0, %v2052
        %v2054 = vpop.f32.mrf.mxu0
        %2055 = vmatprep.mubr.bf16.mxu0 %v1733
        %2056 = vmatmul.mubr.bf16.gmra.mxu0 %v1605
        %v2057 = vpop.f32.mrf.mxu0
        %v2058 = vadd.f32 0.0, %v2057
        %v2059 = vpop.f32.mrf.mxu0
        %v2060 = vpop.f32.mrf.mxu0
        %v2061 = vadd.f32 0.0, %v2060
        %v2062 = vpop.f32.mrf.mxu0
        %2063 = vdwg.mxu0
        %2064 = vmatprep.subr.bf16.mxu0 0
        %2065 = vmatpush1.bf16.msra.mxu0 %v1942
        %2066 = vmatprep.subr.bf16.mxu0 0
        %2067 = vmatpush1.bf16.msra.mxu0 %v1941
        %2068 = vmatprep.subr.bf16.mxu0 0
        %2069 = vmatpush1.bf16.msra.mxu0 %v1940
        %2070 = vmatprep.subr.bf16.mxu0 0
        %2071 = vmatpush1.bf16.msra.mxu0 %v1939
        %2072 = vmatprep.subr.bf16.mxu0 0
        %2073 = vmatpush1.bf16.msra.mxu0 %v1938
        %2074 = vmatprep.subr.bf16.mxu0 0
        %2075 = vmatpush1.bf16.msra.mxu0 %v1937
        %2076 = vmatprep.subr.bf16.mxu0 0
        %2077 = vmatpush1.bf16.msra.mxu0 %v1936
        %2078 = vmatprep.subr.bf16.mxu0 0
        %2079 = vmatpush1.bf16.msra.mxu0 %v1935
        %2080 = vmatprep.subr.bf16.mxu0 0
        %2081 = vmatpush2.bf16.msra.mxu0 0
        %2082 = vmatprep.subr.bf16.mxu0 0
        %2083 = vmatpush2.bf16.msra.mxu0 0
        %2084 = vmatprep.subr.bf16.mxu0 0
        %2085 = vmatpush2.bf16.msra.mxu0 0
        %2086 = vmatprep.subr.bf16.mxu0 0
        %2087 = vmatpush2.bf16.msra.mxu0 0
        %2088 = vmatprep.subr.bf16.mxu0 0
        %2089 = vmatpush2.bf16.msra.mxu0 0
        %2090 = vmatprep.subr.bf16.mxu0 0
        %2091 = vmatpush2.bf16.msra.mxu0 0
        %2092 = vmatprep.subr.bf16.mxu0 0
        %2093 = vmatpush2.bf16.msra.mxu0 0
        %2094 = vmatprep.subr.bf16.mxu0 0
        %2095 = vmatpush2.bf16.msra.mxu0 0
        %2096 = vmatprep.mubr.bf16.mxu0 0
        %2097 = vmatmul.mubr.bf16.gmra.mxu0 %v1744
        %v2098 = vpop.f32.mrf.mxu0
        %v2099 = vadd.f32 %v2002, %v2098
        %v2100 = vpop.f32.mrf.mxu0
        %v2101 = vpop.f32.mrf.mxu0
        %v2102 = vadd.f32 %v2005, %v2101
        %v2103 = vpop.f32.mrf.mxu0
        %2104 = vmatprep.mubr.bf16.mxu0 0
        %2105 = vmatmul.mubr.bf16.gmra.mxu0 %v1747
        %v2106 = vpop.f32.mrf.mxu0
        %v2107 = vadd.f32 %v2010, %v2106
        %v2108 = vpop.f32.mrf.mxu0
        %v2109 = vpop.f32.mrf.mxu0
        %v2110 = vadd.f32 %v2013, %v2109
        %v2111 = vpop.f32.mrf.mxu0
        %2112 = vmatprep.mubr.bf16.mxu0 0
        %2113 = vmatmul.mubr.bf16.gmra.mxu0 %v1750
        %v2114 = vpop.f32.mrf.mxu0
        %v2115 = vadd.f32 %v2018, %v2114
        %v2116 = vpop.f32.mrf.mxu0
        %v2117 = vpop.f32.mrf.mxu0
        %v2118 = vadd.f32 %v2021, %v2117
        %v2119 = vpop.f32.mrf.mxu0
        %2120 = vmatprep.mubr.bf16.mxu0 0
        %2121 = vmatmul.mubr.bf16.gmra.mxu0 %v1753
        %v2122 = vpop.f32.mrf.mxu0
        %v2123 = vadd.f32 %v2026, %v2122
        %v2124 = vpop.f32.mrf.mxu0
        %v2125 = vpop.f32.mrf.mxu0
        %v2126 = vadd.f32 %v2029, %v2125
        %v2127 = vpop.f32.mrf.mxu0
        %2128 = vmatprep.mubr.bf16.mxu0 0
        %2129 = vmatmul.mubr.bf16.gmra.mxu0 %v1756
        %v2130 = vpop.f32.mrf.mxu0
        %v2131 = vadd.f32 %v2034, %v2130
        %v2132 = vpop.f32.mrf.mxu0
        %v2133 = vpop.f32.mrf.mxu0
        %v2134 = vadd.f32 %v2037, %v2133
        %v2135 = vpop.f32.mrf.mxu0
        %2136 = vmatprep.mubr.bf16.mxu0 0
        %2137 = vmatmul.mubr.bf16.gmra.mxu0 %v1759
        %v2138 = vpop.f32.mrf.mxu0
        %v2139 = vadd.f32 %v2042, %v2138
        %v2140 = vpop.f32.mrf.mxu0
        %v2141 = vpop.f32.mrf.mxu0
        %v2142 = vadd.f32 %v2045, %v2141
        %v2143 = vpop.f32.mrf.mxu0
        %2144 = vmatprep.mubr.bf16.mxu0 0
        %2145 = vmatmul.mubr.bf16.gmra.mxu0 %v1762
        %v2146 = vpop.f32.mrf.mxu0
        %v2147 = vadd.f32 %v2050, %v2146
        %v2148 = vpop.f32.mrf.mxu0
        %v2149 = vpop.f32.mrf.mxu0
        %v2150 = vadd.f32 %v2053, %v2149
        %v2151 = vpop.f32.mrf.mxu0
        %2152 = vmatprep.mubr.bf16.mxu0 0
        %2153 = vmatmul.mubr.bf16.gmra.mxu0 %v1765
        %v2154 = vpop.f32.mrf.mxu0
        %v2155 = vadd.f32 %v2058, %v2154
        %v2156 = vpop.f32.mrf.mxu0
        %v2157 = vpop.f32.mrf.mxu0
        %v2158 = vadd.f32 %v2061, %v2157
        %v2159 = vpop.f32.mrf.mxu0
        %2160 = vdwg.mxu0
        %v2209 = vunpack.c.l.b16 %v1494
        %v2210 = vunpack.c.l.b16 %v1495
        %v2211 = vunpack.c.l.b16 %v1496
        %v2212 = vunpack.c.l.b16 %v1497
        %v2213 = vunpack.c.l.b16 %v1498
        %v2214 = vunpack.c.l.b16 %v1499
        %v2215 = vunpack.c.l.b16 %v1500
        %v2216 = vunpack.c.l.b16 %v1501
        %v2217 = vunpack.c.l.b16 %v1502
        %v2218 = vunpack.c.l.b16 %v1503
        %v2219 = vunpack.c.l.b16 %v1504
        %v2220 = vunpack.c.l.b16 %v1505
        %v2221 = vunpack.c.l.b16 %v1506
        %v2222 = vunpack.c.l.b16 %v1507
        %v2223 = vunpack.c.l.b16 %v1508
        %v2224 = vunpack.c.l.b16 %v1509
        %v2225 = vunpack.c.l.b16 %v1510
        %v2226 = vunpack.c.l.b16 %v1511
        %v2227 = vunpack.c.l.b16 %v1512
        %v2228 = vunpack.c.l.b16 %v1513
        %v2229 = vunpack.c.l.b16 %v1514
        %v2230 = vunpack.c.l.b16 %v1515
        %v2231 = vunpack.c.l.b16 %v1516
        %v2232 = vunpack.c.l.b16 %v1517
        %v2233 = vunpack.c.l.b16 %v1518
        %v2234 = vunpack.c.l.b16 %v1519
        %v2235 = vunpack.c.l.b16 %v1520
        %v2236 = vunpack.c.l.b16 %v1521
        %v2237 = vunpack.c.l.b16 %v1522
        %v2238 = vunpack.c.l.b16 %v1523
        %v2239 = vunpack.c.l.b16 %v1524
        %v2240 = vunpack.c.l.b16 %v1525
        %v2241 = vunpack.c.l.b16 %v1526
        %v2242 = vunpack.c.l.b16 %v1527
        %v2243 = vunpack.c.l.b16 %v1528
        %v2244 = vunpack.c.l.b16 %v1529
        %v2245 = vunpack.c.l.b16 %v1530
        %v2246 = vunpack.c.l.b16 %v1531
        %v2247 = vunpack.c.l.b16 %v1532
        %v2248 = vunpack.c.l.b16 %v1533
        %v2249 = vunpack.c.l.b16 %v1534
        %v2250 = vunpack.c.l.b16 %v1535
        %v2251 = vunpack.c.l.b16 %v1536
        %v2252 = vunpack.c.l.b16 %v1537
        %v2253 = vunpack.c.l.b16 %v1538
        %v2254 = vunpack.c.l.b16 %v1539
        %v2255 = vunpack.c.l.b16 %v1540
        %v2256 = vunpack.c.l.b16 %v1541
        %v2257 = vpack.c.b16 %v2210, %v2209
        %v2258 = vpack.c.b16 %v2212, %v2211
        %v2259 = vpack.c.b16 %v2214, %v2213
        %v2260 = vpack.c.b16 %v2216, %v2215
        %v2261 = vpack.c.b16 %v2218, %v2217
        %v2262 = vpack.c.b16 %v2220, %v2219
        %v2263 = vpack.c.b16 %v2222, %v2221
        %v2264 = vpack.c.b16 %v2224, %v2223
        %v2265 = vpack.c.b16 %v2226, %v2225
        %v2266 = vpack.c.b16 %v2228, %v2227
        %v2267 = vpack.c.b16 %v2230, %v2229
        %v2268 = vpack.c.b16 %v2232, %v2231
        %v2269 = vpack.c.b16 %v2234, %v2233
        %v2270 = vpack.c.b16 %v2236, %v2235
        %v2271 = vpack.c.b16 %v2238, %v2237
        %v2272 = vpack.c.b16 %v2240, %v2239
        %v2273 = vpack.c.b16 %v2242, %v2241
        %v2274 = vpack.c.b16 %v2244, %v2243
        %v2275 = vpack.c.b16 %v2246, %v2245
        %v2276 = vpack.c.b16 %v2248, %v2247
        %v2277 = vpack.c.b16 %v2250, %v2249
        %v2278 = vpack.c.b16 %v2252, %v2251
        %v2279 = vpack.c.b16 %v2254, %v2253
        %v2280 = vpack.c.b16 %v2256, %v2255
        %2305 = vmatprep.subr.bf16.mxu0 0
        %2306 = vmatpush1.bf16.msra.mxu0 %v2264
        %2307 = vmatprep.subr.bf16.mxu0 0
        %2308 = vmatpush1.bf16.msra.mxu0 %v2263
        %2309 = vmatprep.subr.bf16.mxu0 0
        %2310 = vmatpush1.bf16.msra.mxu0 %v2262
        %2311 = vmatprep.subr.bf16.mxu0 0
        %2312 = vmatpush1.bf16.msra.mxu0 %v2261
        %2313 = vmatprep.subr.bf16.mxu0 0
        %2314 = vmatpush1.bf16.msra.mxu0 %v2260
        %2315 = vmatprep.subr.bf16.mxu0 0
        %2316 = vmatpush1.bf16.msra.mxu0 %v2259
        %2317 = vmatprep.subr.bf16.mxu0 0
        %2318 = vmatpush1.bf16.msra.mxu0 %v2258
        %2319 = vmatprep.subr.bf16.mxu0 0
        %2320 = vmatpush1.bf16.msra.mxu0 %v2257
        %2321 = vmatprep.subr.bf16.mxu0 0
        %2322 = vmatpush2.bf16.msra.mxu0 %v2272
        %2323 = vmatprep.subr.bf16.mxu0 0
        %2324 = vmatpush2.bf16.msra.mxu0 %v2271
        %2325 = vmatprep.subr.bf16.mxu0 0
        %2326 = vmatpush2.bf16.msra.mxu0 %v2270
        %2327 = vmatprep.subr.bf16.mxu0 0
        %2328 = vmatpush2.bf16.msra.mxu0 %v2269
        %2329 = vmatprep.subr.bf16.mxu0 0
        %2330 = vmatpush2.bf16.msra.mxu0 %v2268
        %2331 = vmatprep.subr.bf16.mxu0 0
        %2332 = vmatpush2.bf16.msra.mxu0 %v2267
        %2333 = vmatprep.subr.bf16.mxu0 0
        %2334 = vmatpush2.bf16.msra.mxu0 %v2266
        %2335 = vmatprep.subr.bf16.mxu0 0
        %2336 = vmatpush2.bf16.msra.mxu0 %v2265
        %2337 = vmatprep.mubr.bf16.mxu0 %v1368
        %2338 = vmatmul.mubr.bf16.gmra.mxu0 %v1316
        %v2339 = vpop.f32.mrf.mxu0
        %v2340 = vadd.f32 %v2099, %v2339
        %v2341 = vpop.f32.mrf.mxu0
        %v2342 = vpop.f32.mrf.mxu0
        %v2343 = vadd.f32 %v2102, %v2342
        %v2344 = vpop.f32.mrf.mxu0
        %2345 = vmatprep.mubr.bf16.mxu0 %v1380
        %2346 = vmatmul.mubr.bf16.gmra.mxu0 %v1317
        %v2347 = vpop.f32.mrf.mxu0
        %v2348 = vadd.f32 %v2107, %v2347
        %v2349 = vpop.f32.mrf.mxu0
        %v2350 = vpop.f32.mrf.mxu0
        %v2351 = vadd.f32 %v2110, %v2350
        %v2352 = vpop.f32.mrf.mxu0
        %2353 = vmatprep.mubr.bf16.mxu0 %v1392
        %2354 = vmatmul.mubr.bf16.gmra.mxu0 %v1318
        %v2355 = vpop.f32.mrf.mxu0
        %v2356 = vadd.f32 %v2115, %v2355
        %v2357 = vpop.f32.mrf.mxu0
        %v2358 = vpop.f32.mrf.mxu0
        %v2359 = vadd.f32 %v2118, %v2358
        %v2360 = vpop.f32.mrf.mxu0
        %2361 = vmatprep.mubr.bf16.mxu0 %v1404
        %2362 = vmatmul.mubr.bf16.gmra.mxu0 %v1319
        %v2363 = vpop.f32.mrf.mxu0
        %v2364 = vadd.f32 %v2123, %v2363
        %v2365 = vpop.f32.mrf.mxu0
        %v2366 = vpop.f32.mrf.mxu0
        %v2367 = vadd.f32 %v2126, %v2366
        %v2368 = vpop.f32.mrf.mxu0
        %2369 = vmatprep.mubr.bf16.mxu0 %v1416
        %2370 = vmatmul.mubr.bf16.gmra.mxu0 %v1320
        %v2371 = vpop.f32.mrf.mxu0
        %v2372 = vadd.f32 %v2131, %v2371
        %v2373 = vpop.f32.mrf.mxu0
        %v2374 = vpop.f32.mrf.mxu0
        %v2375 = vadd.f32 %v2134, %v2374
        %v2376 = vpop.f32.mrf.mxu0
        %2377 = vmatprep.mubr.bf16.mxu0 %v1428
        %2378 = vmatmul.mubr.bf16.gmra.mxu0 %v1321
        %v2379 = vpop.f32.mrf.mxu0
        %v2380 = vadd.f32 %v2139, %v2379
        %v2381 = vpop.f32.mrf.mxu0
        %v2382 = vpop.f32.mrf.mxu0
        %v2383 = vadd.f32 %v2142, %v2382
        %v2384 = vpop.f32.mrf.mxu0
        %2385 = vmatprep.mubr.bf16.mxu0 %v1440
        %2386 = vmatmul.mubr.bf16.gmra.mxu0 %v1322
        %v2387 = vpop.f32.mrf.mxu0
        %v2388 = vadd.f32 %v2147, %v2387
        %v2389 = vpop.f32.mrf.mxu0
        %v2390 = vpop.f32.mrf.mxu0
        %v2391 = vadd.f32 %v2150, %v2390
        %v2392 = vpop.f32.mrf.mxu0
        %2393 = vmatprep.mubr.bf16.mxu0 %v1452
        %2394 = vmatmul.mubr.bf16.gmra.mxu0 %v1323
        %v2395 = vpop.f32.mrf.mxu0
        %v2396 = vadd.f32 %v2155, %v2395
        %v2397 = vpop.f32.mrf.mxu0
        %v2398 = vpop.f32.mrf.mxu0
        %v2399 = vadd.f32 %v2158, %v2398
        %v2400 = vpop.f32.mrf.mxu0
        %2401 = vdwg.mxu0
        %2402 = vmatprep.subr.bf16.mxu0 0
        %2403 = vmatpush1.bf16.msra.mxu0 %v2280
        %2404 = vmatprep.subr.bf16.mxu0 0
        %2405 = vmatpush1.bf16.msra.mxu0 %v2279
        %2406 = vmatprep.subr.bf16.mxu0 0
        %2407 = vmatpush1.bf16.msra.mxu0 %v2278
        %2408 = vmatprep.subr.bf16.mxu0 0
        %2409 = vmatpush1.bf16.msra.mxu0 %v2277
        %2410 = vmatprep.subr.bf16.mxu0 0
        %2411 = vmatpush1.bf16.msra.mxu0 %v2276
        %2412 = vmatprep.subr.bf16.mxu0 0
        %2413 = vmatpush1.bf16.msra.mxu0 %v2275
        %2414 = vmatprep.subr.bf16.mxu0 0
        %2415 = vmatpush1.bf16.msra.mxu0 %v2274
        %2416 = vmatprep.subr.bf16.mxu0 0
        %2417 = vmatpush1.bf16.msra.mxu0 %v2273
        %2418 = vmatprep.subr.bf16.mxu0 0
        %2419 = vmatpush2.bf16.msra.mxu0 0
        %2420 = vmatprep.subr.bf16.mxu0 0
        %2421 = vmatpush2.bf16.msra.mxu0 0
        %2422 = vmatprep.subr.bf16.mxu0 0
        %2423 = vmatpush2.bf16.msra.mxu0 0
        %2424 = vmatprep.subr.bf16.mxu0 0
        %2425 = vmatpush2.bf16.msra.mxu0 0
        %2426 = vmatprep.subr.bf16.mxu0 0
        %2427 = vmatpush2.bf16.msra.mxu0 0
        %2428 = vmatprep.subr.bf16.mxu0 0
        %2429 = vmatpush2.bf16.msra.mxu0 0
        %2430 = vmatprep.subr.bf16.mxu0 0
        %2431 = vmatpush2.bf16.msra.mxu0 0
        %2432 = vmatprep.subr.bf16.mxu0 0
        %2433 = vmatpush2.bf16.msra.mxu0 0
        %2434 = vmatprep.mubr.bf16.mxu0 0
        %2435 = vmatmul.mubr.bf16.gmra.mxu0 %v1464
        %v2436 = vpop.f32.mrf.mxu0
        %v2437 = vadd.f32 %v2340, %v2436
        %v2438 = vpop.f32.mrf.mxu0
        %v2439 = vpop.f32.mrf.mxu0
        %v2440 = vadd.f32 %v2343, %v2439
        %v2441 = vpop.f32.mrf.mxu0
        %2442 = vmatprep.mubr.bf16.mxu0 0
        %2443 = vmatmul.mubr.bf16.gmra.mxu0 %v1467
        %v2444 = vpop.f32.mrf.mxu0
        %v2445 = vadd.f32 %v2348, %v2444
        %v2446 = vpop.f32.mrf.mxu0
        %v2447 = vpop.f32.mrf.mxu0
        %v2448 = vadd.f32 %v2351, %v2447
        %v2449 = vpop.f32.mrf.mxu0
        %2450 = vmatprep.mubr.bf16.mxu0 0
        %2451 = vmatmul.mubr.bf16.gmra.mxu0 %v1470
        %v2452 = vpop.f32.mrf.mxu0
        %v2453 = vadd.f32 %v2356, %v2452
        %v2454 = vpop.f32.mrf.mxu0
        %v2455 = vpop.f32.mrf.mxu0
        %v2456 = vadd.f32 %v2359, %v2455
        %v2457 = vpop.f32.mrf.mxu0
        %2458 = vmatprep.mubr.bf16.mxu0 0
        %2459 = vmatmul.mubr.bf16.gmra.mxu0 %v1473
        %v2460 = vpop.f32.mrf.mxu0
        %v2461 = vadd.f32 %v2364, %v2460
        %v2462 = vpop.f32.mrf.mxu0
        %v2463 = vpop.f32.mrf.mxu0
        %v2464 = vadd.f32 %v2367, %v2463
        %v2465 = vpop.f32.mrf.mxu0
        %2466 = vmatprep.mubr.bf16.mxu0 0
        %2467 = vmatmul.mubr.bf16.gmra.mxu0 %v1476
        %v2468 = vpop.f32.mrf.mxu0
        %v2469 = vadd.f32 %v2372, %v2468
        %v2470 = vpop.f32.mrf.mxu0
        %v2471 = vpop.f32.mrf.mxu0
        %v2472 = vadd.f32 %v2375, %v2471
        %v2473 = vpop.f32.mrf.mxu0
        %2474 = vmatprep.mubr.bf16.mxu0 0
        %2475 = vmatmul.mubr.bf16.gmra.mxu0 %v1479
        %v2476 = vpop.f32.mrf.mxu0
        %v2477 = vadd.f32 %v2380, %v2476
        %v2478 = vpop.f32.mrf.mxu0
        %v2479 = vpop.f32.mrf.mxu0
        %v2480 = vadd.f32 %v2383, %v2479
        %v2481 = vpop.f32.mrf.mxu0
        %2482 = vmatprep.mubr.bf16.mxu0 0
        %2483 = vmatmul.mubr.bf16.gmra.mxu0 %v1482
        %v2484 = vpop.f32.mrf.mxu0
        %v2485 = vadd.f32 %v2388, %v2484
        %v2486 = vpop.f32.mrf.mxu0
        %v2487 = vpop.f32.mrf.mxu0
        %v2488 = vadd.f32 %v2391, %v2487
        %v2489 = vpop.f32.mrf.mxu0
        %2490 = vmatprep.mubr.bf16.mxu0 0
        %2491 = vmatmul.mubr.bf16.gmra.mxu0 %v1485
        %v2492 = vpop.f32.mrf.mxu0
        %v2493 = vadd.f32 %v2396, %v2492
        %v2494 = vpop.f32.mrf.mxu0
        %v2495 = vpop.f32.mrf.mxu0
        %v2496 = vadd.f32 %v2399, %v2495
        %v2497 = vpop.f32.mrf.mxu0
        %2498 = vdwg.mxu0
        %s2499 = scalar_lea.vmem [#allocation2], 24
        %v2500 = vld [vmem:[%s2499] sm:$0xf]
        %v2501 = vld [vmem:[%s2499 + $0x4] sm:$0xf]
        %v2502 = vld [vmem:[%s2499 + $0x8] sm:$0x1]
        %v2503 = vld [vmem:[%s2499 + $0xc] sm:$0xf]
        %v2504 = vld [vmem:[%s2499 + $0x10] sm:$0xf]
        %v2505 = vld [vmem:[%s2499 + $0x14] sm:$0x1]
        %v2506 = vld [vmem:[%s2499 + $0x18] sm:$0xf]
        %v2507 = vld [vmem:[%s2499 + $0x1c] sm:$0xf]
        %v2508 = vld [vmem:[%s2499 + $0x20] sm:$0x1]
        %v2509 = vld [vmem:[%s2499 + $0x24] sm:$0xf]
        %v2510 = vld [vmem:[%s2499 + $0x28] sm:$0xf]
        %v2511 = vld [vmem:[%s2499 + $0x2c] sm:$0x1]
        %v2512 = vld [vmem:[%s2499 + $0x30] sm:$0xf]
        %v2513 = vld [vmem:[%s2499 + $0x34] sm:$0xf]
        %v2514 = vld [vmem:[%s2499 + $0x38] sm:$0x1]
        %v2515 = vld [vmem:[%s2499 + $0x3c] sm:$0xf]
        %v2516 = vld [vmem:[%s2499 + $0x40] sm:$0xf]
        %v2517 = vld [vmem:[%s2499 + $0x44] sm:$0x1]
        %v2518 = vld [vmem:[%s2499 + $0x48] sm:$0xf]
        %v2519 = vld [vmem:[%s2499 + $0x4c] sm:$0xf]
        %v2520 = vld [vmem:[%s2499 + $0x50] sm:$0x1]
        %v2521 = vld [vmem:[%s2499 + $0x54] sm:$0xf]
        %v2522 = vld [vmem:[%s2499 + $0x58] sm:$0xf]
        %v2523 = vld [vmem:[%s2499 + $0x5c] sm:$0x1]
        %v2540 = vunpack.c.l.b16 %v2500
        %v2541 = vunpack.c.l.b16 %v2501
        %v2542 = vunpack.c.l.b16 %v2503
        %v2543 = vunpack.c.l.b16 %v2504
        %v2544 = vunpack.c.l.b16 %v2506
        %v2545 = vunpack.c.l.b16 %v2507
        %v2546 = vunpack.c.l.b16 %v2509
        %v2547 = vunpack.c.l.b16 %v2510
        %v2548 = vunpack.c.l.b16 %v2512
        %v2549 = vunpack.c.l.b16 %v2513
        %v2550 = vunpack.c.l.b16 %v2515
        %v2551 = vunpack.c.l.b16 %v2516
        %v2552 = vunpack.c.l.b16 %v2518
        %v2553 = vunpack.c.l.b16 %v2519
        %v2554 = vunpack.c.l.b16 %v2521
        %v2555 = vunpack.c.l.b16 %v2522
        %v2556 = vpack.c.b16 %v2541, %v2540
        %v2557 = vpack.c.b16 %v2543, %v2542
        %v2558 = vpack.c.b16 %v2545, %v2544
        %v2559 = vpack.c.b16 %v2547, %v2546
        %v2560 = vpack.c.b16 %v2549, %v2548
        %v2561 = vpack.c.b16 %v2551, %v2550
        %v2562 = vpack.c.b16 %v2553, %v2552
        %v2563 = vpack.c.b16 %v2555, %v2554
        %v2580 = vunpack.c.l.b16 %v2502
        %v2581 = vunpack.c.l.b16 %v2505
        %v2582 = vunpack.c.l.b16 %v2508
        %v2583 = vunpack.c.l.b16 %v2511
        %v2584 = vunpack.c.l.b16 %v2514
        %v2585 = vunpack.c.l.b16 %v2517
        %v2586 = vunpack.c.l.b16 %v2520
        %v2587 = vunpack.c.l.b16 %v2523
        %v2588 = vpack.c.b16 %v2580, %v2580
        %v2589 = vpack.c.b16 %v2581, %v2581
        %v2590 = vpack.c.b16 %v2582, %v2582
        %v2591 = vpack.c.b16 %v2583, %v2583
        %v2592 = vpack.c.b16 %v2584, %v2584
        %v2593 = vpack.c.b16 %v2585, %v2585
        %v2594 = vpack.c.b16 %v2586, %v2586
        %v2595 = vpack.c.b16 %v2587, %v2587
        %v2597 = vshrl.u32 %v2556, 16
        %v2599 = vshll.u32 %v2556, 16
        %v2601 = vrot.slane %v2599, 1
        %v2602 = vor.u32 %v2597, %v2601
        %v2604 = vshll.u32 %v2588, 16
        %v2606 = vrot.slane %v2604, 1
        %v2607 = vsel %vm1356, %v2602, %v2606
        %v2609 = vshrl.u32 %v2557, 16
        %v2611 = vshll.u32 %v2557, 16
        %v2613 = vrot.slane %v2611, 1
        %v2614 = vor.u32 %v2609, %v2613
        %v2616 = vshll.u32 %v2589, 16
        %v2618 = vrot.slane %v2616, 1
        %v2619 = vsel %vm1356, %v2614, %v2618
        %v2621 = vshrl.u32 %v2558, 16
        %v2623 = vshll.u32 %v2558, 16
        %v2625 = vrot.slane %v2623, 1
        %v2626 = vor.u32 %v2621, %v2625
        %v2628 = vshll.u32 %v2590, 16
        %v2630 = vrot.slane %v2628, 1
        %v2631 = vsel %vm1356, %v2626, %v2630
        %v2633 = vshrl.u32 %v2559, 16
        %v2635 = vshll.u32 %v2559, 16
        %v2637 = vrot.slane %v2635, 1
        %v2638 = vor.u32 %v2633, %v2637
        %v2640 = vshll.u32 %v2591, 16
        %v2642 = vrot.slane %v2640, 1
        %v2643 = vsel %vm1356, %v2638, %v2642
        %v2645 = vshrl.u32 %v2560, 16
        %v2647 = vshll.u32 %v2560, 16
        %v2649 = vrot.slane %v2647, 1
        %v2650 = vor.u32 %v2645, %v2649
        %v2652 = vshll.u32 %v2592, 16
        %v2654 = vrot.slane %v2652, 1
        %v2655 = vsel %vm1356, %v2650, %v2654
        %v2657 = vshrl.u32 %v2561, 16
        %v2659 = vshll.u32 %v2561, 16
        %v2661 = vrot.slane %v2659, 1
        %v2662 = vor.u32 %v2657, %v2661
        %v2664 = vshll.u32 %v2593, 16
        %v2666 = vrot.slane %v2664, 1
        %v2667 = vsel %vm1356, %v2662, %v2666
        %v2669 = vshrl.u32 %v2562, 16
        %v2671 = vshll.u32 %v2562, 16
        %v2673 = vrot.slane %v2671, 1
        %v2674 = vor.u32 %v2669, %v2673
        %v2676 = vshll.u32 %v2594, 16
        %v2678 = vrot.slane %v2676, 1
        %v2679 = vsel %vm1356, %v2674, %v2678
        %v2681 = vshrl.u32 %v2563, 16
        %v2683 = vshll.u32 %v2563, 16
        %v2685 = vrot.slane %v2683, 1
        %v2686 = vor.u32 %v2681, %v2685
        %v2688 = vshll.u32 %v2595, 16
        %v2690 = vrot.slane %v2688, 1
        %v2691 = vsel %vm1356, %v2686, %v2690
        %v2700 = vrot.slane %v2556, 1
        %v2701 = vrot.slane %v2588, 1
        %v2702 = vsel %vm1461, %v2700, %v2701
        %v2703 = vrot.slane %v2557, 1
        %v2704 = vrot.slane %v2589, 1
        %v2705 = vsel %vm1461, %v2703, %v2704
        %v2706 = vrot.slane %v2558, 1
        %v2707 = vrot.slane %v2590, 1
        %v2708 = vsel %vm1461, %v2706, %v2707
        %v2709 = vrot.slane %v2559, 1
        %v2710 = vrot.slane %v2591, 1
        %v2711 = vsel %vm1461, %v2709, %v2710
        %v2712 = vrot.slane %v2560, 1
        %v2713 = vrot.slane %v2592, 1
        %v2714 = vsel %vm1461, %v2712, %v2713
        %v2715 = vrot.slane %v2561, 1
        %v2716 = vrot.slane %v2593, 1
        %v2717 = vsel %vm1461, %v2715, %v2716
        %v2718 = vrot.slane %v2562, 1
        %v2719 = vrot.slane %v2594, 1
        %v2720 = vsel %vm1461, %v2718, %v2719
        %v2721 = vrot.slane %v2563, 1
        %v2722 = vrot.slane %v2595, 1
        %v2723 = vsel %vm1461, %v2721, %v2722
        %s2732 = scalar_lea.vmem [#allocation9], 384
        %v2733 = vld [vmem:[%s2732] sm:$0xf]
        %v2734 = vld [vmem:[%s2732 + $0x4] sm:$0xf]
        %v2735 = vld [vmem:[%s2732 + $0x8] sm:$0xf]
        %v2736 = vld [vmem:[%s2732 + $0xc] sm:$0xf]
        %v2737 = vld [vmem:[%s2732 + $0x10] sm:$0xf]
        %v2738 = vld [vmem:[%s2732 + $0x14] sm:$0xf]
        %v2739 = vld [vmem:[%s2732 + $0x18] sm:$0xf]
        %v2740 = vld [vmem:[%s2732 + $0x1c] sm:$0xf]
        %v2741 = vld [vmem:[%s2732 + $0x20] sm:$0xf]
        %v2742 = vld [vmem:[%s2732 + $0x24] sm:$0xf]
        %v2743 = vld [vmem:[%s2732 + $0x28] sm:$0xf]
        %v2744 = vld [vmem:[%s2732 + $0x2c] sm:$0xf]
        %v2745 = vld [vmem:[%s2732 + $0x30] sm:$0xf]
        %v2746 = vld [vmem:[%s2732 + $0x34] sm:$0xf]
        %v2747 = vld [vmem:[%s2732 + $0x38] sm:$0xf]
        %v2748 = vld [vmem:[%s2732 + $0x3c] sm:$0xf]
        %v2749 = vld [vmem:[%s2732 + $0x40] sm:$0xf]
        %v2750 = vld [vmem:[%s2732 + $0x44] sm:$0xf]
        %v2751 = vld [vmem:[%s2732 + $0x48] sm:$0xf]
        %v2752 = vld [vmem:[%s2732 + $0x4c] sm:$0xf]
        %v2753 = vld [vmem:[%s2732 + $0x50] sm:$0xf]
        %v2754 = vld [vmem:[%s2732 + $0x54] sm:$0xf]
        %v2755 = vld [vmem:[%s2732 + $0x58] sm:$0xf]
        %v2756 = vld [vmem:[%s2732 + $0x5c] sm:$0xf]
        %v2757 = vld [vmem:[%s2732 + $0x60] sm:$0xf]
        %v2758 = vld [vmem:[%s2732 + $0x64] sm:$0xf]
        %v2759 = vld [vmem:[%s2732 + $0x68] sm:$0xf]
        %v2760 = vld [vmem:[%s2732 + $0x6c] sm:$0xf]
        %v2761 = vld [vmem:[%s2732 + $0x70] sm:$0xf]
        %v2762 = vld [vmem:[%s2732 + $0x74] sm:$0xf]
        %v2763 = vld [vmem:[%s2732 + $0x78] sm:$0xf]
        %v2764 = vld [vmem:[%s2732 + $0x7c] sm:$0xf]
        %v2765 = vld [vmem:[%s2732 + $0x80] sm:$0xf]
        %v2766 = vld [vmem:[%s2732 + $0x84] sm:$0xf]
        %v2767 = vld [vmem:[%s2732 + $0x88] sm:$0xf]
        %v2768 = vld [vmem:[%s2732 + $0x8c] sm:$0xf]
        %v2769 = vld [vmem:[%s2732 + $0x90] sm:$0xf]
        %v2770 = vld [vmem:[%s2732 + $0x94] sm:$0xf]
        %v2771 = vld [vmem:[%s2732 + $0x98] sm:$0xf]
        %v2772 = vld [vmem:[%s2732 + $0x9c] sm:$0xf]
        %v2773 = vld [vmem:[%s2732 + $0xa0] sm:$0xf]
        %v2774 = vld [vmem:[%s2732 + $0xa4] sm:$0xf]
        %v2775 = vld [vmem:[%s2732 + $0xa8] sm:$0xf]
        %v2776 = vld [vmem:[%s2732 + $0xac] sm:$0xf]
        %v2777 = vld [vmem:[%s2732 + $0xb0] sm:$0xf]
        %v2778 = vld [vmem:[%s2732 + $0xb4] sm:$0xf]
        %v2779 = vld [vmem:[%s2732 + $0xb8] sm:$0xf]
        %v2780 = vld [vmem:[%s2732 + $0xbc] sm:$0xf]
        %v2829 = vunpack.c.l.b16 %v2733
        %v2830 = vunpack.c.l.b16 %v2734
        %v2831 = vunpack.c.l.b16 %v2735
        %v2832 = vunpack.c.l.b16 %v2736
        %v2833 = vunpack.c.l.b16 %v2737
        %v2834 = vunpack.c.l.b16 %v2738
        %v2835 = vunpack.c.l.b16 %v2739
        %v2836 = vunpack.c.l.b16 %v2740
        %v2837 = vunpack.c.l.b16 %v2741
        %v2838 = vunpack.c.l.b16 %v2742
        %v2839 = vunpack.c.l.b16 %v2743
        %v2840 = vunpack.c.l.b16 %v2744
        %v2841 = vunpack.c.l.b16 %v2745
        %v2842 = vunpack.c.l.b16 %v2746
        %v2843 = vunpack.c.l.b16 %v2747
        %v2844 = vunpack.c.l.b16 %v2748
        %v2845 = vunpack.c.l.b16 %v2749
        %v2846 = vunpack.c.l.b16 %v2750
        %v2847 = vunpack.c.l.b16 %v2751
        %v2848 = vunpack.c.l.b16 %v2752
        %v2849 = vunpack.c.l.b16 %v2753
        %v2850 = vunpack.c.l.b16 %v2754
        %v2851 = vunpack.c.l.b16 %v2755
        %v2852 = vunpack.c.l.b16 %v2756
        %v2853 = vunpack.c.l.b16 %v2757
        %v2854 = vunpack.c.l.b16 %v2758
        %v2855 = vunpack.c.l.b16 %v2759
        %v2856 = vunpack.c.l.b16 %v2760
        %v2857 = vunpack.c.l.b16 %v2761
        %v2858 = vunpack.c.l.b16 %v2762
        %v2859 = vunpack.c.l.b16 %v2763
        %v2860 = vunpack.c.l.b16 %v2764
        %v2861 = vunpack.c.l.b16 %v2765
        %v2862 = vunpack.c.l.b16 %v2766
        %v2863 = vunpack.c.l.b16 %v2767
        %v2864 = vunpack.c.l.b16 %v2768
        %v2865 = vunpack.c.l.b16 %v2769
        %v2866 = vunpack.c.l.b16 %v2770
        %v2867 = vunpack.c.l.b16 %v2771
        %v2868 = vunpack.c.l.b16 %v2772
        %v2869 = vunpack.c.l.b16 %v2773
        %v2870 = vunpack.c.l.b16 %v2774
        %v2871 = vunpack.c.l.b16 %v2775
        %v2872 = vunpack.c.l.b16 %v2776
        %v2873 = vunpack.c.l.b16 %v2777
        %v2874 = vunpack.c.l.b16 %v2778
        %v2875 = vunpack.c.l.b16 %v2779
        %v2876 = vunpack.c.l.b16 %v2780
        %v2877 = vpack.c.b16 %v2830, %v2829
        %v2878 = vpack.c.b16 %v2832, %v2831
        %v2879 = vpack.c.b16 %v2834, %v2833
        %v2880 = vpack.c.b16 %v2836, %v2835
        %v2881 = vpack.c.b16 %v2838, %v2837
        %v2882 = vpack.c.b16 %v2840, %v2839
        %v2883 = vpack.c.b16 %v2842, %v2841
        %v2884 = vpack.c.b16 %v2844, %v2843
        %v2885 = vpack.c.b16 %v2846, %v2845
        %v2886 = vpack.c.b16 %v2848, %v2847
        %v2887 = vpack.c.b16 %v2850, %v2849
        %v2888 = vpack.c.b16 %v2852, %v2851
        %v2889 = vpack.c.b16 %v2854, %v2853
        %v2890 = vpack.c.b16 %v2856, %v2855
        %v2891 = vpack.c.b16 %v2858, %v2857
        %v2892 = vpack.c.b16 %v2860, %v2859
        %v2893 = vpack.c.b16 %v2862, %v2861
        %v2894 = vpack.c.b16 %v2864, %v2863
        %v2895 = vpack.c.b16 %v2866, %v2865
        %v2896 = vpack.c.b16 %v2868, %v2867
        %v2897 = vpack.c.b16 %v2870, %v2869
        %v2898 = vpack.c.b16 %v2872, %v2871
        %v2899 = vpack.c.b16 %v2874, %v2873
        %v2900 = vpack.c.b16 %v2876, %v2875
        %2925 = vmatprep.subr.bf16.mxu0 0
        %2926 = vmatpush1.bf16.msra.mxu0 %v2884
        %2927 = vmatprep.subr.bf16.mxu0 0
        %2928 = vmatpush1.bf16.msra.mxu0 %v2883
        %2929 = vmatprep.subr.bf16.mxu0 0
        %2930 = vmatpush1.bf16.msra.mxu0 %v2882
        %2931 = vmatprep.subr.bf16.mxu0 0
        %2932 = vmatpush1.bf16.msra.mxu0 %v2881
        %2933 = vmatprep.subr.bf16.mxu0 0
        %2934 = vmatpush1.bf16.msra.mxu0 %v2880
        %2935 = vmatprep.subr.bf16.mxu0 0
        %2936 = vmatpush1.bf16.msra.mxu0 %v2879
        %2937 = vmatprep.subr.bf16.mxu0 0
        %2938 = vmatpush1.bf16.msra.mxu0 %v2878
        %2939 = vmatprep.subr.bf16.mxu0 0
        %2940 = vmatpush1.bf16.msra.mxu0 %v2877
        %2941 = vmatprep.subr.bf16.mxu0 0
        %2942 = vmatpush2.bf16.msra.mxu0 %v2892
        %2943 = vmatprep.subr.bf16.mxu0 0
        %2944 = vmatpush2.bf16.msra.mxu0 %v2891
        %2945 = vmatprep.subr.bf16.mxu0 0
        %2946 = vmatpush2.bf16.msra.mxu0 %v2890
        %2947 = vmatprep.subr.bf16.mxu0 0
        %2948 = vmatpush2.bf16.msra.mxu0 %v2889
        %2949 = vmatprep.subr.bf16.mxu0 0
        %2950 = vmatpush2.bf16.msra.mxu0 %v2888
        %2951 = vmatprep.subr.bf16.mxu0 0
        %2952 = vmatpush2.bf16.msra.mxu0 %v2887
        %2953 = vmatprep.subr.bf16.mxu0 0
        %2954 = vmatpush2.bf16.msra.mxu0 %v2886
        %2955 = vmatprep.subr.bf16.mxu0 0
        %2956 = vmatpush2.bf16.msra.mxu0 %v2885
        %2957 = vmatprep.mubr.bf16.mxu0 %v2607
        %2958 = vmatmul.mubr.bf16.gmra.mxu0 %v2556
        %v2959 = vpop.f32.mrf.mxu0
        %v2960 = vadd.f32 0.0, %v2959
        %v2961 = vpop.f32.mrf.mxu0
        %v2962 = vpop.f32.mrf.mxu0
        %v2963 = vadd.f32 0.0, %v2962
        %v2964 = vpop.f32.mrf.mxu0
        %2965 = vmatprep.mubr.bf16.mxu0 %v2619
        %2966 = vmatmul.mubr.bf16.gmra.mxu0 %v2557
        %v2967 = vpop.f32.mrf.mxu0
        %v2968 = vadd.f32 0.0, %v2967
        %v2969 = vpop.f32.mrf.mxu0
        %v2970 = vpop.f32.mrf.mxu0
        %v2971 = vadd.f32 0.0, %v2970
        %v2972 = vpop.f32.mrf.mxu0
        %2973 = vmatprep.mubr.bf16.mxu0 %v2631
        %2974 = vmatmul.mubr.bf16.gmra.mxu0 %v2558
        %v2975 = vpop.f32.mrf.mxu0
        %v2976 = vadd.f32 0.0, %v2975
        %v2977 = vpop.f32.mrf.mxu0
        %v2978 = vpop.f32.mrf.mxu0
        %v2979 = vadd.f32 0.0, %v2978
        %v2980 = vpop.f32.mrf.mxu0
        %2981 = vmatprep.mubr.bf16.mxu0 %v2643
        %2982 = vmatmul.mubr.bf16.gmra.mxu0 %v2559
        %v2983 = vpop.f32.mrf.mxu0
        %v2984 = vadd.f32 0.0, %v2983
        %v2985 = vpop.f32.mrf.mxu0
        %v2986 = vpop.f32.mrf.mxu0
        %v2987 = vadd.f32 0.0, %v2986
        %v2988 = vpop.f32.mrf.mxu0
        %2989 = vmatprep.mubr.bf16.mxu0 %v2655
        %2990 = vmatmul.mubr.bf16.gmra.mxu0 %v2560
        %v2991 = vpop.f32.mrf.mxu0
        %v2992 = vadd.f32 0.0, %v2991
        %v2993 = vpop.f32.mrf.mxu0
        %v2994 = vpop.f32.mrf.mxu0
        %v2995 = vadd.f32 0.0, %v2994
        %v2996 = vpop.f32.mrf.mxu0
        %2997 = vmatprep.mubr.bf16.mxu0 %v2667
        %2998 = vmatmul.mubr.bf16.gmra.mxu0 %v2561
        %v2999 = vpop.f32.mrf.mxu0
        %v3000 = vadd.f32 0.0, %v2999
        %v3001 = vpop.f32.mrf.mxu0
        %v3002 = vpop.f32.mrf.mxu0
        %v3003 = vadd.f32 0.0, %v3002
        %v3004 = vpop.f32.mrf.mxu0
        %3005 = vmatprep.mubr.bf16.mxu0 %v2679
        %3006 = vmatmul.mubr.bf16.gmra.mxu0 %v2562
        %v3007 = vpop.f32.mrf.mxu0
        %v3008 = vadd.f32 0.0, %v3007
        %v3009 = vpop.f32.mrf.mxu0
        %v3010 = vpop.f32.mrf.mxu0
        %v3011 = vadd.f32 0.0, %v3010
        %v3012 = vpop.f32.mrf.mxu0
        %3013 = vmatprep.mubr.bf16.mxu0 %v2691
        %3014 = vmatmul.mubr.bf16.gmra.mxu0 %v2563
        %v3015 = vpop.f32.mrf.mxu0
        %v3016 = vadd.f32 0.0, %v3015
        %v3017 = vpop.f32.mrf.mxu0
        %v3018 = vpop.f32.mrf.mxu0
        %v3019 = vadd.f32 0.0, %v3018
        %v3020 = vpop.f32.mrf.mxu0
        %3021 = vdwg.mxu0
        %3022 = vmatprep.subr.bf16.mxu0 0
        %3023 = vmatpush1.bf16.msra.mxu0 %v2900
        %3024 = vmatprep.subr.bf16.mxu0 0
        %3025 = vmatpush1.bf16.msra.mxu0 %v2899
        %3026 = vmatprep.subr.bf16.mxu0 0
        %3027 = vmatpush1.bf16.msra.mxu0 %v2898
        %3028 = vmatprep.subr.bf16.mxu0 0
        %3029 = vmatpush1.bf16.msra.mxu0 %v2897
        %3030 = vmatprep.subr.bf16.mxu0 0
        %3031 = vmatpush1.bf16.msra.mxu0 %v2896
        %3032 = vmatprep.subr.bf16.mxu0 0
        %3033 = vmatpush1.bf16.msra.mxu0 %v2895
        %3034 = vmatprep.subr.bf16.mxu0 0
        %3035 = vmatpush1.bf16.msra.mxu0 %v2894
        %3036 = vmatprep.subr.bf16.mxu0 0
        %3037 = vmatpush1.bf16.msra.mxu0 %v2893
        %3038 = vmatprep.subr.bf16.mxu0 0
        %3039 = vmatpush2.bf16.msra.mxu0 0
        %3040 = vmatprep.subr.bf16.mxu0 0
        %3041 = vmatpush2.bf16.msra.mxu0 0
        %3042 = vmatprep.subr.bf16.mxu0 0
        %3043 = vmatpush2.bf16.msra.mxu0 0
        %3044 = vmatprep.subr.bf16.mxu0 0
        %3045 = vmatpush2.bf16.msra.mxu0 0
        %3046 = vmatprep.subr.bf16.mxu0 0
        %3047 = vmatpush2.bf16.msra.mxu0 0
        %3048 = vmatprep.subr.bf16.mxu0 0
        %3049 = vmatpush2.bf16.msra.mxu0 0
        %3050 = vmatprep.subr.bf16.mxu0 0
        %3051 = vmatpush2.bf16.msra.mxu0 0
        %3052 = vmatprep.subr.bf16.mxu0 0
        %3053 = vmatpush2.bf16.msra.mxu0 0
        %3054 = vmatprep.mubr.bf16.mxu0 0
        %3055 = vmatmul.mubr.bf16.gmra.mxu0 %v2702
        %v3056 = vpop.f32.mrf.mxu0
        %v3057 = vadd.f32 %v2960, %v3056
        %v3058 = vpop.f32.mrf.mxu0
        %v3059 = vpop.f32.mrf.mxu0
        %v3060 = vadd.f32 %v2963, %v3059
        %v3061 = vpop.f32.mrf.mxu0
        %3062 = vmatprep.mubr.bf16.mxu0 0
        %3063 = vmatmul.mubr.bf16.gmra.mxu0 %v2705
        %v3064 = vpop.f32.mrf.mxu0
        %v3065 = vadd.f32 %v2968, %v3064
        %v3066 = vpop.f32.mrf.mxu0
        %v3067 = vpop.f32.mrf.mxu0
        %v3068 = vadd.f32 %v2971, %v3067
        %v3069 = vpop.f32.mrf.mxu0
        %3070 = vmatprep.mubr.bf16.mxu0 0
        %3071 = vmatmul.mubr.bf16.gmra.mxu0 %v2708
        %v3072 = vpop.f32.mrf.mxu0
        %v3073 = vadd.f32 %v2976, %v3072
        %v3074 = vpop.f32.mrf.mxu0
        %v3075 = vpop.f32.mrf.mxu0
        %v3076 = vadd.f32 %v2979, %v3075
        %v3077 = vpop.f32.mrf.mxu0
        %3078 = vmatprep.mubr.bf16.mxu0 0
        %3079 = vmatmul.mubr.bf16.gmra.mxu0 %v2711
        %v3080 = vpop.f32.mrf.mxu0
        %v3081 = vadd.f32 %v2984, %v3080
        %v3082 = vpop.f32.mrf.mxu0
        %v3083 = vpop.f32.mrf.mxu0
        %v3084 = vadd.f32 %v2987, %v3083
        %v3085 = vpop.f32.mrf.mxu0
        %3086 = vmatprep.mubr.bf16.mxu0 0
        %3087 = vmatmul.mubr.bf16.gmra.mxu0 %v2714
        %v3088 = vpop.f32.mrf.mxu0
        %v3089 = vadd.f32 %v2992, %v3088
        %v3090 = vpop.f32.mrf.mxu0
        %v3091 = vpop.f32.mrf.mxu0
        %v3092 = vadd.f32 %v2995, %v3091
        %v3093 = vpop.f32.mrf.mxu0
        %3094 = vmatprep.mubr.bf16.mxu0 0
        %3095 = vmatmul.mubr.bf16.gmra.mxu0 %v2717
        %v3096 = vpop.f32.mrf.mxu0
        %v3097 = vadd.f32 %v3000, %v3096
        %v3098 = vpop.f32.mrf.mxu0
        %v3099 = vpop.f32.mrf.mxu0
        %v3100 = vadd.f32 %v3003, %v3099
        %v3101 = vpop.f32.mrf.mxu0
        %3102 = vmatprep.mubr.bf16.mxu0 0
        %3103 = vmatmul.mubr.bf16.gmra.mxu0 %v2720
        %v3104 = vpop.f32.mrf.mxu0
        %v3105 = vadd.f32 %v3008, %v3104
        %v3106 = vpop.f32.mrf.mxu0
        %v3107 = vpop.f32.mrf.mxu0
        %v3108 = vadd.f32 %v3011, %v3107
        %v3109 = vpop.f32.mrf.mxu0
        %3110 = vmatprep.mubr.bf16.mxu0 0
        %3111 = vmatmul.mubr.bf16.gmra.mxu0 %v2723
        %v3112 = vpop.f32.mrf.mxu0
        %v3113 = vadd.f32 %v3016, %v3112
        %v3114 = vpop.f32.mrf.mxu0
        %v3115 = vpop.f32.mrf.mxu0
        %v3116 = vadd.f32 %v3019, %v3115
        %v3117 = vpop.f32.mrf.mxu0
        %3118 = vdwg.mxu0
        %v3119 = vadd.f32 %v2437, %v3057
        %v3120 = vadd.f32 %v2440, %v3060
        %v3121 = vadd.f32 %v2445, %v3065
        %v3122 = vadd.f32 %v2448, %v3068
        %v3123 = vadd.f32 %v2453, %v3073
        %v3124 = vadd.f32 %v2456, %v3076
        %v3125 = vadd.f32 %v2461, %v3081
        %v3126 = vadd.f32 %v2464, %v3084
        %v3127 = vadd.f32 %v2469, %v3089
        %v3128 = vadd.f32 %v2472, %v3092
        %v3129 = vadd.f32 %v2477, %v3097
        %v3130 = vadd.f32 %v2480, %v3100
        %v3131 = vadd.f32 %v2485, %v3105
        %v3132 = vadd.f32 %v2488, %v3108
        %v3133 = vadd.f32 %v2493, %v3113
        %v3134 = vadd.f32 %v2496, %v3116
        %v3135 = vld [vmem:[%s6] sm:$0x1]
        %v3137 = vlaneseq
        %v3138 = vshrl.u32 %v3137, 7
        %v3139 = vsub.s32 0, %v3138
        %v3140 = vrot.slane %v3135, %v3139
        %v3142 = vadd.f32 %v3119, %v3140
        %v3143 = vadd.f32 %v3120, %v3140
        %v3144 = vadd.f32 %v3121, %v3140
        %v3145 = vadd.f32 %v3122, %v3140
        %v3146 = vadd.f32 %v3123, %v3140
        %v3147 = vadd.f32 %v3124, %v3140
        %v3148 = vadd.f32 %v3125, %v3140
        %v3149 = vadd.f32 %v3126, %v3140
        %v3150 = vadd.f32 %v3127, %v3140
        %v3151 = vadd.f32 %v3128, %v3140
        %v3152 = vadd.f32 %v3129, %v3140
        %v3153 = vadd.f32 %v3130, %v3140
        %v3154 = vadd.f32 %v3131, %v3140
        %v3155 = vadd.f32 %v3132, %v3140
        %v3156 = vadd.f32 %v3133, %v3140
        %v3157 = vadd.f32 %v3134, %v3140
        %v3158 = vmax.f32 %v3142, 0.0
        %v3159 = vmax.f32 %v3143, 0.0
        %v3160 = vmax.f32 %v3144, 0.0
        %v3161 = vmax.f32 %v3145, 0.0
        %v3162 = vmax.f32 %v3146, 0.0
        %v3163 = vmax.f32 %v3147, 0.0
        %v3164 = vmax.f32 %v3148, 0.0
        %v3165 = vmax.f32 %v3149, 0.0
        %v3166 = vmax.f32 %v3150, 0.0
        %v3167 = vmax.f32 %v3151, 0.0
        %v3168 = vmax.f32 %v3152, 0.0
        %v3169 = vmax.f32 %v3153, 0.0
        %v3170 = vmax.f32 %v3154, 0.0
        %v3171 = vmax.f32 %v3155, 0.0
        %v3172 = vmax.f32 %v3156, 0.0
        %v3173 = vmax.f32 %v3157, 0.0
        %v3174 = vpack.c.bf16 %v3159, %v3158
        %v3175 = vpack.c.bf16 %v3161, %v3160
        %v3176 = vpack.c.bf16 %v3163, %v3162
        %v3177 = vpack.c.bf16 %v3165, %v3164
        %v3178 = vpack.c.bf16 %v3167, %v3166
        %v3179 = vpack.c.bf16 %v3169, %v3168
        %v3180 = vpack.c.bf16 %v3171, %v3170
        %v3181 = vpack.c.bf16 %v3173, %v3172
        %v3182 = vld [vmem:[%s7] sm:$0xf]
        %v3183 = vld [vmem:[%s7 + $0x4] sm:$0xf]
        %v3184 = vld [vmem:[%s7 + $0x8] sm:$0xf]
        %v3185 = vld [vmem:[%s7 + $0xc] sm:$0xf]
        %v3186 = vld [vmem:[%s7 + $0x10] sm:$0xf]
        %v3187 = vld [vmem:[%s7 + $0x14] sm:$0xf]
        %v3188 = vld [vmem:[%s7 + $0x18] sm:$0xf]
        %v3189 = vld [vmem:[%s7 + $0x1c] sm:$0xf]
        %v3190 = vld [vmem:[%s7 + $0x20] sm:$0xf]
        %v3191 = vld [vmem:[%s7 + $0x24] sm:$0xf]
        %v3192 = vld [vmem:[%s7 + $0x28] sm:$0xf]
        %v3193 = vld [vmem:[%s7 + $0x2c] sm:$0xf]
        %v3194 = vld [vmem:[%s7 + $0x30] sm:$0xf]
        %v3195 = vld [vmem:[%s7 + $0x34] sm:$0xf]
        %v3196 = vld [vmem:[%s7 + $0x38] sm:$0xf]
        %v3197 = vld [vmem:[%s7 + $0x3c] sm:$0xf]
        %v3198 = vld [vmem:[%s8] sm:$0x1]
        %v3200 = vlaneseq
        %v3201 = vshrl.u32 %v3200, 7
        %v3202 = vsub.s32 0, %v3201
        %v3203 = vrot.slane %v3198, %v3202
        %v3221 = vunpack.c.l.b16 %v3182
        %v3222 = vunpack.c.l.b16 %v3183
        %v3223 = vunpack.c.l.b16 %v3184
        %v3224 = vunpack.c.l.b16 %v3185
        %v3225 = vunpack.c.l.b16 %v3186
        %v3226 = vunpack.c.l.b16 %v3187
        %v3227 = vunpack.c.l.b16 %v3188
        %v3228 = vunpack.c.l.b16 %v3189
        %v3229 = vunpack.c.l.b16 %v3190
        %v3230 = vunpack.c.l.b16 %v3191
        %v3231 = vunpack.c.l.b16 %v3192
        %v3232 = vunpack.c.l.b16 %v3193
        %v3233 = vunpack.c.l.b16 %v3194
        %v3234 = vunpack.c.l.b16 %v3195
        %v3235 = vunpack.c.l.b16 %v3196
        %v3236 = vunpack.c.l.b16 %v3197
        %v3237 = vpack.c.b16 %v3222, %v3221
        %v3238 = vpack.c.b16 %v3224, %v3223
        %v3239 = vpack.c.b16 %v3226, %v3225
        %v3240 = vpack.c.b16 %v3228, %v3227
        %v3241 = vpack.c.b16 %v3230, %v3229
        %v3242 = vpack.c.b16 %v3232, %v3231
        %v3243 = vpack.c.b16 %v3234, %v3233
        %v3244 = vpack.c.b16 %v3236, %v3235
        %3253 = vmatprep.subr.bf16.mxu0 0
        %3254 = vmatpush1.bf16.msra.mxu0 %v3244
        %3255 = vmatprep.subr.bf16.mxu0 0
        %3256 = vmatpush1.bf16.msra.mxu0 %v3243
        %3257 = vmatprep.subr.bf16.mxu0 0
        %3258 = vmatpush1.bf16.msra.mxu0 %v3242
        %3259 = vmatprep.subr.bf16.mxu0 0
        %3260 = vmatpush1.bf16.msra.mxu0 %v3241
        %3261 = vmatprep.subr.bf16.mxu0 0
        %3262 = vmatpush1.bf16.msra.mxu0 %v3240
        %3263 = vmatprep.subr.bf16.mxu0 0
        %3264 = vmatpush1.bf16.msra.mxu0 %v3239
        %3265 = vmatprep.subr.bf16.mxu0 0
        %3266 = vmatpush1.bf16.msra.mxu0 %v3238
        %3267 = vmatprep.subr.bf16.mxu0 0
        %3268 = vmatpush1.bf16.msra.mxu0 %v3237
        %3269 = vmatprep.subr.bf16.mxu0 0
        %3270 = vmatpush2.bf16.msra.mxu0 0
        %3271 = vmatprep.subr.bf16.mxu0 0
        %3272 = vmatpush2.bf16.msra.mxu0 0
        %3273 = vmatprep.subr.bf16.mxu0 0
        %3274 = vmatpush2.bf16.msra.mxu0 0
        %3275 = vmatprep.subr.bf16.mxu0 0
        %3276 = vmatpush2.bf16.msra.mxu0 0
        %3277 = vmatprep.subr.bf16.mxu0 0
        %3278 = vmatpush2.bf16.msra.mxu0 0
        %3279 = vmatprep.subr.bf16.mxu0 0
        %3280 = vmatpush2.bf16.msra.mxu0 0
        %3281 = vmatprep.subr.bf16.mxu0 0
        %3282 = vmatpush2.bf16.msra.mxu0 0
        %3283 = vmatprep.subr.bf16.mxu0 0
        %3284 = vmatpush2.bf16.msra.mxu0 0
        %3285 = vmatprep.mubr.bf16.mxu0 0
        %3286 = vmatmul.mubr.bf16.gmra.mxu0 %v3174
        %v3287 = vpop.f32.mrf.mxu0
        %v3288 = vadd.f32 %v3203, %v3287
        %v3289 = vpop.f32.mrf.mxu0
        %v3290 = vpop.f32.mrf.mxu0
        %v3291 = vadd.f32 %v3203, %v3290
        %v3292 = vpop.f32.mrf.mxu0
        %3293 = vmatprep.mubr.bf16.mxu0 0
        %3294 = vmatmul.mubr.bf16.gmra.mxu0 %v3175
        %v3295 = vpop.f32.mrf.mxu0
        %v3296 = vadd.f32 %v3203, %v3295
        %v3297 = vpop.f32.mrf.mxu0
        %v3298 = vpop.f32.mrf.mxu0
        %v3299 = vadd.f32 %v3203, %v3298
        %v3300 = vpop.f32.mrf.mxu0
        %3301 = vmatprep.mubr.bf16.mxu0 0
        %3302 = vmatmul.mubr.bf16.gmra.mxu0 %v3176
        %v3303 = vpop.f32.mrf.mxu0
        %v3304 = vadd.f32 %v3203, %v3303
        %v3305 = vpop.f32.mrf.mxu0
        %v3306 = vpop.f32.mrf.mxu0
        %v3307 = vadd.f32 %v3203, %v3306
        %v3308 = vpop.f32.mrf.mxu0
        %3309 = vmatprep.mubr.bf16.mxu0 0
        %3310 = vmatmul.mubr.bf16.gmra.mxu0 %v3177
        %v3311 = vpop.f32.mrf.mxu0
        %v3312 = vadd.f32 %v3203, %v3311
        %v3313 = vpop.f32.mrf.mxu0
        %v3314 = vpop.f32.mrf.mxu0
        %v3315 = vadd.f32 %v3203, %v3314
        %v3316 = vpop.f32.mrf.mxu0
        %3317 = vmatprep.mubr.bf16.mxu0 0
        %3318 = vmatmul.mubr.bf16.gmra.mxu0 %v3178
        %v3319 = vpop.f32.mrf.mxu0
        %v3320 = vadd.f32 %v3203, %v3319
        %v3321 = vpop.f32.mrf.mxu0
        %v3322 = vpop.f32.mrf.mxu0
        %v3323 = vadd.f32 %v3203, %v3322
        %v3324 = vpop.f32.mrf.mxu0
        %3325 = vmatprep.mubr.bf16.mxu0 0
        %3326 = vmatmul.mubr.bf16.gmra.mxu0 %v3179
        %v3327 = vpop.f32.mrf.mxu0
        %v3328 = vadd.f32 %v3203, %v3327
        %v3329 = vpop.f32.mrf.mxu0
        %v3330 = vpop.f32.mrf.mxu0
        %v3331 = vadd.f32 %v3203, %v3330
        %v3332 = vpop.f32.mrf.mxu0
        %3333 = vmatprep.mubr.bf16.mxu0 0
        %3334 = vmatmul.mubr.bf16.gmra.mxu0 %v3180
        %v3335 = vpop.f32.mrf.mxu0
        %v3336 = vadd.f32 %v3203, %v3335
        %v3337 = vpop.f32.mrf.mxu0
        %v3338 = vpop.f32.mrf.mxu0
        %v3339 = vadd.f32 %v3203, %v3338
        %v3340 = vpop.f32.mrf.mxu0
        %3341 = vmatprep.mubr.bf16.mxu0 0
        %3342 = vmatmul.mubr.bf16.gmra.mxu0 %v3181
        %v3343 = vpop.f32.mrf.mxu0
        %v3344 = vadd.f32 %v3203, %v3343
        %v3345 = vpop.f32.mrf.mxu0
        %v3346 = vpop.f32.mrf.mxu0
        %v3347 = vadd.f32 %v3203, %v3346
        %v3348 = vpop.f32.mrf.mxu0
        %3349 = vdwg.mxu0
        %v3350 = vunpack.c.l.bf16 %v575
        %v3351 = vunpack.c.l.bf16 %v576
        %v3352 = vunpack.c.l.bf16 %v577
        %v3353 = vunpack.c.l.bf16 %v578
        %v3354 = vunpack.c.l.bf16 %v579
        %v3355 = vunpack.c.l.bf16 %v580
        %v3356 = vunpack.c.l.bf16 %v581
        %v3357 = vunpack.c.l.bf16 %v582
        %v3358 = vunpack.c.l.bf16 %v583
        %v3359 = vunpack.c.l.bf16 %v584
        %v3360 = vunpack.c.l.bf16 %v585
        %v3361 = vunpack.c.l.bf16 %v586
        %v3362 = vunpack.c.l.bf16 %v587
        %v3363 = vunpack.c.l.bf16 %v588
        %v3364 = vunpack.c.l.bf16 %v589
        %v3365 = vunpack.c.l.bf16 %v590
        %v3366 = vadd.f32 %v3288, %v3350
        %v3367 = vadd.f32 %v3291, %v3351
        %v3368 = vadd.f32 %v3296, %v3352
        %v3369 = vadd.f32 %v3299, %v3353
        %v3370 = vadd.f32 %v3304, %v3354
        %v3371 = vadd.f32 %v3307, %v3355
        %v3372 = vadd.f32 %v3312, %v3356
        %v3373 = vadd.f32 %v3315, %v3357
        %v3374 = vadd.f32 %v3320, %v3358
        %v3375 = vadd.f32 %v3323, %v3359
        %v3376 = vadd.f32 %v3328, %v3360
        %v3377 = vadd.f32 %v3331, %v3361
        %v3378 = vadd.f32 %v3336, %v3362
        %v3379 = vadd.f32 %v3339, %v3363
        %v3380 = vadd.f32 %v3344, %v3364
        %v3381 = vadd.f32 %v3347, %v3365
        %v3382 = vmax.f32 %v3366, 0.0
        %v3383 = vmax.f32 %v3367, 0.0
        %v3384 = vmax.f32 %v3368, 0.0
        %v3385 = vmax.f32 %v3369, 0.0
        %v3386 = vmax.f32 %v3370, 0.0
        %v3387 = vmax.f32 %v3371, 0.0
        %v3388 = vmax.f32 %v3372, 0.0
        %v3389 = vmax.f32 %v3373, 0.0
        %v3390 = vmax.f32 %v3374, 0.0
        %v3391 = vmax.f32 %v3375, 0.0
        %v3392 = vmax.f32 %v3376, 0.0
        %v3393 = vmax.f32 %v3377, 0.0
        %v3394 = vmax.f32 %v3378, 0.0
        %v3395 = vmax.f32 %v3379, 0.0
        %v3396 = vmax.f32 %v3380, 0.0
        %v3397 = vmax.f32 %v3381, 0.0
        %v3398 = vpack.c.bf16 %v3383, %v3382
        %v3399 = vpack.c.bf16 %v3385, %v3384
        %v3400 = vpack.c.bf16 %v3387, %v3386
        %v3401 = vpack.c.bf16 %v3389, %v3388
        %v3402 = vpack.c.bf16 %v3391, %v3390
        %v3403 = vpack.c.bf16 %v3393, %v3392
        %v3404 = vpack.c.bf16 %v3395, %v3394
        %v3405 = vpack.c.bf16 %v3397, %v3396
        %v3414 = vunpack.c.l.b16 %v3398
        %v3415 = vunpack.c.h.b16 %v3398
        %v3416 = vunpack.c.l.b16 %v3399
        %v3417 = vunpack.c.h.b16 %v3399
        %v3418 = vunpack.c.l.b16 %v3400
        %v3419 = vunpack.c.h.b16 %v3400
        %v3420 = vunpack.c.l.b16 %v3401
        %v3421 = vunpack.c.h.b16 %v3401
        %v3422 = vunpack.c.l.b16 %v3402
        %v3423 = vunpack.c.h.b16 %v3402
        %v3424 = vunpack.c.l.b16 %v3403
        %v3425 = vunpack.c.h.b16 %v3403
        %v3426 = vunpack.c.l.b16 %v3404
        %v3427 = vunpack.c.h.b16 %v3404
        %v3428 = vunpack.c.l.b16 %v3405
        %v3429 = vunpack.c.h.b16 %v3405
        %v3430 = vpack.c.b16 %v3414, %v3414
        %v3431 = vpack.c.b16 %v3415, %v3415
        %v3432 = vpack.c.b16 %v3416, %v3416
        %v3433 = vpack.c.b16 %v3417, %v3417
        %v3434 = vpack.c.b16 %v3418, %v3418
        %v3435 = vpack.c.b16 %v3419, %v3419
        %v3436 = vpack.c.b16 %v3420, %v3420
        %v3437 = vpack.c.b16 %v3421, %v3421
        %v3438 = vpack.c.b16 %v3422, %v3422
        %v3439 = vpack.c.b16 %v3423, %v3423
        %v3440 = vpack.c.b16 %v3424, %v3424
        %v3441 = vpack.c.b16 %v3425, %v3425
        %v3442 = vpack.c.b16 %v3426, %v3426
        %v3443 = vpack.c.b16 %v3427, %v3427
        %v3444 = vpack.c.b16 %v3428, %v3428
        %v3445 = vpack.c.b16 %v3429, %v3429
        %vm3462 = vcmask 257024
        %3463 = vst.msk [vmem:[%s493] sm:$0xf] %vm3462, %v3430
        %3464 = vst.msk [vmem:[%s493 + $0x4] sm:$0xf] %vm3462, %v3431
        %3465 = vst.msk [vmem:[%s493 + $0x8] sm:$0xf] %vm3462, %v3432
        %3466 = vst.msk [vmem:[%s493 + $0xc] sm:$0xf] %vm3462, %v3433
        %3467 = vst.msk [vmem:[%s493 + $0x10] sm:$0xf] %vm3462, %v3434
        %3468 = vst.msk [vmem:[%s493 + $0x14] sm:$0xf] %vm3462, %v3435
        %3469 = vst.msk [vmem:[%s493 + $0x18] sm:$0xf] %vm3462, %v3436
        %3470 = vst.msk [vmem:[%s493 + $0x1c] sm:$0xf] %vm3462, %v3437
        %3471 = vst.msk [vmem:[%s493 + $0x20] sm:$0xf] %vm3462, %v3438
        %3472 = vst.msk [vmem:[%s493 + $0x24] sm:$0xf] %vm3462, %v3439
        %3473 = vst.msk [vmem:[%s493 + $0x28] sm:$0xf] %vm3462, %v3440
        %3474 = vst.msk [vmem:[%s493 + $0x2c] sm:$0xf] %vm3462, %v3441
        %3475 = vst.msk [vmem:[%s493 + $0x30] sm:$0xf] %vm3462, %v3442
        %3476 = vst.msk [vmem:[%s493 + $0x34] sm:$0xf] %vm3462, %v3443
        %3477 = vst.msk [vmem:[%s493 + $0x38] sm:$0xf] %vm3462, %v3444
        %3478 = vst.msk [vmem:[%s493 + $0x3c] sm:$0xf] %vm3462, %v3445
        %s3479 = sand.u32 %s278, 1
        %s3480 = scalar_lea.sflag [#allocation5], %s3479
        %s3481 = sand.u32 %s278, 1
        %s3482 = smul.addr %s3481, 64
        %s3483 = scalar_lea.vmem [#allocation11], %s3482
        // Predicated region
        $region89: #{tpu_custom_call.1} parent=55 // pred_check
          %p3484 = pneg %p288
        $region90: #{tpu_custom_call.1} parent=55 // pred_check_branch
          %3486 = sbr.rel (%p3484) target = $region92
        $region91: #{tpu_custom_call.1} parent=55 // pred_region
          %s3487 = smul.u32 8, %s35
          %s3489 = ssub.s32 1024, 1024
          %3490 = vsyncadd %s3480, %s3489
          %s3491 = smul.addr %s3487, 2
          %s3492 = smul.addr %s34, 32
          %s3493 = sadd.s32 %s3491, %s3492
          %s3494 = smul.addr %s3493, 64
          %s3495 = scalar_lea.hbm %s9, %s3494
          %s3496 = sshll.u32 %s3483, 4
          %s3497 = int_to_ptr.vmem [resolvable:$true] %s3496
          %3502 = dma.vmem_to_hbm [thread:$0]  %s3497, 1024, %s3495, %s3480, 64, 64, 4
        $region92: #{tpu_custom_call.1} parent=55 // pred_fallthru
          _
      $region56: #{tpu_custom_call.1} parent=5 // pred_fallthru
        _
      %p3503 = scmp.le.s32.totalorder 2, %s25
      // Predicated region
      $region93: #{tpu_custom_call.1} parent=5 // pred_check
        %p3504 = pneg %p3503
      $region94: #{tpu_custom_call.1} parent=5 // pred_check_branch
        %3506 = sbr.rel (%p3504) target = $region96
      $region95: #{tpu_custom_call.1} parent=5 // pred_region
        %s3507 = ssub.s32 %s25, 2
        // Predicated region
        $region97: #{tpu_custom_call.1} parent=95 // pred_check
          %p3508 = pneg %p294
        $region98: #{tpu_custom_call.1} parent=95 // pred_check_branch
          %3510 = sbr.rel (%p3508) target = $region100
        $region99: #{tpu_custom_call.1} parent=95 // pred_region
          %s3511 = sand.u32 %s279, 1
          %s3512 = scalar_lea.sflag [#allocation5], %s3511
          %s3513 = sand.u32 %s279, 1
          %s3514 = smul.addr %s3513, 64
          %s3515 = scalar_lea.vmem [#allocation11], %s3514
          %3516 = dma.done %s3512, 1024
        $region100: #{tpu_custom_call.1} parent=95 // pred_fallthru
          _
      $region96: #{tpu_custom_call.1} parent=5 // pred_fallthru
        _
    $region6: #{tpu_custom_call.1} parent=1 // loop_footer
      %s29 = sadd.s32 1, %s25
    $region7: #{tpu_custom_call.1} parent=1 // loop_footer_branch
      %24 = sbr.rel target = $region3
    $region8: #{tpu_custom_call.1} parent=1 // loop_exit
      _
    %3517 = vsyncpa [#allocation4], 1
    %s3518 = scalar_lea.sflag [#allocation4], 1
    %3519 = vsyncpa %s3518, 1
    %3520 = vsyncpa [#allocation7], 1
    %s3521 = scalar_lea.sflag [#allocation7], 1
    %3522 = vsyncpa %s3521, 1
    %3523 = vsyncpa [#allocation10], 1
    %3524 = vsyncpa [#allocation5], 1
    %s3525 = scalar_lea.sflag [#allocation5], 1
    %3526 = vsyncpa %s3525, 1

</llo_original>
